<compile_context>
chip_gen: v6e
topology: v6e:2x2x1
jax: 0.10.0
libtpu: 0.0.40
codegen_flags: <defaults>
</compile_context>

<pallas_src>
import jax
import jax.numpy as jnp
from jax.experimental import pallas as pl
from jax.experimental.pallas import tpu as pltpu

BN_EPS = 1e-5


# ----------------------------------------------------------------------------
# In-kernel helpers (operate on values; all shapes are static)
# ----------------------------------------------------------------------------
def _conv3x3_rows(x, w3, bias, *, relu, row_stride):
    """3x3 conv (pad=1) in width-folded layout as 3 accumulated matmuls.

    x   : (H, W*Cin) value (one batch element).
    w3  : (3, W*Cin, Wout*Cout) per-kernel-row block-Toeplitz slabs; each slab
          folds the horizontal taps, channel contraction, column zero-padding,
          the column stride and the BatchNorm scale.
    bias: (1, Wout*Cout) folded BN bias.
    row_stride=1: output row r = x[r-1]@w3[0] + x[r]@w3[1] + x[r+1]@w3[2].
    row_stride=2: only the needed output rows are formed (even/odd row split),
          so the matmuls do exactly the conv FLOPs.
    """
    h, d = x.shape
    zrow = jnp.zeros((1, d), jnp.float32)
    if row_stride == 1:
        x_t = jnp.concatenate([zrow, x[:h - 1]], axis=0)      # row r sees x[r-1]
        x_c = x                                               # row r sees x[r]
        x_b = jnp.concatenate([x[1:], zrow], axis=0)          # row r sees x[r+1]
    else:  # row_stride == 2 (even H): out row r uses x[2r-1], x[2r], x[2r+1]
        ho = h // 2
        xr = x.reshape(ho, 2, d)
        x_c = xr[:, 0, :]                                      # x[2r]
        x_b = xr[:, 1, :]                                      # x[2r+1]
        x_t = jnp.concatenate([zrow, x_b[:ho - 1]], axis=0)    # x[2r-1]
    y = (jnp.dot(x_t, w3[0], preferred_element_type=jnp.float32)
         + jnp.dot(x_c, w3[1], preferred_element_type=jnp.float32)
         + jnp.dot(x_b, w3[2], preferred_element_type=jnp.float32))
    y = y + bias
    if relu:
        y = jnp.maximum(y, 0.0)
    return y


# ----------------------------------------------------------------------------
# The single fused module kernel (built per-configuration by a closure)
# ----------------------------------------------------------------------------
def _make_module_kernel(cfg):
    nb = cfg["nb"]
    n_out = cfg["n_out"]
    num_blocks = cfg["num_blocks"]
    shapes = [(cfg["spatial"][i], cfg["spatial"][i] * cfg["channels"][i])
              for i in range(nb)]

    def kernel(*refs):
        out_refs = refs[len(refs) - n_out:]
        xs = [refs[i][...] for i in range(nb)]
        wpos = nb

        # ---- branches: chain of fused BasicBlocks, entirely in registers/VMEM
        feats = []
        for i in range(nb):
            t = xs[i]
            for _ in range(num_blocks[i]):
                t1 = refs[wpos][...]
                b1 = refs[wpos + 1][...]
                t2 = refs[wpos + 2][...]
                b2 = refs[wpos + 3][...]
                wpos += 4
                y = _conv3x3_rows(t, t1, b1, relu=True, row_stride=1)
                y = _conv3x3_rows(y, t2, b2, relu=False, row_stride=1)
                t = jnp.maximum(y + t, 0.0)
            feats.append(t)

        if nb == 1:
            out_refs[0][...] = feats[0]
            return

        # ---- fuse stage: all output scales in the same kernel
        for i in range(n_out):
            hi, di = shapes[i]
            acc = None
            for j in range(nb):
                if j == i:
                    acc = feats[j] if acc is None else acc + feats[j]
                elif j > i:
                    m = refs[wpos][...]
                    b = refs[wpos + 1][...]
                    wpos += 2
                    hj, _ = shapes[j]
                    f = 2 ** (j - i)
                    # 1x1 conv + BN (scale folded) + nearest column-upsample
                    # are folded into `m`; row-upsample is folded into the add.
                    y = jnp.dot(feats[j], m,
                                preferred_element_type=jnp.float32) + b
                    if acc is None:
                        acc = jnp.broadcast_to(
                            y[:, None, :], (hj, f, di)).reshape(hi, di)
                    else:
                        acc = (acc.reshape(hj, f, di)
                               + y[:, None, :]).reshape(hi, di)
                else:
                    t = feats[j]
                    steps = i - j
                    for k in range(steps):
                        w3 = refs[wpos][...]
                        b = refs[wpos + 1][...]
                        wpos += 2
                        t = _conv3x3_rows(t, w3, b,
                                          relu=(k != steps - 1), row_stride=2)
                    acc = t if acc is None else acc + t
            out_refs[i][...] = jnp.maximum(acc, 0.0)

    return kernel


def _const_index_map(ndim):
    zeros = (0,) * ndim
    return lambda b: zeros


# ----------------------------------------------------------------------------
# pallas_call wrapper: one call for the whole module
# ----------------------------------------------------------------------------
def hr_module_forward(xs_folded, weights, cfg):
    nb = cfg["nb"]
    n_out = cfg["n_out"]
    n = xs_folded[0].shape[0]
    shapes = [(x.shape[1], x.shape[2]) for x in xs_folded]

    args = []
    in_specs = []
    for i in range(nb):
        h, d = shapes[i]
        args.append(xs_folded[i])
        in_specs.append(pl.BlockSpec((None, h, d), lambda b: (b, 0, 0)))
    for w in weights:
        args.append(w)
        in_specs.append(pl.BlockSpec(w.shape, _const_index_map(w.ndim)))

    out_shape = tuple(jax.ShapeDtypeStruct((n,) + shapes[i], jnp.float32)
                      for i in range(n_out))
    out_specs = tuple(pl.BlockSpec((None,) + shapes[i], lambda b: (b, 0, 0))
                      for i in range(n_out))

    outs = pl.pallas_call(
        _make_module_kernel(cfg),
        out_shape=out_shape,
        grid_spec=pltpu.PrefetchScalarGridSpec(
            num_scalar_prefetch=0,
            grid=(n,),
            in_specs=in_specs,
            out_specs=out_specs),
        compiler_params=pltpu.CompilerParams(
            dimension_semantics=("parallel",),      # shard batch across v7x TCs
            vmem_limit_bytes=32 * 1024 * 1024),
    )(*args)
    return list(outs)


# ----------------------------------------------------------------------------
# Weight preprocessing (done once, outside the kernel)
# ----------------------------------------------------------------------------
def toeplitz_slabs(w, w_in, stride, scale):
    """w: (3,3,Cin,Cout) HWIO -> (3, w_in*Cin, w_out*Cout) per-kernel-row slabs.

    Slab kh, row (iw*Cin+ci), col (ow*Cout+co) = w[kh, iw - stride*ow + 1, ci, co]
    when the horizontal tap is in [0,3), else 0 (which also encodes the column
    zero-padding).  The BN scale is folded into the columns.
    """
    _, _, cin, cout = w.shape
    w_out = (w_in - 1) // stride + 1
    iw = jnp.arange(w_in)[:, None]
    ow = jnp.arange(w_out)[None, :]
    kw = iw - stride * ow + 1                                 # (w_in, w_out)
    valid = ((kw >= 0) & (kw < 3)).astype(w.dtype)
    blocks = w[:, jnp.clip(kw, 0, 2), :, :]                   # (3,w_in,w_out,cin,cout)
    blocks = blocks * valid[None, :, :, None, None]
    slabs = blocks.transpose(0, 1, 3, 2, 4).reshape(3, w_in * cin, w_out * cout)
    return (slabs * jnp.tile(scale, w_out)).astype(jnp.float32)


def upsample_1x1_matrix(w1, w_j, factor, scale):
    """w1: (Cj, Ci) -> (w_j*Cj, w_j*factor*Ci): 1x1 conv + BN scale + nearest
    column-upsample folded into one matrix (row-upsample is done at add time)."""
    cj, ci = w1.shape
    w_i = w_j * factor
    sel = (jnp.arange(w_i)[None, :] // factor
           == jnp.arange(w_j)[:, None]).astype(w1.dtype)
    m = sel[:, None, :, None] * w1[None, :, None, :]          # (w_j, cj, w_i, ci)
    m = m.reshape(w_j * cj, w_i * ci)
    return (m * jnp.tile(scale, w_i)).astype(jnp.float32)


def fold_bias(bias, w_out):
    return jnp.tile(bias, w_out)[None, :].astype(jnp.float32)


def prepare_module(params, channels, spatial, multi_scale_output=True):
    """Convert raw conv/BN parameters into kernel-ready operands, flat & ordered
    exactly as the kernel consumes them."""
    nb = len(channels)
    weights = []
    for i in range(nb):
        w_sp = spatial[i]
        for blk in params["branches"][i]:
            weights.append(toeplitz_slabs(blk["w1"], w_sp, 1, blk["s1"]))
            weights.append(fold_bias(blk["b1"], w_sp))
            weights.append(toeplitz_slabs(blk["w2"], w_sp, 1, blk["s2"]))
            weights.append(fold_bias(blk["b2"], w_sp))
    n_out = nb if (multi_scale_output and nb > 1) else 1
    if nb > 1:
        for i in range(n_out):
            for j in range(nb):
                if j == i:
                    continue
                if j > i:
                    p = params["fuse"][(i, j)]
                    f = 2 ** (j - i)
                    weights.append(
                        upsample_1x1_matrix(p["w"], spatial[j], f, p["s"]))
                    weights.append(fold_bias(p["b"], spatial[j] * f))
                else:
                    w_cur = spatial[j]
                    for step in params["fuse"][(i, j)]:
                        assert spatial[j] % 2 == 0, "stride-2 path needs even H/W"
                        weights.append(toeplitz_slabs(step["w"], w_cur, 2, step["s"]))
                        w_cur = (w_cur - 1) // 2 + 1
                        weights.append(fold_bias(step["b"], w_cur))
    cfg = dict(nb=nb, n_out=n_out,
               num_blocks=[len(params["branches"][i]) for i in range(nb)],
               spatial=list(spatial), channels=list(channels))
    return weights, cfg


# ----------------------------------------------------------------------------
# Parameter construction (deterministic, synthetic)
# ----------------------------------------------------------------------------
def fold_bn(gamma, beta, mean, var):
    scale = gamma / jnp.sqrt(var + BN_EPS)
    bias = beta - mean * scale
    return scale, bias


def make_bn(c):
    idx = jnp.arange(c, dtype=jnp.float32)
    gamma = 1.0 + 0.05 * jnp.cos(idx)
    beta = 0.02 * jnp.sin(idx)
    mean = 0.01 * idx / max(c, 1)
    var = 1.0 + 0.1 * idx / max(c, 1)
    return fold_bn(gamma, beta, mean, var)


def make_conv(key, kh, kw, cin, cout):
    return 0.1 * jax.random.normal(key, (kh, kw, cin, cout), jnp.float32)


def build_params(key, num_branches, num_blocks, channels, multi_scale_output=True):
    keys = iter(jax.random.split(key, 128))
    params = {"branches": [], "fuse": {}}
    for i in range(num_branches):
        c = channels[i]
        blocks = []
        for _ in range(num_blocks[i]):
            w1 = make_conv(next(keys), 3, 3, c, c)
            s1, b1 = make_bn(c)
            w2 = make_conv(next(keys), 3, 3, c, c)
            s2, b2 = make_bn(c)
            blocks.append(dict(w1=w1, s1=s1, b1=b1, w2=w2, s2=s2, b2=b2))
        params["branches"].append(blocks)
    n_out = num_branches if multi_scale_output else 1
    for i in range(n_out):
        for j in range(num_branches):
            if j == i:
                continue
            if j > i:
                w = make_conv(next(keys), 1, 1, channels[j], channels[i])[0, 0]
                s, b = make_bn(channels[i])
                params["fuse"][(i, j)] = dict(w=w, s=s, b=b)
            else:
                steps = []
                for k in range(i - j):
                    cout = channels[i] if k == i - j - 1 else channels[j]
                    w = make_conv(next(keys), 3, 3, channels[j], cout)
                    s, b = make_bn(cout)
                    steps.append(dict(w=w, s=s, b=b, relu=(k != i - j - 1)))
                params["fuse"][(i, j)] = steps
    return params


# ----------------------------------------------------------------------------
# Pure-JAX reference (NHWC) for numerical validation
# ----------------------------------------------------------------------------
def _conv3x3_ref(x, w, scale, bias, stride=1, relu=False):
    y = jax.lax.conv_general_dilated(
        x, w, window_strides=(stride, stride), padding=((1, 1), (1, 1)),
        dimension_numbers=("NHWC", "HWIO", "NHWC"))
    y = y * scale + bias
    return jnp.maximum(y, 0.0) if relu else y


def hr_module_reference(xs_nhwc, params, multi_scale_output=True):
    nb = len(xs_nhwc)
    feats = []
    for i in range(nb):
        x = xs_nhwc[i]
        for blk in params["branches"][i]:
            identity = x
            y = _conv3x3_ref(x, blk["w1"], blk["s1"], blk["b1"], relu=True)
            y = _conv3x3_ref(y, blk["w2"], blk["s2"], blk["b2"], relu=False)
            x = jnp.maximum(y + identity, 0.0)
        feats.append(x)
    if nb == 1:
        return [feats[0]]
    n_out = nb if multi_scale_output else 1
    outs = []
    for i in range(n_out):
        acc = None
        for j in range(nb):
            if j == i:
                t = feats[j]
            elif j > i:
                p = params["fuse"][(i, j)]
                t = jnp.einsum("nhwc,cd->nhwd", feats[j], p["w"]) * p["s"] + p["b"]
                f = 2 ** (j - i)
                t = jnp.repeat(jnp.repeat(t, f, axis=1), f, axis=2)
            else:
                t = feats[j]
                for step in params["fuse"][(i, j)]:
                    t = _conv3x3_ref(t, step["w"], step["s"], step["b"],
                                     stride=2, relu=step["relu"])
            acc = t if acc is None else acc + t
        outs.append(jnp.maximum(acc, 0.0))
    return outs


# ----------------------------------------------------------------------------
if __name__ == "__main__":
    key = jax.random.PRNGKey(0)
    num_branches = 3
    num_blocks = [1, 1, 1]
    channels = [8, 16, 32]          # num_inchannels == num_channels * expansion(=1)
    N, H0 = 2, 16
    spatial = [H0 // (2 ** i) for i in range(num_branches)]   # 16, 8, 4

    kparam, kdata = jax.random.split(key)
    params = build_params(kparam, num_branches, num_blocks, channels)
    weights, cfg = prepare_module(params, channels, spatial, multi_scale_output=True)

    # PyTorch-style NCHW inputs (one tensor per branch)
    xs_nchw = []
    kd = kdata
    for i in range(num_branches):
        kd, sub = jax.random.split(kd)
        xs_nchw.append(jax.random.normal(
            sub, (N, channels[i], spatial[i], spatial[i]), jnp.float32))

    # NCHW -> NHWC -> folded (N, H, W*C) for the kernel
    xs_nhwc = [jnp.transpose(x, (0, 2, 3, 1)) for x in xs_nchw]
    xs_folded = [x.reshape(N, spatial[i], spatial[i] * channels[i])
                 for i, x in enumerate(xs_nhwc)]

    outs_folded = hr_module_forward(xs_folded, weights, cfg)
    outs_nhwc = [o.reshape(N, spatial[i], spatial[i], channels[i])
                 for i, o in enumerate(outs_folded)]
    for o in outs_nhwc:
        jax.block_until_ready(o)

    # Validate against the pure-JAX reference (tolerance allows for MXU
    # default-precision differences between Mosaic matmuls and XLA convs).
    refs = hr_module_reference(xs_nhwc, params, multi_scale_output=True)
    max_err = max(float(jnp.max(jnp.abs(a - b))) for a, b in zip(outs_nhwc, refs))
    assert max_err < 1e-1, f"numerical mismatch vs reference: {max_err}"

    # back to NCHW to match the PyTorch module's output convention
    outs_nchw = [jnp.transpose(o, (0, 3, 1, 2)) for o in outs_nhwc]
    expected = [(N, channels[i], spatial[i], spatial[i])
                for i in range(num_branches)]
    assert [tuple(o.shape) for o in outs_nchw] == expected, \
        f"bad shapes {[o.shape for o in outs_nchw]}"
    assert all(bool(jnp.all(jnp.isfinite(o))) for o in outs_nchw)

    print("KERNEL_OK")
</pallas_src>

<mosaic_0001>
module attributes {stable_mosaic.version = 11 : i64} {
  func.func @kernel(%arg0: i32, %arg1: memref<1x16x128xf32, #tpu.memory_space<vmem>>, %arg2: memref<1x8x128xf32, #tpu.memory_space<vmem>>, %arg3: memref<1x4x128xf32, #tpu.memory_space<vmem>>, %arg4: memref<3x128x128xf32, #tpu.memory_space<vmem>>, %arg5: memref<1x128xf32, #tpu.memory_space<vmem>>, %arg6: memref<3x128x128xf32, #tpu.memory_space<vmem>>, %arg7: memref<1x128xf32, #tpu.memory_space<vmem>>, %arg8: memref<3x128x128xf32, #tpu.memory_space<vmem>>, %arg9: memref<1x128xf32, #tpu.memory_space<vmem>>, %arg10: memref<3x128x128xf32, #tpu.memory_space<vmem>>, %arg11: memref<1x128xf32, #tpu.memory_space<vmem>>, %arg12: memref<3x128x128xf32, #tpu.memory_space<vmem>>, %arg13: memref<1x128xf32, #tpu.memory_space<vmem>>, %arg14: memref<3x128x128xf32, #tpu.memory_space<vmem>>, %arg15: memref<1x128xf32, #tpu.memory_space<vmem>>, %arg16: memref<128x128xf32, #tpu.memory_space<vmem>>, %arg17: memref<1x128xf32, #tpu.memory_space<vmem>>, %arg18: memref<128x128xf32, #tpu.memory_space<vmem>>, %arg19: memref<1x128xf32, #tpu.memory_space<vmem>>, %arg20: memref<3x128x128xf32, #tpu.memory_space<vmem>>, %arg21: memref<1x128xf32, #tpu.memory_space<vmem>>, %arg22: memref<128x128xf32, #tpu.memory_space<vmem>>, %arg23: memref<1x128xf32, #tpu.memory_space<vmem>>, %arg24: memref<3x128x64xf32, #tpu.memory_space<vmem>>, %arg25: memref<1x64xf32, #tpu.memory_space<vmem>>, %arg26: memref<3x64x128xf32, #tpu.memory_space<vmem>>, %arg27: memref<1x128xf32, #tpu.memory_space<vmem>>, %arg28: memref<3x128x128xf32, #tpu.memory_space<vmem>>, %arg29: memref<1x128xf32, #tpu.memory_space<vmem>>, %arg30: memref<1x16x128xf32, #tpu.memory_space<vmem>>, %arg31: memref<1x8x128xf32, #tpu.memory_space<vmem>>, %arg32: memref<1x4x128xf32, #tpu.memory_space<vmem>>) attributes {dimension_semantics = [#tpu.dimension_semantics<parallel>], iteration_bounds = array<i64: 2>, scalar_prefetch = 0 : i64, scratch_operands = 0 : i64, tpu.core_type = #tpu.core_type<tc>, window_params = [{transform_indices = @transform_0, window_bounds = array<i64: 1, 16, 128>}, {transform_indices = @transform_1, window_bounds = array<i64: 1, 8, 128>}, {transform_indices = @transform_2, window_bounds = array<i64: 1, 4, 128>}, {pipeline_mode = #tpu.pipeline_mode<synchronous>, transform_indices = @transform_3, window_bounds = array<i64: 3, 128, 128>}, {pipeline_mode = #tpu.pipeline_mode<synchronous>, transform_indices = @transform_4, window_bounds = array<i64: 1, 128>}, {pipeline_mode = #tpu.pipeline_mode<synchronous>, transform_indices = @transform_5, window_bounds = array<i64: 3, 128, 128>}, {pipeline_mode = #tpu.pipeline_mode<synchronous>, transform_indices = @transform_6, window_bounds = array<i64: 1, 128>}, {pipeline_mode = #tpu.pipeline_mode<synchronous>, transform_indices = @transform_7, window_bounds = array<i64: 3, 128, 128>}, {pipeline_mode = #tpu.pipeline_mode<synchronous>, transform_indices = @transform_8, window_bounds = array<i64: 1, 128>}, {pipeline_mode = #tpu.pipeline_mode<synchronous>, transform_indices = @transform_9, window_bounds = array<i64: 3, 128, 128>}, {pipeline_mode = #tpu.pipeline_mode<synchronous>, transform_indices = @transform_10, window_bounds = array<i64: 1, 128>}, {pipeline_mode = #tpu.pipeline_mode<synchronous>, transform_indices = @transform_11, window_bounds = array<i64: 3, 128, 128>}, {pipeline_mode = #tpu.pipeline_mode<synchronous>, transform_indices = @transform_12, window_bounds = array<i64: 1, 128>}, {pipeline_mode = #tpu.pipeline_mode<synchronous>, transform_indices = @transform_13, window_bounds = array<i64: 3, 128, 128>}, {pipeline_mode = #tpu.pipeline_mode<synchronous>, transform_indices = @transform_14, window_bounds = array<i64: 1, 128>}, {pipeline_mode = #tpu.pipeline_mode<synchronous>, transform_indices = @transform_15, window_bounds = array<i64: 128, 128>}, {pipeline_mode = #tpu.pipeline_mode<synchronous>, transform_indices = @transform_16, window_bounds = array<i64: 1, 128>}, {pipeline_mode = #tpu.pipeline_mode<synchronous>, transform_indices = @transform_17, window_bounds = array<i64: 128, 128>}, {pipeline_mode = #tpu.pipeline_mode<synchronous>, transform_indices = @transform_18, window_bounds = array<i64: 1, 128>}, {pipeline_mode = #tpu.pipeline_mode<synchronous>, transform_indices = @transform_19, window_bounds = array<i64: 3, 128, 128>}, {pipeline_mode = #tpu.pipeline_mode<synchronous>, transform_indices = @transform_20, window_bounds = array<i64: 1, 128>}, {pipeline_mode = #tpu.pipeline_mode<synchronous>, transform_indices = @transform_21, window_bounds = array<i64: 128, 128>}, {pipeline_mode = #tpu.pipeline_mode<synchronous>, transform_indices = @transform_22, window_bounds = array<i64: 1, 128>}, {pipeline_mode = #tpu.pipeline_mode<synchronous>, transform_indices = @transform_23, window_bounds = array<i64: 3, 128, 64>}, {pipeline_mode = #tpu.pipeline_mode<synchronous>, transform_indices = @transform_24, window_bounds = array<i64: 1, 64>}, {pipeline_mode = #tpu.pipeline_mode<synchronous>, transform_indices = @transform_25, window_bounds = array<i64: 3, 64, 128>}, {pipeline_mode = #tpu.pipeline_mode<synchronous>, transform_indices = @transform_26, window_bounds = array<i64: 1, 128>}, {pipeline_mode = #tpu.pipeline_mode<synchronous>, transform_indices = @transform_27, window_bounds = array<i64: 3, 128, 128>}, {pipeline_mode = #tpu.pipeline_mode<synchronous>, transform_indices = @transform_28, window_bounds = array<i64: 1, 128>}, {transform_indices = @transform_29, window_bounds = array<i64: 1, 16, 128>}, {transform_indices = @transform_30, window_bounds = array<i64: 1, 8, 128>}, {transform_indices = @transform_31, window_bounds = array<i64: 1, 4, 128>}]} {
    %c0 = arith.constant 0 : index
    %c0_0 = arith.constant 0 : index
    %c0_1 = arith.constant 0 : index
    %0 = vector.load %arg1[%c0, %c0_0, %c0_1] : memref<1x16x128xf32, #tpu.memory_space<vmem>>, vector<1x16x128xf32>
    %1 = vector.shape_cast %0 : vector<1x16x128xf32> to vector<16x128xf32>
    %c0_2 = arith.constant 0 : index
    %c0_3 = arith.constant 0 : index
    %c0_4 = arith.constant 0 : index
    %2 = vector.load %arg2[%c0_2, %c0_3, %c0_4] : memref<1x8x128xf32, #tpu.memory_space<vmem>>, vector<1x8x128xf32>
    %3 = vector.shape_cast %2 : vector<1x8x128xf32> to vector<8x128xf32>
    %c0_5 = arith.constant 0 : index
    %c0_6 = arith.constant 0 : index
    %c0_7 = arith.constant 0 : index
    %4 = vector.load %arg3[%c0_5, %c0_6, %c0_7] : memref<1x4x128xf32, #tpu.memory_space<vmem>>, vector<1x4x128xf32>
    %5 = vector.shape_cast %4 : vector<1x4x128xf32> to vector<4x128xf32>
    %c0_8 = arith.constant 0 : index
    %c0_9 = arith.constant 0 : index
    %c0_10 = arith.constant 0 : index
    %6 = vector.load %arg4[%c0_8, %c0_9, %c0_10] : memref<3x128x128xf32, #tpu.memory_space<vmem>>, vector<3x128x128xf32>
    %c0_11 = arith.constant 0 : index
    %c0_12 = arith.constant 0 : index
    %7 = vector.load %arg5[%c0_11, %c0_12] : memref<1x128xf32, #tpu.memory_space<vmem>>, vector<1x128xf32>
    %c0_13 = arith.constant 0 : index
    %c0_14 = arith.constant 0 : index
    %c0_15 = arith.constant 0 : index
    %8 = vector.load %arg6[%c0_13, %c0_14, %c0_15] : memref<3x128x128xf32, #tpu.memory_space<vmem>>, vector<3x128x128xf32>
    %c0_16 = arith.constant 0 : index
    %c0_17 = arith.constant 0 : index
    %9 = vector.load %arg7[%c0_16, %c0_17] : memref<1x128xf32, #tpu.memory_space<vmem>>, vector<1x128xf32>
    %cst = arith.constant 0.000000e+00 : f32
    %10 = vector.broadcast %cst : f32 to vector<1x128xf32>
    %11 = vector.extract_strided_slice %1 {offsets = [0, 0], sizes = [15, 128], strides = [1, 1]} : vector<16x128xf32> to vector<15x128xf32>
    %12 = tpu.concatenate %10, %11 in 0 : vector<1x128xf32>, vector<15x128xf32> -> vector<16x128xf32>
    %13 = vector.extract_strided_slice %1 {offsets = [1, 0], sizes = [15, 128], strides = [1, 1]} : vector<16x128xf32> to vector<15x128xf32>
    %14 = tpu.concatenate %13, %10 in 0 : vector<15x128xf32>, vector<1x128xf32> -> vector<16x128xf32>
    %15 = vector.extract_strided_slice %6 {offsets = [0, 0, 0], sizes = [1, 128, 128], strides = [1, 1, 1]} : vector<3x128x128xf32> to vector<1x128x128xf32>
    %16 = vector.shape_cast %15 : vector<1x128x128xf32> to vector<128x128xf32>
    %cst_18 = arith.constant dense<0.000000e+00> : vector<16x128xf32>
    %17 = tpu.matmul %12, %16, %cst_18 {dimension_numbers = #tpu.dot_dimension_numbers<[1], [0], [0], [1], [0, 0, 1, 1], [], []>} : vector<16x128xf32>, vector<128x128xf32>, vector<16x128xf32> -> vector<16x128xf32>
    %18 = vector.extract_strided_slice %6 {offsets = [1, 0, 0], sizes = [1, 128, 128], strides = [1, 1, 1]} : vector<3x128x128xf32> to vector<1x128x128xf32>
    %19 = vector.shape_cast %18 : vector<1x128x128xf32> to vector<128x128xf32>
    %cst_19 = arith.constant dense<0.000000e+00> : vector<16x128xf32>
    %20 = tpu.matmul %1, %19, %cst_19 {dimension_numbers = #tpu.dot_dimension_numbers<[1], [0], [0], [1], [0, 0, 1, 1], [], []>} : vector<16x128xf32>, vector<128x128xf32>, vector<16x128xf32> -> vector<16x128xf32>
    %21 = arith.addf %17, %20 : vector<16x128xf32>
    %22 = vector.extract_strided_slice %6 {offsets = [2, 0, 0], sizes = [1, 128, 128], strides = [1, 1, 1]} : vector<3x128x128xf32> to vector<1x128x128xf32>
    %23 = vector.shape_cast %22 : vector<1x128x128xf32> to vector<128x128xf32>
    %cst_20 = arith.constant dense<0.000000e+00> : vector<16x128xf32>
    %24 = tpu.matmul %14, %23, %cst_20 {dimension_numbers = #tpu.dot_dimension_numbers<[1], [0], [0], [1], [0, 0, 1, 1], [], []>} : vector<16x128xf32>, vector<128x128xf32>, vector<16x128xf32> -> vector<16x128xf32>
    %25 = arith.addf %21, %24 : vector<16x128xf32>
    %26 = vector.broadcast %7 : vector<1x128xf32> to vector<16x128xf32>
    %27 = arith.addf %25, %26 : vector<16x128xf32>
    %cst_21 = arith.constant 0.000000e+00 : f32
    %28 = vector.broadcast %cst_21 : f32 to vector<16x128xf32>
    %29 = arith.maximumf %27, %28 : vector<16x128xf32>
    %cst_22 = arith.constant 0.000000e+00 : f32
    %30 = vector.broadcast %cst_22 : f32 to vector<1x128xf32>
    %31 = vector.extract_strided_slice %29 {offsets = [0, 0], sizes = [15, 128], strides = [1, 1]} : vector<16x128xf32> to vector<15x128xf32>
    %32 = tpu.concatenate %30, %31 in 0 : vector<1x128xf32>, vector<15x128xf32> -> vector<16x128xf32>
    %33 = vector.extract_strided_slice %29 {offsets = [1, 0], sizes = [15, 128], strides = [1, 1]} : vector<16x128xf32> to vector<15x128xf32>
    %34 = tpu.concatenate %33, %30 in 0 : vector<15x128xf32>, vector<1x128xf32> -> vector<16x128xf32>
    %35 = vector.extract_strided_slice %8 {offsets = [0, 0, 0], sizes = [1, 128, 128], strides = [1, 1, 1]} : vector<3x128x128xf32> to vector<1x128x128xf32>
    %36 = vector.shape_cast %35 : vector<1x128x128xf32> to vector<128x128xf32>
    %cst_23 = arith.constant dense<0.000000e+00> : vector<16x128xf32>
    %37 = tpu.matmul %32, %36, %cst_23 {dimension_numbers = #tpu.dot_dimension_numbers<[1], [0], [0], [1], [0, 0, 1, 1], [], []>} : vector<16x128xf32>, vector<128x128xf32>, vector<16x128xf32> -> vector<16x128xf32>
    %38 = vector.extract_strided_slice %8 {offsets = [1, 0, 0], sizes = [1, 128, 128], strides = [1, 1, 1]} : vector<3x128x128xf32> to vector<1x128x128xf32>
    %39 = vector.shape_cast %38 : vector<1x128x128xf32> to vector<128x128xf32>
    %cst_24 = arith.constant dense<0.000000e+00> : vector<16x128xf32>
    %40 = tpu.matmul %29, %39, %cst_24 {dimension_numbers = #tpu.dot_dimension_numbers<[1], [0], [0], [1], [0, 0, 1, 1], [], []>} : vector<16x128xf32>, vector<128x128xf32>, vector<16x128xf32> -> vector<16x128xf32>
    %41 = arith.addf %37, %40 : vector<16x128xf32>
    %42 = vector.extract_strided_slice %8 {offsets = [2, 0, 0], sizes = [1, 128, 128], strides = [1, 1, 1]} : vector<3x128x128xf32> to vector<1x128x128xf32>
    %43 = vector.shape_cast %42 : vector<1x128x128xf32> to vector<128x128xf32>
    %cst_25 = arith.constant dense<0.000000e+00> : vector<16x128xf32>
    %44 = tpu.matmul %34, %43, %cst_25 {dimension_numbers = #tpu.dot_dimension_numbers<[1], [0], [0], [1], [0, 0, 1, 1], [], []>} : vector<16x128xf32>, vector<128x128xf32>, vector<16x128xf32> -> vector<16x128xf32>
    %45 = arith.addf %41, %44 : vector<16x128xf32>
    %46 = vector.broadcast %9 : vector<1x128xf32> to vector<16x128xf32>
    %47 = arith.addf %45, %46 : vector<16x128xf32>
    %48 = arith.addf %47, %1 : vector<16x128xf32>
    %cst_26 = arith.constant 0.000000e+00 : f32
    %49 = vector.broadcast %cst_26 : f32 to vector<16x128xf32>
    %50 = arith.maximumf %48, %49 : vector<16x128xf32>
    %c0_27 = arith.constant 0 : index
    %c0_28 = arith.constant 0 : index
    %c0_29 = arith.constant 0 : index
    %51 = vector.load %arg8[%c0_27, %c0_28, %c0_29] : memref<3x128x128xf32, #tpu.memory_space<vmem>>, vector<3x128x128xf32>
    %c0_30 = arith.constant 0 : index
    %c0_31 = arith.constant 0 : index
    %52 = vector.load %arg9[%c0_30, %c0_31] : memref<1x128xf32, #tpu.memory_space<vmem>>, vector<1x128xf32>
    %c0_32 = arith.constant 0 : index
    %c0_33 = arith.constant 0 : index
    %c0_34 = arith.constant 0 : index
    %53 = vector.load %arg10[%c0_32, %c0_33, %c0_34] : memref<3x128x128xf32, #tpu.memory_space<vmem>>, vector<3x128x128xf32>
    %c0_35 = arith.constant 0 : index
    %c0_36 = arith.constant 0 : index
    %54 = vector.load %arg11[%c0_35, %c0_36] : memref<1x128xf32, #tpu.memory_space<vmem>>, vector<1x128xf32>
    %cst_37 = arith.constant 0.000000e+00 : f32
    %55 = vector.broadcast %cst_37 : f32 to vector<1x128xf32>
    %56 = vector.extract_strided_slice %3 {offsets = [0, 0], sizes = [7, 128], strides = [1, 1]} : vector<8x128xf32> to vector<7x128xf32>
    %57 = tpu.concatenate %55, %56 in 0 : vector<1x128xf32>, vector<7x128xf32> -> vector<8x128xf32>
    %58 = vector.extract_strided_slice %3 {offsets = [1, 0], sizes = [7, 128], strides = [1, 1]} : vector<8x128xf32> to vector<7x128xf32>
    %59 = tpu.concatenate %58, %55 in 0 : vector<7x128xf32>, vector<1x128xf32> -> vector<8x128xf32>
    %60 = vector.extract_strided_slice %51 {offsets = [0, 0, 0], sizes = [1, 128, 128], strides = [1, 1, 1]} : vector<3x128x128xf32> to vector<1x128x128xf32>
    %61 = vector.shape_cast %60 : vector<1x128x128xf32> to vector<128x128xf32>
    %cst_38 = arith.constant dense<0.000000e+00> : vector<8x128xf32>
    %62 = tpu.matmul %57, %61, %cst_38 {dimension_numbers = #tpu.dot_dimension_numbers<[1], [0], [0], [1], [0, 0, 1, 1], [], []>} : vector<8x128xf32>, vector<128x128xf32>, vector<8x128xf32> -> vector<8x128xf32>
    %63 = vector.extract_strided_slice %51 {offsets = [1, 0, 0], sizes = [1, 128, 128], strides = [1, 1, 1]} : vector<3x128x128xf32> to vector<1x128x128xf32>
    %64 = vector.shape_cast %63 : vector<1x128x128xf32> to vector<128x128xf32>
    %cst_39 = arith.constant dense<0.000000e+00> : vector<8x128xf32>
    %65 = tpu.matmul %3, %64, %cst_39 {dimension_numbers = #tpu.dot_dimension_numbers<[1], [0], [0], [1], [0, 0, 1, 1], [], []>} : vector<8x128xf32>, vector<128x128xf32>, vector<8x128xf32> -> vector<8x128xf32>
    %66 = arith.addf %62, %65 : vector<8x128xf32>
    %67 = vector.extract_strided_slice %51 {offsets = [2, 0, 0], sizes = [1, 128, 128], strides = [1, 1, 1]} : vector<3x128x128xf32> to vector<1x128x128xf32>
    %68 = vector.shape_cast %67 : vector<1x128x128xf32> to vector<128x128xf32>
    %cst_40 = arith.constant dense<0.000000e+00> : vector<8x128xf32>
    %69 = tpu.matmul %59, %68, %cst_40 {dimension_numbers = #tpu.dot_dimension_numbers<[1], [0], [0], [1], [0, 0, 1, 1], [], []>} : vector<8x128xf32>, vector<128x128xf32>, vector<8x128xf32> -> vector<8x128xf32>
    %70 = arith.addf %66, %69 : vector<8x128xf32>
    %71 = vector.broadcast %52 : vector<1x128xf32> to vector<8x128xf32>
    %72 = arith.addf %70, %71 : vector<8x128xf32>
    %cst_41 = arith.constant 0.000000e+00 : f32
    %73 = vector.broadcast %cst_41 : f32 to vector<8x128xf32>
    %74 = arith.maximumf %72, %73 : vector<8x128xf32>
    %cst_42 = arith.constant 0.000000e+00 : f32
    %75 = vector.broadcast %cst_42 : f32 to vector<1x128xf32>
    %76 = vector.extract_strided_slice %74 {offsets = [0, 0], sizes = [7, 128], strides = [1, 1]} : vector<8x128xf32> to vector<7x128xf32>
    %77 = tpu.concatenate %75, %76 in 0 : vector<1x128xf32>, vector<7x128xf32> -> vector<8x128xf32>
    %78 = vector.extract_strided_slice %74 {offsets = [1, 0], sizes = [7, 128], strides = [1, 1]} : vector<8x128xf32> to vector<7x128xf32>
    %79 = tpu.concatenate %78, %75 in 0 : vector<7x128xf32>, vector<1x128xf32> -> vector<8x128xf32>
    %80 = vector.extract_strided_slice %53 {offsets = [0, 0, 0], sizes = [1, 128, 128], strides = [1, 1, 1]} : vector<3x128x128xf32> to vector<1x128x128xf32>
    %81 = vector.shape_cast %80 : vector<1x128x128xf32> to vector<128x128xf32>
    %cst_43 = arith.constant dense<0.000000e+00> : vector<8x128xf32>
    %82 = tpu.matmul %77, %81, %cst_43 {dimension_numbers = #tpu.dot_dimension_numbers<[1], [0], [0], [1], [0, 0, 1, 1], [], []>} : vector<8x128xf32>, vector<128x128xf32>, vector<8x128xf32> -> vector<8x128xf32>
    %83 = vector.extract_strided_slice %53 {offsets = [1, 0, 0], sizes = [1, 128, 128], strides = [1, 1, 1]} : vector<3x128x128xf32> to vector<1x128x128xf32>
    %84 = vector.shape_cast %83 : vector<1x128x128xf32> to vector<128x128xf32>
    %cst_44 = arith.constant dense<0.000000e+00> : vector<8x128xf32>
    %85 = tpu.matmul %74, %84, %cst_44 {dimension_numbers = #tpu.dot_dimension_numbers<[1], [0], [0], [1], [0, 0, 1, 1], [], []>} : vector<8x128xf32>, vector<128x128xf32>, vector<8x128xf32> -> vector<8x128xf32>
    %86 = arith.addf %82, %85 : vector<8x128xf32>
    %87 = vector.extract_strided_slice %53 {offsets = [2, 0, 0], sizes = [1, 128, 128], strides = [1, 1, 1]} : vector<3x128x128xf32> to vector<1x128x128xf32>
    %88 = vector.shape_cast %87 : vector<1x128x128xf32> to vector<128x128xf32>
    %cst_45 = arith.constant dense<0.000000e+00> : vector<8x128xf32>
    %89 = tpu.matmul %79, %88, %cst_45 {dimension_numbers = #tpu.dot_dimension_numbers<[1], [0], [0], [1], [0, 0, 1, 1], [], []>} : vector<8x128xf32>, vector<128x128xf32>, vector<8x128xf32> -> vector<8x128xf32>
    %90 = arith.addf %86, %89 : vector<8x128xf32>
    %91 = vector.broadcast %54 : vector<1x128xf32> to vector<8x128xf32>
    %92 = arith.addf %90, %91 : vector<8x128xf32>
    %93 = arith.addf %92, %3 : vector<8x128xf32>
    %cst_46 = arith.constant 0.000000e+00 : f32
    %94 = vector.broadcast %cst_46 : f32 to vector<8x128xf32>
    %95 = arith.maximumf %93, %94 : vector<8x128xf32>
    %c0_47 = arith.constant 0 : index
    %c0_48 = arith.constant 0 : index
    %c0_49 = arith.constant 0 : index
    %96 = vector.load %arg12[%c0_47, %c0_48, %c0_49] : memref<3x128x128xf32, #tpu.memory_space<vmem>>, vector<3x128x128xf32>
    %c0_50 = arith.constant 0 : index
    %c0_51 = arith.constant 0 : index
    %97 = vector.load %arg13[%c0_50, %c0_51] : memref<1x128xf32, #tpu.memory_space<vmem>>, vector<1x128xf32>
    %c0_52 = arith.constant 0 : index
    %c0_53 = arith.constant 0 : index
    %c0_54 = arith.constant 0 : index
    %98 = vector.load %arg14[%c0_52, %c0_53, %c0_54] : memref<3x128x128xf32, #tpu.memory_space<vmem>>, vector<3x128x128xf32>
    %c0_55 = arith.constant 0 : index
    %c0_56 = arith.constant 0 : index
    %99 = vector.load %arg15[%c0_55, %c0_56] : memref<1x128xf32, #tpu.memory_space<vmem>>, vector<1x128xf32>
    %cst_57 = arith.constant 0.000000e+00 : f32
    %100 = vector.broadcast %cst_57 : f32 to vector<1x128xf32>
    %101 = vector.extract_strided_slice %5 {offsets = [0, 0], sizes = [3, 128], strides = [1, 1]} : vector<4x128xf32> to vector<3x128xf32>
    %102 = tpu.concatenate %100, %101 in 0 : vector<1x128xf32>, vector<3x128xf32> -> vector<4x128xf32>
    %103 = vector.extract_strided_slice %5 {offsets = [1, 0], sizes = [3, 128], strides = [1, 1]} : vector<4x128xf32> to vector<3x128xf32>
    %104 = tpu.concatenate %103, %100 in 0 : vector<3x128xf32>, vector<1x128xf32> -> vector<4x128xf32>
    %105 = vector.extract_strided_slice %96 {offsets = [0, 0, 0], sizes = [1, 128, 128], strides = [1, 1, 1]} : vector<3x128x128xf32> to vector<1x128x128xf32>
    %106 = vector.shape_cast %105 : vector<1x128x128xf32> to vector<128x128xf32>
    %cst_58 = arith.constant dense<0.000000e+00> : vector<4x128xf32>
    %107 = tpu.matmul %102, %106, %cst_58 {dimension_numbers = #tpu.dot_dimension_numbers<[1], [0], [0], [1], [0, 0, 1, 1], [], []>} : vector<4x128xf32>, vector<128x128xf32>, vector<4x128xf32> -> vector<4x128xf32>
    %108 = vector.extract_strided_slice %96 {offsets = [1, 0, 0], sizes = [1, 128, 128], strides = [1, 1, 1]} : vector<3x128x128xf32> to vector<1x128x128xf32>
    %109 = vector.shape_cast %108 : vector<1x128x128xf32> to vector<128x128xf32>
    %cst_59 = arith.constant dense<0.000000e+00> : vector<4x128xf32>
    %110 = tpu.matmul %5, %109, %cst_59 {dimension_numbers = #tpu.dot_dimension_numbers<[1], [0], [0], [1], [0, 0, 1, 1], [], []>} : vector<4x128xf32>, vector<128x128xf32>, vector<4x128xf32> -> vector<4x128xf32>
    %111 = arith.addf %107, %110 : vector<4x128xf32>
    %112 = vector.extract_strided_slice %96 {offsets = [2, 0, 0], sizes = [1, 128, 128], strides = [1, 1, 1]} : vector<3x128x128xf32> to vector<1x128x128xf32>
    %113 = vector.shape_cast %112 : vector<1x128x128xf32> to vector<128x128xf32>
    %cst_60 = arith.constant dense<0.000000e+00> : vector<4x128xf32>
    %114 = tpu.matmul %104, %113, %cst_60 {dimension_numbers = #tpu.dot_dimension_numbers<[1], [0], [0], [1], [0, 0, 1, 1], [], []>} : vector<4x128xf32>, vector<128x128xf32>, vector<4x128xf32> -> vector<4x128xf32>
    %115 = arith.addf %111, %114 : vector<4x128xf32>
    %116 = vector.broadcast %97 : vector<1x128xf32> to vector<4x128xf32>
    %117 = arith.addf %115, %116 : vector<4x128xf32>
    %cst_61 = arith.constant 0.000000e+00 : f32
    %118 = vector.broadcast %cst_61 : f32 to vector<4x128xf32>
    %119 = arith.maximumf %117, %118 : vector<4x128xf32>
    %cst_62 = arith.constant 0.000000e+00 : f32
    %120 = vector.broadcast %cst_62 : f32 to vector<1x128xf32>
    %121 = vector.extract_strided_slice %119 {offsets = [0, 0], sizes = [3, 128], strides = [1, 1]} : vector<4x128xf32> to vector<3x128xf32>
    %122 = tpu.concatenate %120, %121 in 0 : vector<1x128xf32>, vector<3x128xf32> -> vector<4x128xf32>
    %123 = vector.extract_strided_slice %119 {offsets = [1, 0], sizes = [3, 128], strides = [1, 1]} : vector<4x128xf32> to vector<3x128xf32>
    %124 = tpu.concatenate %123, %120 in 0 : vector<3x128xf32>, vector<1x128xf32> -> vector<4x128xf32>
    %125 = vector.extract_strided_slice %98 {offsets = [0, 0, 0], sizes = [1, 128, 128], strides = [1, 1, 1]} : vector<3x128x128xf32> to vector<1x128x128xf32>
    %126 = vector.shape_cast %125 : vector<1x128x128xf32> to vector<128x128xf32>
    %cst_63 = arith.constant dense<0.000000e+00> : vector<4x128xf32>
    %127 = tpu.matmul %122, %126, %cst_63 {dimension_numbers = #tpu.dot_dimension_numbers<[1], [0], [0], [1], [0, 0, 1, 1], [], []>} : vector<4x128xf32>, vector<128x128xf32>, vector<4x128xf32> -> vector<4x128xf32>
    %128 = vector.extract_strided_slice %98 {offsets = [1, 0, 0], sizes = [1, 128, 128], strides = [1, 1, 1]} : vector<3x128x128xf32> to vector<1x128x128xf32>
    %129 = vector.shape_cast %128 : vector<1x128x128xf32> to vector<128x128xf32>
    %cst_64 = arith.constant dense<0.000000e+00> : vector<4x128xf32>
    %130 = tpu.matmul %119, %129, %cst_64 {dimension_numbers = #tpu.dot_dimension_numbers<[1], [0], [0], [1], [0, 0, 1, 1], [], []>} : vector<4x128xf32>, vector<128x128xf32>, vector<4x128xf32> -> vector<4x128xf32>
    %131 = arith.addf %127, %130 : vector<4x128xf32>
    %132 = vector.extract_strided_slice %98 {offsets = [2, 0, 0], sizes = [1, 128, 128], strides = [1, 1, 1]} : vector<3x128x128xf32> to vector<1x128x128xf32>
    %133 = vector.shape_cast %132 : vector<1x128x128xf32> to vector<128x128xf32>
    %cst_65 = arith.constant dense<0.000000e+00> : vector<4x128xf32>
    %134 = tpu.matmul %124, %133, %cst_65 {dimension_numbers = #tpu.dot_dimension_numbers<[1], [0], [0], [1], [0, 0, 1, 1], [], []>} : vector<4x128xf32>, vector<128x128xf32>, vector<4x128xf32> -> vector<4x128xf32>
    %135 = arith.addf %131, %134 : vector<4x128xf32>
    %136 = vector.broadcast %99 : vector<1x128xf32> to vector<4x128xf32>
    %137 = arith.addf %135, %136 : vector<4x128xf32>
    %138 = arith.addf %137, %5 : vector<4x128xf32>
    %cst_66 = arith.constant 0.000000e+00 : f32
    %139 = vector.broadcast %cst_66 : f32 to vector<4x128xf32>
    %140 = arith.maximumf %138, %139 : vector<4x128xf32>
    %c0_67 = arith.constant 0 : index
    %c0_68 = arith.constant 0 : index
    %141 = vector.load %arg16[%c0_67, %c0_68] : memref<128x128xf32, #tpu.memory_space<vmem>>, vector<128x128xf32>
    %c0_69 = arith.constant 0 : index
    %c0_70 = arith.constant 0 : index
    %142 = vector.load %arg17[%c0_69, %c0_70] : memref<1x128xf32, #tpu.memory_space<vmem>>, vector<1x128xf32>
    %cst_71 = arith.constant dense<0.000000e+00> : vector<8x128xf32>
    %143 = tpu.matmul %95, %141, %cst_71 {dimension_numbers = #tpu.dot_dimension_numbers<[1], [0], [0], [1], [0, 0, 1, 1], [], []>} : vector<8x128xf32>, vector<128x128xf32>, vector<8x128xf32> -> vector<8x128xf32>
    %144 = vector.broadcast %142 : vector<1x128xf32> to vector<8x128xf32>
    %145 = arith.addf %143, %144 : vector<8x128xf32>
    %146 = vector.shape_cast %50 : vector<16x128xf32> to vector<8x2x128xf32>
    %147 = vector.shape_cast %145 : vector<8x128xf32> to vector<8x1x128xf32>
    %148 = vector.broadcast %147 : vector<8x1x128xf32> to vector<8x2x128xf32>
    %149 = arith.addf %146, %148 : vector<8x2x128xf32>
    %150 = vector.shape_cast %149 : vector<8x2x128xf32> to vector<16x128xf32>
    %c0_72 = arith.constant 0 : index
    %c0_73 = arith.constant 0 : index
    %151 = vector.load %arg18[%c0_72, %c0_73] : memref<128x128xf32, #tpu.memory_space<vmem>>, vector<128x128xf32>
    %c0_74 = arith.constant 0 : index
    %c0_75 = arith.constant 0 : index
    %152 = vector.load %arg19[%c0_74, %c0_75] : memref<1x128xf32, #tpu.memory_space<vmem>>, vector<1x128xf32>
    %cst_76 = arith.constant dense<0.000000e+00> : vector<4x128xf32>
    %153 = tpu.matmul %140, %151, %cst_76 {dimension_numbers = #tpu.dot_dimension_numbers<[1], [0], [0], [1], [0, 0, 1, 1], [], []>} : vector<4x128xf32>, vector<128x128xf32>, vector<4x128xf32> -> vector<4x128xf32>
    %154 = vector.broadcast %152 : vector<1x128xf32> to vector<4x128xf32>
    %155 = arith.addf %153, %154 : vector<4x128xf32>
    %156 = vector.shape_cast %150 : vector<16x128xf32> to vector<4x4x128xf32>
    %157 = vector.shape_cast %155 : vector<4x128xf32> to vector<4x1x128xf32>
    %158 = vector.broadcast %157 : vector<4x1x128xf32> to vector<4x4x128xf32>
    %159 = arith.addf %156, %158 : vector<4x4x128xf32>
    %160 = vector.shape_cast %159 : vector<4x4x128xf32> to vector<16x128xf32>
    %cst_77 = arith.constant 0.000000e+00 : f32
    %161 = vector.broadcast %cst_77 : f32 to vector<16x128xf32>
    %162 = arith.maximumf %160, %161 : vector<16x128xf32>
    %c0_78 = arith.constant 0 : index
    %c0_79 = arith.constant 0 : index
    %c0_80 = arith.constant 0 : index
    %163 = vector.load %arg30[%c0_78, %c0_79, %c0_80] : memref<1x16x128xf32, #tpu.memory_space<vmem>>, vector<1x16x128xf32>
    %164 = vector.shape_cast %163 : vector<1x16x128xf32> to vector<16x128xf32>
    %165 = vector.shape_cast %162 : vector<16x128xf32> to vector<1x16x128xf32>
    tpu.vector_store %arg30[%c0_78, %c0_79, %c0_80], %165 {strides = array<i32>} : memref<1x16x128xf32, #tpu.memory_space<vmem>>, vector<1x16x128xf32>,
    %c0_81 = arith.constant 0 : index
    %c0_82 = arith.constant 0 : index
    %c0_83 = arith.constant 0 : index
    %166 = vector.load %arg20[%c0_81, %c0_82, %c0_83] : memref<3x128x128xf32, #tpu.memory_space<vmem>>, vector<3x128x128xf32>
    %c0_84 = arith.constant 0 : index
    %c0_85 = arith.constant 0 : index
    %167 = vector.load %arg21[%c0_84, %c0_85] : memref<1x128xf32, #tpu.memory_space<vmem>>, vector<1x128xf32>
    %cst_86 = arith.constant 0.000000e+00 : f32
    %168 = vector.broadcast %cst_86 : f32 to vector<1x128xf32>
    %169 = vector.shape_cast %50 : vector<16x128xf32> to vector<8x2x128xf32>
    %170 = vector.extract_strided_slice %169 {offsets = [0, 0, 0], sizes = [8, 1, 128], strides = [1, 1, 1]} : vector<8x2x128xf32> to vector<8x1x128xf32>
    %171 = vector.shape_cast %170 : vector<8x1x128xf32> to vector<8x128xf32>
    %172 = vector.extract_strided_slice %169 {offsets = [0, 1, 0], sizes = [8, 1, 128], strides = [1, 1, 1]} : vector<8x2x128xf32> to vector<8x1x128xf32>
    %173 = vector.shape_cast %172 : vector<8x1x128xf32> to vector<8x128xf32>
    %174 = vector.extract_strided_slice %173 {offsets = [0, 0], sizes = [7, 128], strides = [1, 1]} : vector<8x128xf32> to vector<7x128xf32>
    %175 = tpu.concatenate %168, %174 in 0 : vector<1x128xf32>, vector<7x128xf32> -> vector<8x128xf32>
    %176 = vector.extract_strided_slice %166 {offsets = [0, 0, 0], sizes = [1, 128, 128], strides = [1, 1, 1]} : vector<3x128x128xf32> to vector<1x128x128xf32>
    %177 = vector.shape_cast %176 : vector<1x128x128xf32> to vector<128x128xf32>
    %cst_87 = arith.constant dense<0.000000e+00> : vector<8x128xf32>
    %178 = tpu.matmul %175, %177, %cst_87 {dimension_numbers = #tpu.dot_dimension_numbers<[1], [0], [0], [1], [0, 0, 1, 1], [], []>} : vector<8x128xf32>, vector<128x128xf32>, vector<8x128xf32> -> vector<8x128xf32>
    %179 = vector.extract_strided_slice %166 {offsets = [1, 0, 0], sizes = [1, 128, 128], strides = [1, 1, 1]} : vector<3x128x128xf32> to vector<1x128x128xf32>
    %180 = vector.shape_cast %179 : vector<1x128x128xf32> to vector<128x128xf32>
    %cst_88 = arith.constant dense<0.000000e+00> : vector<8x128xf32>
    %181 = tpu.matmul %171, %180, %cst_88 {dimension_numbers = #tpu.dot_dimension_numbers<[1], [0], [0], [1], [0, 0, 1, 1], [], []>} : vector<8x128xf32>, vector<128x128xf32>, vector<8x128xf32> -> vector<8x128xf32>
    %182 = arith.addf %178, %181 : vector<8x128xf32>
    %183 = vector.extract_strided_slice %166 {offsets = [2, 0, 0], sizes = [1, 128, 128], strides = [1, 1, 1]} : vector<3x128x128xf32> to vector<1x128x128xf32>
    %184 = vector.shape_cast %183 : vector<1x128x128xf32> to vector<128x128xf32>
    %cst_89 = arith.constant dense<0.000000e+00> : vector<8x128xf32>
    %185 = tpu.matmul %173, %184, %cst_89 {dimension_numbers = #tpu.dot_dimension_numbers<[1], [0], [0], [1], [0, 0, 1, 1], [], []>} : vector<8x128xf32>, vector<128x128xf32>, vector<8x128xf32> -> vector<8x128xf32>
    %186 = arith.addf %182, %185 : vector<8x128xf32>
    %187 = vector.broadcast %167 : vector<1x128xf32> to vector<8x128xf32>
    %188 = arith.addf %186, %187 : vector<8x128xf32>
    %189 = arith.addf %188, %95 : vector<8x128xf32>
    %c0_90 = arith.constant 0 : index
    %c0_91 = arith.constant 0 : index
    %190 = vector.load %arg22[%c0_90, %c0_91] : memref<128x128xf32, #tpu.memory_space<vmem>>, vector<128x128xf32>
    %c0_92 = arith.constant 0 : index
    %c0_93 = arith.constant 0 : index
    %191 = vector.load %arg23[%c0_92, %c0_93] : memref<1x128xf32, #tpu.memory_space<vmem>>, vector<1x128xf32>
    %cst_94 = arith.constant dense<0.000000e+00> : vector<4x128xf32>
    %192 = tpu.matmul %140, %190, %cst_94 {dimension_numbers = #tpu.dot_dimension_numbers<[1], [0], [0], [1], [0, 0, 1, 1], [], []>} : vector<4x128xf32>, vector<128x128xf32>, vector<4x128xf32> -> vector<4x128xf32>
    %193 = vector.broadcast %191 : vector<1x128xf32> to vector<4x128xf32>
    %194 = arith.addf %192, %193 : vector<4x128xf32>
    %195 = vector.shape_cast %189 : vector<8x128xf32> to vector<4x2x128xf32>
    %196 = vector.shape_cast %194 : vector<4x128xf32> to vector<4x1x128xf32>
    %197 = vector.broadcast %196 : vector<4x1x128xf32> to vector<4x2x128xf32>
    %198 = arith.addf %195, %197 : vector<4x2x128xf32>
    %199 = vector.shape_cast %198 : vector<4x2x128xf32> to vector<8x128xf32>
    %cst_95 = arith.constant 0.000000e+00 : f32
    %200 = vector.broadcast %cst_95 : f32 to vector<8x128xf32>
    %201 = arith.maximumf %199, %200 : vector<8x128xf32>
    %c0_96 = arith.constant 0 : index
    %c0_97 = arith.constant 0 : index
    %c0_98 = arith.constant 0 : index
    %202 = vector.load %arg31[%c0_96, %c0_97, %c0_98] : memref<1x8x128xf32, #tpu.memory_space<vmem>>, vector<1x8x128xf32>
    %203 = vector.shape_cast %202 : vector<1x8x128xf32> to vector<8x128xf32>
    %204 = vector.shape_cast %201 : vector<8x128xf32> to vector<1x8x128xf32>
    tpu.vector_store %arg31[%c0_96, %c0_97, %c0_98], %204 {strides = array<i32>} : memref<1x8x128xf32, #tpu.memory_space<vmem>>, vector<1x8x128xf32>,
    %c0_99 = arith.constant 0 : index
    %c0_100 = arith.constant 0 : index
    %c0_101 = arith.constant 0 : index
    %205 = vector.load %arg24[%c0_99, %c0_100, %c0_101] : memref<3x128x64xf32, #tpu.memory_space<vmem>>, vector<3x128x64xf32>
    %c0_102 = arith.constant 0 : index
    %c0_103 = arith.constant 0 : index
    %206 = vector.load %arg25[%c0_102, %c0_103] : memref<1x64xf32, #tpu.memory_space<vmem>>, vector<1x64xf32>
    %cst_104 = arith.constant 0.000000e+00 : f32
    %207 = vector.broadcast %cst_104 : f32 to vector<1x128xf32>
    %208 = vector.shape_cast %50 : vector<16x128xf32> to vector<8x2x128xf32>
    %209 = vector.extract_strided_slice %208 {offsets = [0, 0, 0], sizes = [8, 1, 128], strides = [1, 1, 1]} : vector<8x2x128xf32> to vector<8x1x128xf32>
    %210 = vector.shape_cast %209 : vector<8x1x128xf32> to vector<8x128xf32>
    %211 = vector.extract_strided_slice %208 {offsets = [0, 1, 0], sizes = [8, 1, 128], strides = [1, 1, 1]} : vector<8x2x128xf32> to vector<8x1x128xf32>
    %212 = vector.shape_cast %211 : vector<8x1x128xf32> to vector<8x128xf32>
    %213 = vector.extract_strided_slice %212 {offsets = [0, 0], sizes = [7, 128], strides = [1, 1]} : vector<8x128xf32> to vector<7x128xf32>
    %214 = tpu.concatenate %207, %213 in 0 : vector<1x128xf32>, vector<7x128xf32> -> vector<8x128xf32>
    %215 = vector.extract_strided_slice %205 {offsets = [0, 0, 0], sizes = [1, 128, 64], strides = [1, 1, 1]} : vector<3x128x64xf32> to vector<1x128x64xf32>
    %216 = vector.shape_cast %215 : vector<1x128x64xf32> to vector<128x64xf32>
    %cst_105 = arith.constant dense<0.000000e+00> : vector<8x64xf32>
    %217 = tpu.matmul %214, %216, %cst_105 {dimension_numbers = #tpu.dot_dimension_numbers<[1], [0], [0], [1], [0, 0, 1, 1], [], []>} : vector<8x128xf32>, vector<128x64xf32>, vector<8x64xf32> -> vector<8x64xf32>
    %218 = vector.extract_strided_slice %205 {offsets = [1, 0, 0], sizes = [1, 128, 64], strides = [1, 1, 1]} : vector<3x128x64xf32> to vector<1x128x64xf32>
    %219 = vector.shape_cast %218 : vector<1x128x64xf32> to vector<128x64xf32>
    %cst_106 = arith.constant dense<0.000000e+00> : vector<8x64xf32>
    %220 = tpu.matmul %210, %219, %cst_106 {dimension_numbers = #tpu.dot_dimension_numbers<[1], [0], [0], [1], [0, 0, 1, 1], [], []>} : vector<8x128xf32>, vector<128x64xf32>, vector<8x64xf32> -> vector<8x64xf32>
    %221 = arith.addf %217, %220 : vector<8x64xf32>
    %222 = vector.extract_strided_slice %205 {offsets = [2, 0, 0], sizes = [1, 128, 64], strides = [1, 1, 1]} : vector<3x128x64xf32> to vector<1x128x64xf32>
    %223 = vector.shape_cast %222 : vector<1x128x64xf32> to vector<128x64xf32>
    %cst_107 = arith.constant dense<0.000000e+00> : vector<8x64xf32>
    %224 = tpu.matmul %212, %223, %cst_107 {dimension_numbers = #tpu.dot_dimension_numbers<[1], [0], [0], [1], [0, 0, 1, 1], [], []>} : vector<8x128xf32>, vector<128x64xf32>, vector<8x64xf32> -> vector<8x64xf32>
    %225 = arith.addf %221, %224 : vector<8x64xf32>
    %226 = vector.broadcast %206 : vector<1x64xf32> to vector<8x64xf32>
    %227 = arith.addf %225, %226 : vector<8x64xf32>
    %cst_108 = arith.constant 0.000000e+00 : f32
    %228 = vector.broadcast %cst_108 : f32 to vector<8x64xf32>
    %229 = arith.maximumf %227, %228 : vector<8x64xf32>
    %c0_109 = arith.constant 0 : index
    %c0_110 = arith.constant 0 : index
    %c0_111 = arith.constant 0 : index
    %230 = vector.load %arg26[%c0_109, %c0_110, %c0_111] : memref<3x64x128xf32, #tpu.memory_space<vmem>>, vector<3x64x128xf32>
    %c0_112 = arith.constant 0 : index
    %c0_113 = arith.constant 0 : index
    %231 = vector.load %arg27[%c0_112, %c0_113] : memref<1x128xf32, #tpu.memory_space<vmem>>, vector<1x128xf32>
    %cst_114 = arith.constant 0.000000e+00 : f32
    %232 = vector.broadcast %cst_114 : f32 to vector<1x64xf32>
    %233 = vector.shape_cast %229 : vector<8x64xf32> to vector<4x2x64xf32>
    %234 = vector.extract_strided_slice %233 {offsets = [0, 0, 0], sizes = [4, 1, 64], strides = [1, 1, 1]} : vector<4x2x64xf32> to vector<4x1x64xf32>
    %235 = vector.shape_cast %234 : vector<4x1x64xf32> to vector<4x64xf32>
    %236 = vector.extract_strided_slice %233 {offsets = [0, 1, 0], sizes = [4, 1, 64], strides = [1, 1, 1]} : vector<4x2x64xf32> to vector<4x1x64xf32>
    %237 = vector.shape_cast %236 : vector<4x1x64xf32> to vector<4x64xf32>
    %238 = vector.extract_strided_slice %237 {offsets = [0, 0], sizes = [3, 64], strides = [1, 1]} : vector<4x64xf32> to vector<3x64xf32>
    %239 = tpu.concatenate %232, %238 in 0 : vector<1x64xf32>, vector<3x64xf32> -> vector<4x64xf32>
    %240 = vector.extract_strided_slice %230 {offsets = [0, 0, 0], sizes = [1, 64, 128], strides = [1, 1, 1]} : vector<3x64x128xf32> to vector<1x64x128xf32>
    %241 = vector.shape_cast %240 : vector<1x64x128xf32> to vector<64x128xf32>
    %cst_115 = arith.constant dense<0.000000e+00> : vector<4x128xf32>
    %242 = tpu.matmul %239, %241, %cst_115 {dimension_numbers = #tpu.dot_dimension_numbers<[1], [0], [0], [1], [0, 0, 1, 1], [], []>} : vector<4x64xf32>, vector<64x128xf32>, vector<4x128xf32> -> vector<4x128xf32>
    %243 = vector.extract_strided_slice %230 {offsets = [1, 0, 0], sizes = [1, 64, 128], strides = [1, 1, 1]} : vector<3x64x128xf32> to vector<1x64x128xf32>
    %244 = vector.shape_cast %243 : vector<1x64x128xf32> to vector<64x128xf32>
    %cst_116 = arith.constant dense<0.000000e+00> : vector<4x128xf32>
    %245 = tpu.matmul %235, %244, %cst_116 {dimension_numbers = #tpu.dot_dimension_numbers<[1], [0], [0], [1], [0, 0, 1, 1], [], []>} : vector<4x64xf32>, vector<64x128xf32>, vector<4x128xf32> -> vector<4x128xf32>
    %246 = arith.addf %242, %245 : vector<4x128xf32>
    %247 = vector.extract_strided_slice %230 {offsets = [2, 0, 0], sizes = [1, 64, 128], strides = [1, 1, 1]} : vector<3x64x128xf32> to vector<1x64x128xf32>
    %248 = vector.shape_cast %247 : vector<1x64x128xf32> to vector<64x128xf32>
    %cst_117 = arith.constant dense<0.000000e+00> : vector<4x128xf32>
    %249 = tpu.matmul %237, %248, %cst_117 {dimension_numbers = #tpu.dot_dimension_numbers<[1], [0], [0], [1], [0, 0, 1, 1], [], []>} : vector<4x64xf32>, vector<64x128xf32>, vector<4x128xf32> -> vector<4x128xf32>
    %250 = arith.addf %246, %249 : vector<4x128xf32>
    %251 = vector.broadcast %231 : vector<1x128xf32> to vector<4x128xf32>
    %252 = arith.addf %250, %251 : vector<4x128xf32>
    %c0_118 = arith.constant 0 : index
    %c0_119 = arith.constant 0 : index
    %c0_120 = arith.constant 0 : index
    %253 = vector.load %arg28[%c0_118, %c0_119, %c0_120] : memref<3x128x128xf32, #tpu.memory_space<vmem>>, vector<3x128x128xf32>
    %c0_121 = arith.constant 0 : index
    %c0_122 = arith.constant 0 : index
    %254 = vector.load %arg29[%c0_121, %c0_122] : memref<1x128xf32, #tpu.memory_space<vmem>>, vector<1x128xf32>
    %cst_123 = arith.constant 0.000000e+00 : f32
    %255 = vector.broadcast %cst_123 : f32 to vector<1x128xf32>
    %256 = vector.shape_cast %95 : vector<8x128xf32> to vector<4x2x128xf32>
    %257 = vector.extract_strided_slice %256 {offsets = [0, 0, 0], sizes = [4, 1, 128], strides = [1, 1, 1]} : vector<4x2x128xf32> to vector<4x1x128xf32>
    %258 = vector.shape_cast %257 : vector<4x1x128xf32> to vector<4x128xf32>
    %259 = vector.extract_strided_slice %256 {offsets = [0, 1, 0], sizes = [4, 1, 128], strides = [1, 1, 1]} : vector<4x2x128xf32> to vector<4x1x128xf32>
    %260 = vector.shape_cast %259 : vector<4x1x128xf32> to vector<4x128xf32>
    %261 = vector.extract_strided_slice %260 {offsets = [0, 0], sizes = [3, 128], strides = [1, 1]} : vector<4x128xf32> to vector<3x128xf32>
    %262 = tpu.concatenate %255, %261 in 0 : vector<1x128xf32>, vector<3x128xf32> -> vector<4x128xf32>
    %263 = vector.extract_strided_slice %253 {offsets = [0, 0, 0], sizes = [1, 128, 128], strides = [1, 1, 1]} : vector<3x128x128xf32> to vector<1x128x128xf32>
    %264 = vector.shape_cast %263 : vector<1x128x128xf32> to vector<128x128xf32>
    %cst_124 = arith.constant dense<0.000000e+00> : vector<4x128xf32>
    %265 = tpu.matmul %262, %264, %cst_124 {dimension_numbers = #tpu.dot_dimension_numbers<[1], [0], [0], [1], [0, 0, 1, 1], [], []>} : vector<4x128xf32>, vector<128x128xf32>, vector<4x128xf32> -> vector<4x128xf32>
    %266 = vector.extract_strided_slice %253 {offsets = [1, 0, 0], sizes = [1, 128, 128], strides = [1, 1, 1]} : vector<3x128x128xf32> to vector<1x128x128xf32>
    %267 = vector.shape_cast %266 : vector<1x128x128xf32> to vector<128x128xf32>
    %cst_125 = arith.constant dense<0.000000e+00> : vector<4x128xf32>
    %268 = tpu.matmul %258, %267, %cst_125 {dimension_numbers = #tpu.dot_dimension_numbers<[1], [0], [0], [1], [0, 0, 1, 1], [], []>} : vector<4x128xf32>, vector<128x128xf32>, vector<4x128xf32> -> vector<4x128xf32>
    %269 = arith.addf %265, %268 : vector<4x128xf32>
    %270 = vector.extract_strided_slice %253 {offsets = [2, 0, 0], sizes = [1, 128, 128], strides = [1, 1, 1]} : vector<3x128x128xf32> to vector<1x128x128xf32>
    %271 = vector.shape_cast %270 : vector<1x128x128xf32> to vector<128x128xf32>
    %cst_126 = arith.constant dense<0.000000e+00> : vector<4x128xf32>
    %272 = tpu.matmul %260, %271, %cst_126 {dimension_numbers = #tpu.dot_dimension_numbers<[1], [0], [0], [1], [0, 0, 1, 1], [], []>} : vector<4x128xf32>, vector<128x128xf32>, vector<4x128xf32> -> vector<4x128xf32>
    %273 = arith.addf %269, %272 : vector<4x128xf32>
    %274 = vector.broadcast %254 : vector<1x128xf32> to vector<4x128xf32>
    %275 = arith.addf %273, %274 : vector<4x128xf32>
    %276 = arith.addf %252, %275 : vector<4x128xf32>
    %277 = arith.addf %276, %140 : vector<4x128xf32>
    %cst_127 = arith.constant 0.000000e+00 : f32
    %278 = vector.broadcast %cst_127 : f32 to vector<4x128xf32>
    %279 = arith.maximumf %277, %278 : vector<4x128xf32>
    %c0_128 = arith.constant 0 : index
    %c0_129 = arith.constant 0 : index
    %c0_130 = arith.constant 0 : index
    %280 = vector.load %arg32[%c0_128, %c0_129, %c0_130] : memref<1x4x128xf32, #tpu.memory_space<vmem>>, vector<1x4x128xf32>
    %281 = vector.shape_cast %280 : vector<1x4x128xf32> to vector<4x128xf32>
    %282 = vector.shape_cast %279 : vector<4x128xf32> to vector<1x4x128xf32>
    tpu.vector_store %arg32[%c0_128, %c0_129, %c0_130], %282 {strides = array<i32>} : memref<1x4x128xf32, #tpu.memory_space<vmem>>, vector<1x4x128xf32>,
    return
  }
  func.func @transform_0(%arg0: i32) -> (i32, i32, i32) {
    %c0_i32 = arith.constant 0 : i32
    %c0_i32_0 = arith.constant 0 : i32
    %c0_i32_1 = arith.constant 0 : i32
    return %arg0, %c0_i32, %c0_i32_0 : i32, i32, i32
  }
  func.func @transform_1(%arg0: i32) -> (i32, i32, i32) {
    %c0_i32 = arith.constant 0 : i32
    %c0_i32_0 = arith.constant 0 : i32
    %c0_i32_1 = arith.constant 0 : i32
    return %arg0, %c0_i32, %c0_i32_0 : i32, i32, i32
  }
  func.func @transform_2(%arg0: i32) -> (i32, i32, i32) {
    %c0_i32 = arith.constant 0 : i32
    %c0_i32_0 = arith.constant 0 : i32
    %c0_i32_1 = arith.constant 0 : i32
    return %arg0, %c0_i32, %c0_i32_0 : i32, i32, i32
  }
  func.func @transform_3(%arg0: i32) -> (i32, i32, i32) {
    %c0_i32 = arith.constant 0 : i32
    %c0_i32_0 = arith.constant 0 : i32
    %c0_i32_1 = arith.constant 0 : i32
    %c0_i32_2 = arith.constant 0 : i32
    return %c0_i32, %c0_i32_0, %c0_i32_1 : i32, i32, i32
  }
  func.func @transform_4(%arg0: i32) -> (i32, i32) {
    %c0_i32 = arith.constant 0 : i32
    %c0_i32_0 = arith.constant 0 : i32
    %c0_i32_1 = arith.constant 0 : i32
    return %c0_i32, %c0_i32_0 : i32, i32
  }
  func.func @transform_5(%arg0: i32) -> (i32, i32, i32) {
    %c0_i32 = arith.constant 0 : i32
    %c0_i32_0 = arith.constant 0 : i32
    %c0_i32_1 = arith.constant 0 : i32
    %c0_i32_2 = arith.constant 0 : i32
    return %c0_i32, %c0_i32_0, %c0_i32_1 : i32, i32, i32
  }
  func.func @transform_6(%arg0: i32) -> (i32, i32) {
    %c0_i32 = arith.constant 0 : i32
    %c0_i32_0 = arith.constant 0 : i32
    %c0_i32_1 = arith.constant 0 : i32
    return %c0_i32, %c0_i32_0 : i32, i32
  }
  func.func @transform_7(%arg0: i32) -> (i32, i32, i32) {
    %c0_i32 = arith.constant 0 : i32
    %c0_i32_0 = arith.constant 0 : i32
    %c0_i32_1 = arith.constant 0 : i32
    %c0_i32_2 = arith.constant 0 : i32
    return %c0_i32, %c0_i32_0, %c0_i32_1 : i32, i32, i32
  }
  func.func @transform_8(%arg0: i32) -> (i32, i32) {
    %c0_i32 = arith.constant 0 : i32
    %c0_i32_0 = arith.constant 0 : i32
    %c0_i32_1 = arith.constant 0 : i32
    return %c0_i32, %c0_i32_0 : i32, i32
  }
  func.func @transform_9(%arg0: i32) -> (i32, i32, i32) {
    %c0_i32 = arith.constant 0 : i32
    %c0_i32_0 = arith.constant 0 : i32
    %c0_i32_1 = arith.constant 0 : i32
    %c0_i32_2 = arith.constant 0 : i32
    return %c0_i32, %c0_i32_0, %c0_i32_1 : i32, i32, i32
  }
  func.func @transform_10(%arg0: i32) -> (i32, i32) {
    %c0_i32 = arith.constant 0 : i32
    %c0_i32_0 = arith.constant 0 : i32
    %c0_i32_1 = arith.constant 0 : i32
    return %c0_i32, %c0_i32_0 : i32, i32
  }
  func.func @transform_11(%arg0: i32) -> (i32, i32, i32) {
    %c0_i32 = arith.constant 0 : i32
    %c0_i32_0 = arith.constant 0 : i32
    %c0_i32_1 = arith.constant 0 : i32
    %c0_i32_2 = arith.constant 0 : i32
    return %c0_i32, %c0_i32_0, %c0_i32_1 : i32, i32, i32
  }
  func.func @transform_12(%arg0: i32) -> (i32, i32) {
    %c0_i32 = arith.constant 0 : i32
    %c0_i32_0 = arith.constant 0 : i32
    %c0_i32_1 = arith.constant 0 : i32
    return %c0_i32, %c0_i32_0 : i32, i32
  }
  func.func @transform_13(%arg0: i32) -> (i32, i32, i32) {
    %c0_i32 = arith.constant 0 : i32
    %c0_i32_0 = arith.constant 0 : i32
    %c0_i32_1 = arith.constant 0 : i32
    %c0_i32_2 = arith.constant 0 : i32
    return %c0_i32, %c0_i32_0, %c0_i32_1 : i32, i32, i32
  }
  func.func @transform_14(%arg0: i32) -> (i32, i32) {
    %c0_i32 = arith.constant 0 : i32
    %c0_i32_0 = arith.constant 0 : i32
    %c0_i32_1 = arith.constant 0 : i32
    return %c0_i32, %c0_i32_0 : i32, i32
  }
  func.func @transform_15(%arg0: i32) -> (i32, i32) {
    %c0_i32 = arith.constant 0 : i32
    %c0_i32_0 = arith.constant 0 : i32
    %c0_i32_1 = arith.constant 0 : i32
    return %c0_i32, %c0_i32_0 : i32, i32
  }
  func.func @transform_16(%arg0: i32) -> (i32, i32) {
    %c0_i32 = arith.constant 0 : i32
    %c0_i32_0 = arith.constant 0 : i32
    %c0_i32_1 = arith.constant 0 : i32
    return %c0_i32, %c0_i32_0 : i32, i32
  }
  func.func @transform_17(%arg0: i32) -> (i32, i32) {
    %c0_i32 = arith.constant 0 : i32
    %c0_i32_0 = arith.constant 0 : i32
    %c0_i32_1 = arith.constant 0 : i32
    return %c0_i32, %c0_i32_0 : i32, i32
  }
  func.func @transform_18(%arg0: i32) -> (i32, i32) {
    %c0_i32 = arith.constant 0 : i32
    %c0_i32_0 = arith.constant 0 : i32
    %c0_i32_1 = arith.constant 0 : i32
    return %c0_i32, %c0_i32_0 : i32, i32
  }
  func.func @transform_19(%arg0: i32) -> (i32, i32, i32) {
    %c0_i32 = arith.constant 0 : i32
    %c0_i32_0 = arith.constant 0 : i32
    %c0_i32_1 = arith.constant 0 : i32
    %c0_i32_2 = arith.constant 0 : i32
    return %c0_i32, %c0_i32_0, %c0_i32_1 : i32, i32, i32
  }
  func.func @transform_20(%arg0: i32) -> (i32, i32) {
    %c0_i32 = arith.constant 0 : i32
    %c0_i32_0 = arith.constant 0 : i32
    %c0_i32_1 = arith.constant 0 : i32
    return %c0_i32, %c0_i32_0 : i32, i32
  }
  func.func @transform_21(%arg0: i32) -> (i32, i32) {
    %c0_i32 = arith.constant 0 : i32
    %c0_i32_0 = arith.constant 0 : i32
    %c0_i32_1 = arith.constant 0 : i32
    return %c0_i32, %c0_i32_0 : i32, i32
  }
  func.func @transform_22(%arg0: i32) -> (i32, i32) {
    %c0_i32 = arith.constant 0 : i32
    %c0_i32_0 = arith.constant 0 : i32
    %c0_i32_1 = arith.constant 0 : i32
    return %c0_i32, %c0_i32_0 : i32, i32
  }
  func.func @transform_23(%arg0: i32) -> (i32, i32, i32) {
    %c0_i32 = arith.constant 0 : i32
    %c0_i32_0 = arith.constant 0 : i32
    %c0_i32_1 = arith.constant 0 : i32
    %c0_i32_2 = arith.constant 0 : i32
    return %c0_i32, %c0_i32_0, %c0_i32_1 : i32, i32, i32
  }
  func.func @transform_24(%arg0: i32) -> (i32, i32) {
    %c0_i32 = arith.constant 0 : i32
    %c0_i32_0 = arith.constant 0 : i32
    %c0_i32_1 = arith.constant 0 : i32
    return %c0_i32, %c0_i32_0 : i32, i32
  }
  func.func @transform_25(%arg0: i32) -> (i32, i32, i32) {
    %c0_i32 = arith.constant 0 : i32
    %c0_i32_0 = arith.constant 0 : i32
    %c0_i32_1 = arith.constant 0 : i32
    %c0_i32_2 = arith.constant 0 : i32
    return %c0_i32, %c0_i32_0, %c0_i32_1 : i32, i32, i32
  }
  func.func @transform_26(%arg0: i32) -> (i32, i32) {
    %c0_i32 = arith.constant 0 : i32
    %c0_i32_0 = arith.constant 0 : i32
    %c0_i32_1 = arith.constant 0 : i32
    return %c0_i32, %c0_i32_0 : i32, i32
  }
  func.func @transform_27(%arg0: i32) -> (i32, i32, i32) {
    %c0_i32 = arith.constant 0 : i32
    %c0_i32_0 = arith.constant 0 : i32
    %c0_i32_1 = arith.constant 0 : i32
    %c0_i32_2 = arith.constant 0 : i32
    return %c0_i32, %c0_i32_0, %c0_i32_1 : i32, i32, i32
  }
  func.func @transform_28(%arg0: i32) -> (i32, i32) {
    %c0_i32 = arith.constant 0 : i32
    %c0_i32_0 = arith.constant 0 : i32
    %c0_i32_1 = arith.constant 0 : i32
    return %c0_i32, %c0_i32_0 : i32, i32
  }
  func.func @transform_29(%arg0: i32) -> (i32, i32, i32) {
    %c0_i32 = arith.constant 0 : i32
    %c0_i32_0 = arith.constant 0 : i32
    %c0_i32_1 = arith.constant 0 : i32
    return %arg0, %c0_i32, %c0_i32_0 : i32, i32, i32
  }
  func.func @transform_30(%arg0: i32) -> (i32, i32, i32) {
    %c0_i32 = arith.constant 0 : i32
    %c0_i32_0 = arith.constant 0 : i32
    %c0_i32_1 = arith.constant 0 : i32
    return %arg0, %c0_i32, %c0_i32_0 : i32, i32, i32
  }
  func.func @transform_31(%arg0: i32) -> (i32, i32, i32) {
    %c0_i32 = arith.constant 0 : i32
    %c0_i32_0 = arith.constant 0 : i32
    %c0_i32_1 = arith.constant 0 : i32
    return %arg0, %c0_i32, %c0_i32_0 : i32, i32, i32
  }
}

</mosaic_0001>

<llo_original>
// kernel: tpu_custom_call.1
$region0: #{tpu_custom_call.1}
  #allocation0 [shape = 'u32[]', space=smem, size = 0x4, offset = 0x4, fixed_abs, tag = 'smem constant byte address 0x4 - core index']
  #allocation1 [shape = 'u32[144,128]{1,0:T(1,128)}', space=vmem, size = 0x12000, scoped, tag = 'internal scratch']
  %s0 = inlined_call_operand.smem [shape: u32[32], index: -1, kind: input, shape index: {}]
  %s1 = sld [smem:[%s0]]
  %s2 = scalar_lea.smem %s0, 1
  %s3 = sld [smem:[%s2]]
  %s4 = scalar_lea.smem %s0, 2
  %s5 = sld [smem:[%s4]]
  %s6 = scalar_lea.smem %s0, 3
  %s7 = sld [smem:[%s6]]
  %s8 = scalar_lea.smem %s0, 4
  %s9 = sld [smem:[%s8]]
  %s10 = scalar_lea.smem %s0, 5
  %s11 = sld [smem:[%s10]]
  %s12 = scalar_lea.smem %s0, 6
  %s13 = sld [smem:[%s12]]
  %s14 = scalar_lea.smem %s0, 7
  %s15 = sld [smem:[%s14]]
  %s16 = scalar_lea.smem %s0, 8
  %s17 = sld [smem:[%s16]]
  %s18 = scalar_lea.smem %s0, 9
  %s19 = sld [smem:[%s18]]
  %s20 = scalar_lea.smem %s0, 10
  %s21 = sld [smem:[%s20]]
  %s22 = scalar_lea.smem %s0, 11
  %s23 = sld [smem:[%s22]]
  %s24 = scalar_lea.smem %s0, 12
  %s25 = sld [smem:[%s24]]
  %s26 = scalar_lea.smem %s0, 13
  %s27 = sld [smem:[%s26]]
  %s28 = scalar_lea.smem %s0, 14
  %s29 = sld [smem:[%s28]]
  %s30 = scalar_lea.smem %s0, 15
  %s31 = sld [smem:[%s30]]
  %s32 = scalar_lea.smem %s0, 16
  %s33 = sld [smem:[%s32]]
  %s34 = scalar_lea.smem %s0, 17
  %s35 = sld [smem:[%s34]]
  %s36 = scalar_lea.smem %s0, 18
  %s37 = sld [smem:[%s36]]
  %s38 = scalar_lea.smem %s0, 19
  %s39 = sld [smem:[%s38]]
  %s40 = scalar_lea.smem %s0, 20
  %s41 = sld [smem:[%s40]]
  %s42 = scalar_lea.smem %s0, 21
  %s43 = sld [smem:[%s42]]
  %s44 = scalar_lea.smem %s0, 22
  %s45 = sld [smem:[%s44]]
  %s46 = scalar_lea.smem %s0, 23
  %s47 = sld [smem:[%s46]]
  %s48 = scalar_lea.smem %s0, 24
  %s49 = sld [smem:[%s48]]
  %s50 = scalar_lea.smem %s0, 25
  %s51 = sld [smem:[%s50]]
  %s52 = scalar_lea.smem %s0, 26
  %s53 = sld [smem:[%s52]]
  %s54 = scalar_lea.smem %s0, 27
  %s55 = sld [smem:[%s54]]
  %s56 = scalar_lea.smem %s0, 28
  %s57 = sld [smem:[%s56]]
  %s58 = scalar_lea.smem %s0, 29
  %s59 = sld [smem:[%s58]]
  %s60 = scalar_lea.smem %s0, 30
  %s61 = sld [smem:[%s60]]
  %s62 = scalar_lea.smem %s0, 31
  %s63 = sld [smem:[%s62]]
  %64 = xla_tuple %s59, %s61, %s63
  %s65 = sld [smem:[#allocation0]]
  $region217: #{tpu_custom_call.1} parent=0
    _
  %s67 = ssub.s32 1, %s65
  %s68 = scalar_select 0, %s67, %s65
  $region1: #{tpu_custom_call.1} parent=0
    #allocation2 [shape = 'u8[16384]{0}', space=vmem, size = 0x4000, scoped, tag = 'input window, operand 0']
    #allocation3 [shape = 's32[2]{0}', space=sflag, size = 0x8, scoped, tag = 'scoped memory for tpu_custom_call.1']
    #allocation4 [shape = 's32[2]{0}', space=sflag, size = 0x8, scoped, tag = 'scoped memory for tpu_custom_call.1']
    #allocation5 [shape = 'u8[8192]{0}', space=vmem, size = 0x2000, scoped, tag = 'input window, operand 1']
    #allocation6 [shape = 's32[2]{0}', space=sflag, size = 0x8, scoped, tag = 'scoped memory for tpu_custom_call.1']
    #allocation7 [shape = 'u8[4096]{0}', space=vmem, size = 0x1000, scoped, tag = 'input window, operand 2']
    #allocation8 [shape = 'u8[196608]{0}', space=vmem, size = 0x30000, scoped, tag = 'input window, operand 5, single buffered']
    #allocation9 [shape = 's32[1]{0}', space=sflag, size = 0x4, scoped, tag = 'scoped memory for tpu_custom_call.1']
    #allocation10 [shape = 'u8[196608]{0}', space=vmem, size = 0x30000, scoped, tag = 'input window, operand 7, single buffered']
    #allocation11 [shape = 'u8[196608]{0}', space=vmem, size = 0x30000, scoped, tag = 'input window, operand 9, single buffered']
    #allocation12 [shape = 's32[1]{0}', space=sflag, size = 0x4, scoped, tag = 'scoped memory for tpu_custom_call.1']
    #allocation13 [shape = 'u8[196608]{0}', space=vmem, size = 0x30000, scoped, tag = 'input window, operand 11, single buffered']
    #allocation14 [shape = 'u8[196608]{0}', space=vmem, size = 0x30000, scoped, tag = 'input window, operand 13, single buffered']
    #allocation15 [shape = 's32[1]{0}', space=sflag, size = 0x4, scoped, tag = 'scoped memory for tpu_custom_call.1']
    #allocation16 [shape = 'u8[65536]{0}', space=vmem, size = 0x10000, scoped, tag = 'input window, operand 15, single buffered']
    #allocation17 [shape = 'u8[65536]{0}', space=vmem, size = 0x10000, scoped, tag = 'input window, operand 17, single buffered']
    #allocation18 [shape = 's32[1]{0}', space=sflag, size = 0x4, scoped, tag = 'scoped memory for tpu_custom_call.1']
    #allocation19 [shape = 'u8[196608]{0}', space=vmem, size = 0x30000, scoped, tag = 'input window, operand 19, single buffered']
    #allocation20 [shape = 'u8[65536]{0}', space=vmem, size = 0x10000, scoped, tag = 'input window, operand 21, single buffered']
    #allocation21 [shape = 's32[1]{0}', space=sflag, size = 0x4, scoped, tag = 'scoped memory for tpu_custom_call.1']
    #allocation22 [shape = 'u8[196608]{0}', space=vmem, size = 0x30000, scoped, tag = 'input window, operand 27, single buffered']
    #allocation23 [shape = 'u8[16384]{0}', space=vmem, size = 0x4000, scoped, tag = 'output window, operand 0']
    #allocation24 [shape = 'u8[8192]{0}', space=vmem, size = 0x2000, scoped, tag = 'output window, operand 1']
    #allocation25 [shape = 's32[2]{0}', space=sflag, size = 0x8, scoped, tag = 'scoped memory for tpu_custom_call.1']
    #allocation26 [shape = 'u8[4096]{0}', space=vmem, size = 0x1000, scoped, tag = 'output window, operand 2']
    %69 = vsyncpa [#allocation3], 0
    %s70 = scalar_lea.sflag [#allocation3], 1
    %71 = vsyncpa %s70, 0
    %72 = vsyncpa [#allocation6], 0
    %s73 = scalar_lea.sflag [#allocation6], 1
    %74 = vsyncpa %s73, 0
    %75 = vsyncpa [#allocation9], 0
    %76 = vsyncpa [#allocation12], 0
    %77 = vsyncpa [#allocation15], 0
    %78 = vsyncpa [#allocation18], 0
    %79 = vsyncpa [#allocation21], 0
    %80 = vsyncpa [#allocation4], 0
    %s81 = scalar_lea.sflag [#allocation4], 1
    %82 = vsyncpa %s81, 0
    %83 = vsyncpa [#allocation25], 0
    %s84 = scalar_lea.sflag [#allocation25], 1
    %85 = vsyncpa %s84, 0
    loop: start=0, step=1, limit=4
    $region2: #{tpu_custom_call.1} parent=1 // loop_pre_header
      _
    $region3: #{tpu_custom_call.1} parent=1 // loop_header
      %s87 = sphi 0, %s91
      %p88 = scmp.ge.s32.totalorder %s87, 4
      %s97 = sphi 0, %s99
      %s100 = sphi 0, %s97
      %s101 = sphi 0, %s100
      %s117 = sphi 0, %s101
      %s123 = sphi 0, %s125
      %s126 = sphi 0, %s123
      %s127 = sphi 0, %s126
      %s143 = sphi 0, %s127
      %s149 = sphi 0, %s151
      %s152 = sphi 0, %s149
      %s153 = sphi 0, %s152
      %s169 = sphi 0, %s153
      %s173 = sphi 0, %s173
      %s175 = sphi 0, %s173
      %s176 = sphi 0, %s175
      %s190 = sphi 0, %s176
      %s194 = sphi 0, %s194
      %s196 = sphi 0, %s194
      %s197 = sphi 0, %s196
      %s211 = sphi 0, %s197
      %s215 = sphi 0, %s215
      %s217 = sphi 0, %s215
      %s218 = sphi 0, %s217
      %s232 = sphi 0, %s218
      %s236 = sphi 0, %s236
      %s238 = sphi 0, %s236
      %s239 = sphi 0, %s238
      %s253 = sphi 0, %s239
      %s257 = sphi 0, %s257
      %s259 = sphi 0, %s257
      %s260 = sphi 0, %s259
      %s274 = sphi 0, %s260
      %s278 = sphi 0, %s278
      %s280 = sphi 0, %s278
      %s281 = sphi 0, %s280
      %s295 = sphi 0, %s281
      %s299 = sphi 0, %s299
      %s301 = sphi 0, %s299
      %s302 = sphi 0, %s301
      %s316 = sphi 0, %s302
      %s320 = sphi 0, %s320
      %s322 = sphi 0, %s320
      %s323 = sphi 0, %s322
      %s337 = sphi 0, %s323
      %s341 = sphi 0, %s341
      %s343 = sphi 0, %s341
      %s344 = sphi 0, %s343
      %s358 = sphi 0, %s344
      %s362 = sphi 0, %s362
      %s364 = sphi 0, %s362
      %s365 = sphi 0, %s364
      %s379 = sphi 0, %s365
      %s383 = sphi 0, %s383
      %s385 = sphi 0, %s383
      %s386 = sphi 0, %s385
      %s400 = sphi 0, %s386
      %s404 = sphi 0, %s404
      %s406 = sphi 0, %s404
      %s407 = sphi 0, %s406
      %s421 = sphi 0, %s407
      %s425 = sphi 0, %s425
      %s427 = sphi 0, %s425
      %s428 = sphi 0, %s427
      %s442 = sphi 0, %s428
      %s446 = sphi 0, %s446
      %s448 = sphi 0, %s446
      %s449 = sphi 0, %s448
      %s463 = sphi 0, %s449
      %s467 = sphi 0, %s467
      %s469 = sphi 0, %s467
      %s470 = sphi 0, %s469
      %s484 = sphi 0, %s470
      %s488 = sphi 0, %s488
      %s490 = sphi 0, %s488
      %s491 = sphi 0, %s490
      %s505 = sphi 0, %s491
      %s509 = sphi 0, %s509
      %s511 = sphi 0, %s509
      %s512 = sphi 0, %s511
      %s526 = sphi 0, %s512
      %s530 = sphi 0, %s530
      %s532 = sphi 0, %s530
      %s533 = sphi 0, %s532
      %s547 = sphi 0, %s533
      %s551 = sphi 0, %s551
      %s553 = sphi 0, %s551
      %s554 = sphi 0, %s553
      %s568 = sphi 0, %s554
      %s572 = sphi 0, %s572
      %s574 = sphi 0, %s572
      %s575 = sphi 0, %s574
      %s589 = sphi 0, %s575
      %s593 = sphi 0, %s593
      %s595 = sphi 0, %s593
      %s596 = sphi 0, %s595
      %s610 = sphi 0, %s596
      %s614 = sphi 0, %s614
      %s616 = sphi 0, %s614
      %s617 = sphi 0, %s616
      %s631 = sphi 0, %s617
      %s635 = sphi 0, %s635
      %s637 = sphi 0, %s635
      %s638 = sphi 0, %s637
      %s652 = sphi 0, %s638
      %s656 = sphi 0, %s656
      %s658 = sphi 0, %s656
      %s659 = sphi 0, %s658
      %s673 = sphi 0, %s659
      %s677 = sphi 0, %s677
      %s679 = sphi 0, %s677
      %s680 = sphi 0, %s679
      %s694 = sphi 0, %s680
      %s698 = sphi 0, %s698
      %s700 = sphi 0, %s698
      %s701 = sphi 0, %s700
      %s715 = sphi 0, %s701
      %s721 = sphi 0, %s723
      %s724 = sphi 0, %s721
      %s725 = sphi 0, %s724
      %s741 = sphi 0, %s725
      %s747 = sphi 0, %s749
      %s750 = sphi 0, %s747
      %s751 = sphi 0, %s750
      %s767 = sphi 0, %s751
      %s773 = sphi 0, %s775
      %s776 = sphi 0, %s773
      %s777 = sphi 0, %s776
      %s793 = sphi 0, %s777
    $region4: #{tpu_custom_call.1} parent=1 // loop_header_branch
      %90 = sbr.rel (%p88) target = $region8
    $region5: #{tpu_custom_call.1} parent=1 // loop_body
      %s92 = ssub.s32 %s87, 1
      %s93 = ssub.s32 %s87, 2
      %s94 = sadd.s32 %s87, 1
      %s95 = ssub.s32 %s87, %s94
      %p96 = scmp.eq.s32.totalorder %s95, 0
      %s98 = sadd.s32 %s97, 1
      %s99 = scalar_select %p96, %s97, %s98
      %p102 = pneg %p96
      %p103 = scmp.eq.s32.totalorder %s87, 1
      %p104 = por %p102, %p103
      %p105 = scmp.ne.s32.totalorder %s97, %s100
      %p106 = scmp.eq.s32.totalorder %s87, 0
      %p107 = por %p105, %p106
      %p108 = scmp.ne.s32.totalorder %s97, %s100
      %p109 = scmp.eq.s32.totalorder %s92, 1
      %p110 = por %p108, %p109
      %p111 = scmp.ne.s32.totalorder %s100, %s101
      %p112 = scmp.eq.s32.totalorder %s92, 0
      %p113 = por %p111, %p112
      %p114 = scmp.ne.s32.totalorder %s100, %s101
      %p115 = scmp.eq.s32.totalorder %s93, 1
      %p116 = por %p114, %p115
      %p118 = scmp.ne.s32.totalorder %s101, %s117
      %p119 = scmp.eq.s32.totalorder %s93, 0
      %p120 = por %p118, %p119
      %s121 = ssub.s32 %s87, %s94
      %p122 = scmp.eq.s32.totalorder %s121, 0
      %s124 = sadd.s32 %s123, 1
      %s125 = scalar_select %p122, %s123, %s124
      %p128 = pneg %p122
      %p129 = scmp.eq.s32.totalorder %s87, 1
      %p130 = por %p128, %p129
      %p131 = scmp.ne.s32.totalorder %s123, %s126
      %p132 = scmp.eq.s32.totalorder %s87, 0
      %p133 = por %p131, %p132
      %p134 = scmp.ne.s32.totalorder %s123, %s126
      %p135 = scmp.eq.s32.totalorder %s92, 1
      %p136 = por %p134, %p135
      %p137 = scmp.ne.s32.totalorder %s126, %s127
      %p138 = scmp.eq.s32.totalorder %s92, 0
      %p139 = por %p137, %p138
      %p140 = scmp.ne.s32.totalorder %s126, %s127
      %p141 = scmp.eq.s32.totalorder %s93, 1
      %p142 = por %p140, %p141
      %p144 = scmp.ne.s32.totalorder %s127, %s143
      %p145 = scmp.eq.s32.totalorder %s93, 0
      %p146 = por %p144, %p145
      %s147 = ssub.s32 %s87, %s94
      %p148 = scmp.eq.s32.totalorder %s147, 0
      %s150 = sadd.s32 %s149, 1
      %s151 = scalar_select %p148, %s149, %s150
      %p154 = pneg %p148
      %p155 = scmp.eq.s32.totalorder %s87, 1
      %p156 = por %p154, %p155
      %p157 = scmp.ne.s32.totalorder %s149, %s152
      %p158 = scmp.eq.s32.totalorder %s87, 0
      %p159 = por %p157, %p158
      %p160 = scmp.ne.s32.totalorder %s149, %s152
      %p161 = scmp.eq.s32.totalorder %s92, 1
      %p162 = por %p160, %p161
      %p163 = scmp.ne.s32.totalorder %s152, %s153
      %p164 = scmp.eq.s32.totalorder %s92, 0
      %p165 = por %p163, %p164
      %p166 = scmp.ne.s32.totalorder %s152, %s153
      %p167 = scmp.eq.s32.totalorder %s93, 1
      %p168 = por %p166, %p167
      %p170 = scmp.ne.s32.totalorder %s153, %s169
      %p171 = scmp.eq.s32.totalorder %s93, 0
      %p172 = por %p170, %p171
      %s174 = sadd.s32 %s173, 1
      %p177 = scmp.eq.s32.totalorder %s87, 1
      %p178 = scmp.ne.s32.totalorder %s173, %s175
      %p179 = scmp.eq.s32.totalorder %s87, 0
      %p180 = por %p178, %p179
      %p181 = scmp.ne.s32.totalorder %s173, %s175
      %p182 = scmp.eq.s32.totalorder %s92, 1
      %p183 = por %p181, %p182
      %p184 = scmp.ne.s32.totalorder %s175, %s176
      %p185 = scmp.eq.s32.totalorder %s92, 0
      %p186 = por %p184, %p185
      %p187 = scmp.ne.s32.totalorder %s175, %s176
      %p188 = scmp.eq.s32.totalorder %s93, 1
      %p189 = por %p187, %p188
      %p191 = scmp.ne.s32.totalorder %s176, %s190
      %p192 = scmp.eq.s32.totalorder %s93, 0
      %p193 = por %p191, %p192
      %s195 = sadd.s32 %s194, 1
      %p198 = scmp.eq.s32.totalorder %s87, 1
      %p199 = scmp.ne.s32.totalorder %s194, %s196
      %p200 = scmp.eq.s32.totalorder %s87, 0
      %p201 = por %p199, %p200
      %p202 = scmp.ne.s32.totalorder %s194, %s196
      %p203 = scmp.eq.s32.totalorder %s92, 1
      %p204 = por %p202, %p203
      %p205 = scmp.ne.s32.totalorder %s196, %s197
      %p206 = scmp.eq.s32.totalorder %s92, 0
      %p207 = por %p205, %p206
      %p208 = scmp.ne.s32.totalorder %s196, %s197
      %p209 = scmp.eq.s32.totalorder %s93, 1
      %p210 = por %p208, %p209
      %p212 = scmp.ne.s32.totalorder %s197, %s211
      %p213 = scmp.eq.s32.totalorder %s93, 0
      %p214 = por %p212, %p213
      %s216 = sadd.s32 %s215, 1
      %p219 = scmp.eq.s32.totalorder %s87, 1
      %p220 = scmp.ne.s32.totalorder %s215, %s217
      %p221 = scmp.eq.s32.totalorder %s87, 0
      %p222 = por %p220, %p221
      %p223 = scmp.ne.s32.totalorder %s215, %s217
      %p224 = scmp.eq.s32.totalorder %s92, 1
      %p225 = por %p223, %p224
      %p226 = scmp.ne.s32.totalorder %s217, %s218
      %p227 = scmp.eq.s32.totalorder %s92, 0
      %p228 = por %p226, %p227
      %p229 = scmp.ne.s32.totalorder %s217, %s218
      %p230 = scmp.eq.s32.totalorder %s93, 1
      %p231 = por %p229, %p230
      %p233 = scmp.ne.s32.totalorder %s218, %s232
      %p234 = scmp.eq.s32.totalorder %s93, 0
      %p235 = por %p233, %p234
      %s237 = sadd.s32 %s236, 1
      %p240 = scmp.eq.s32.totalorder %s87, 1
      %p241 = scmp.ne.s32.totalorder %s236, %s238
      %p242 = scmp.eq.s32.totalorder %s87, 0
      %p243 = por %p241, %p242
      %p244 = scmp.ne.s32.totalorder %s236, %s238
      %p245 = scmp.eq.s32.totalorder %s92, 1
      %p246 = por %p244, %p245
      %p247 = scmp.ne.s32.totalorder %s238, %s239
      %p248 = scmp.eq.s32.totalorder %s92, 0
      %p249 = por %p247, %p248
      %p250 = scmp.ne.s32.totalorder %s238, %s239
      %p251 = scmp.eq.s32.totalorder %s93, 1
      %p252 = por %p250, %p251
      %p254 = scmp.ne.s32.totalorder %s239, %s253
      %p255 = scmp.eq.s32.totalorder %s93, 0
      %p256 = por %p254, %p255
      %s258 = sadd.s32 %s257, 1
      %p261 = scmp.eq.s32.totalorder %s87, 1
      %p262 = scmp.ne.s32.totalorder %s257, %s259
      %p263 = scmp.eq.s32.totalorder %s87, 0
      %p264 = por %p262, %p263
      %p265 = scmp.ne.s32.totalorder %s257, %s259
      %p266 = scmp.eq.s32.totalorder %s92, 1
      %p267 = por %p265, %p266
      %p268 = scmp.ne.s32.totalorder %s259, %s260
      %p269 = scmp.eq.s32.totalorder %s92, 0
      %p270 = por %p268, %p269
      %p271 = scmp.ne.s32.totalorder %s259, %s260
      %p272 = scmp.eq.s32.totalorder %s93, 1
      %p273 = por %p271, %p272
      %p275 = scmp.ne.s32.totalorder %s260, %s274
      %p276 = scmp.eq.s32.totalorder %s93, 0
      %p277 = por %p275, %p276
      %s279 = sadd.s32 %s278, 1
      %p282 = scmp.eq.s32.totalorder %s87, 1
      %p283 = scmp.ne.s32.totalorder %s278, %s280
      %p284 = scmp.eq.s32.totalorder %s87, 0
      %p285 = por %p283, %p284
      %p286 = scmp.ne.s32.totalorder %s278, %s280
      %p287 = scmp.eq.s32.totalorder %s92, 1
      %p288 = por %p286, %p287
      %p289 = scmp.ne.s32.totalorder %s280, %s281
      %p290 = scmp.eq.s32.totalorder %s92, 0
      %p291 = por %p289, %p290
      %p292 = scmp.ne.s32.totalorder %s280, %s281
      %p293 = scmp.eq.s32.totalorder %s93, 1
      %p294 = por %p292, %p293
      %p296 = scmp.ne.s32.totalorder %s281, %s295
      %p297 = scmp.eq.s32.totalorder %s93, 0
      %p298 = por %p296, %p297
      %s300 = sadd.s32 %s299, 1
      %p303 = scmp.eq.s32.totalorder %s87, 1
      %p304 = scmp.ne.s32.totalorder %s299, %s301
      %p305 = scmp.eq.s32.totalorder %s87, 0
      %p306 = por %p304, %p305
      %p307 = scmp.ne.s32.totalorder %s299, %s301
      %p308 = scmp.eq.s32.totalorder %s92, 1
      %p309 = por %p307, %p308
      %p310 = scmp.ne.s32.totalorder %s301, %s302
      %p311 = scmp.eq.s32.totalorder %s92, 0
      %p312 = por %p310, %p311
      %p313 = scmp.ne.s32.totalorder %s301, %s302
      %p314 = scmp.eq.s32.totalorder %s93, 1
      %p315 = por %p313, %p314
      %p317 = scmp.ne.s32.totalorder %s302, %s316
      %p318 = scmp.eq.s32.totalorder %s93, 0
      %p319 = por %p317, %p318
      %s321 = sadd.s32 %s320, 1
      %p324 = scmp.eq.s32.totalorder %s87, 1
      %p325 = scmp.ne.s32.totalorder %s320, %s322
      %p326 = scmp.eq.s32.totalorder %s87, 0
      %p327 = por %p325, %p326
      %p328 = scmp.ne.s32.totalorder %s320, %s322
      %p329 = scmp.eq.s32.totalorder %s92, 1
      %p330 = por %p328, %p329
      %p331 = scmp.ne.s32.totalorder %s322, %s323
      %p332 = scmp.eq.s32.totalorder %s92, 0
      %p333 = por %p331, %p332
      %p334 = scmp.ne.s32.totalorder %s322, %s323
      %p335 = scmp.eq.s32.totalorder %s93, 1
      %p336 = por %p334, %p335
      %p338 = scmp.ne.s32.totalorder %s323, %s337
      %p339 = scmp.eq.s32.totalorder %s93, 0
      %p340 = por %p338, %p339
      %s342 = sadd.s32 %s341, 1
      %p345 = scmp.eq.s32.totalorder %s87, 1
      %p346 = scmp.ne.s32.totalorder %s341, %s343
      %p347 = scmp.eq.s32.totalorder %s87, 0
      %p348 = por %p346, %p347
      %p349 = scmp.ne.s32.totalorder %s341, %s343
      %p350 = scmp.eq.s32.totalorder %s92, 1
      %p351 = por %p349, %p350
      %p352 = scmp.ne.s32.totalorder %s343, %s344
      %p353 = scmp.eq.s32.totalorder %s92, 0
      %p354 = por %p352, %p353
      %p355 = scmp.ne.s32.totalorder %s343, %s344
      %p356 = scmp.eq.s32.totalorder %s93, 1
      %p357 = por %p355, %p356
      %p359 = scmp.ne.s32.totalorder %s344, %s358
      %p360 = scmp.eq.s32.totalorder %s93, 0
      %p361 = por %p359, %p360
      %s363 = sadd.s32 %s362, 1
      %p366 = scmp.eq.s32.totalorder %s87, 1
      %p367 = scmp.ne.s32.totalorder %s362, %s364
      %p368 = scmp.eq.s32.totalorder %s87, 0
      %p369 = por %p367, %p368
      %p370 = scmp.ne.s32.totalorder %s362, %s364
      %p371 = scmp.eq.s32.totalorder %s92, 1
      %p372 = por %p370, %p371
      %p373 = scmp.ne.s32.totalorder %s364, %s365
      %p374 = scmp.eq.s32.totalorder %s92, 0
      %p375 = por %p373, %p374
      %p376 = scmp.ne.s32.totalorder %s364, %s365
      %p377 = scmp.eq.s32.totalorder %s93, 1
      %p378 = por %p376, %p377
      %p380 = scmp.ne.s32.totalorder %s365, %s379
      %p381 = scmp.eq.s32.totalorder %s93, 0
      %p382 = por %p380, %p381
      %s384 = sadd.s32 %s383, 1
      %p387 = scmp.eq.s32.totalorder %s87, 1
      %p388 = scmp.ne.s32.totalorder %s383, %s385
      %p389 = scmp.eq.s32.totalorder %s87, 0
      %p390 = por %p388, %p389
      %p391 = scmp.ne.s32.totalorder %s383, %s385
      %p392 = scmp.eq.s32.totalorder %s92, 1
      %p393 = por %p391, %p392
      %p394 = scmp.ne.s32.totalorder %s385, %s386
      %p395 = scmp.eq.s32.totalorder %s92, 0
      %p396 = por %p394, %p395
      %p397 = scmp.ne.s32.totalorder %s385, %s386
      %p398 = scmp.eq.s32.totalorder %s93, 1
      %p399 = por %p397, %p398
      %p401 = scmp.ne.s32.totalorder %s386, %s400
      %p402 = scmp.eq.s32.totalorder %s93, 0
      %p403 = por %p401, %p402
      %s405 = sadd.s32 %s404, 1
      %p408 = scmp.eq.s32.totalorder %s87, 1
      %p409 = scmp.ne.s32.totalorder %s404, %s406
      %p410 = scmp.eq.s32.totalorder %s87, 0
      %p411 = por %p409, %p410
      %p412 = scmp.ne.s32.totalorder %s404, %s406
      %p413 = scmp.eq.s32.totalorder %s92, 1
      %p414 = por %p412, %p413
      %p415 = scmp.ne.s32.totalorder %s406, %s407
      %p416 = scmp.eq.s32.totalorder %s92, 0
      %p417 = por %p415, %p416
      %p418 = scmp.ne.s32.totalorder %s406, %s407
      %p419 = scmp.eq.s32.totalorder %s93, 1
      %p420 = por %p418, %p419
      %p422 = scmp.ne.s32.totalorder %s407, %s421
      %p423 = scmp.eq.s32.totalorder %s93, 0
      %p424 = por %p422, %p423
      %s426 = sadd.s32 %s425, 1
      %p429 = scmp.eq.s32.totalorder %s87, 1
      %p430 = scmp.ne.s32.totalorder %s425, %s427
      %p431 = scmp.eq.s32.totalorder %s87, 0
      %p432 = por %p430, %p431
      %p433 = scmp.ne.s32.totalorder %s425, %s427
      %p434 = scmp.eq.s32.totalorder %s92, 1
      %p435 = por %p433, %p434
      %p436 = scmp.ne.s32.totalorder %s427, %s428
      %p437 = scmp.eq.s32.totalorder %s92, 0
      %p438 = por %p436, %p437
      %p439 = scmp.ne.s32.totalorder %s427, %s428
      %p440 = scmp.eq.s32.totalorder %s93, 1
      %p441 = por %p439, %p440
      %p443 = scmp.ne.s32.totalorder %s428, %s442
      %p444 = scmp.eq.s32.totalorder %s93, 0
      %p445 = por %p443, %p444
      %s447 = sadd.s32 %s446, 1
      %p450 = scmp.eq.s32.totalorder %s87, 1
      %p451 = scmp.ne.s32.totalorder %s446, %s448
      %p452 = scmp.eq.s32.totalorder %s87, 0
      %p453 = por %p451, %p452
      %p454 = scmp.ne.s32.totalorder %s446, %s448
      %p455 = scmp.eq.s32.totalorder %s92, 1
      %p456 = por %p454, %p455
      %p457 = scmp.ne.s32.totalorder %s448, %s449
      %p458 = scmp.eq.s32.totalorder %s92, 0
      %p459 = por %p457, %p458
      %p460 = scmp.ne.s32.totalorder %s448, %s449
      %p461 = scmp.eq.s32.totalorder %s93, 1
      %p462 = por %p460, %p461
      %p464 = scmp.ne.s32.totalorder %s449, %s463
      %p465 = scmp.eq.s32.totalorder %s93, 0
      %p466 = por %p464, %p465
      %s468 = sadd.s32 %s467, 1
      %p471 = scmp.eq.s32.totalorder %s87, 1
      %p472 = scmp.ne.s32.totalorder %s467, %s469
      %p473 = scmp.eq.s32.totalorder %s87, 0
      %p474 = por %p472, %p473
      %p475 = scmp.ne.s32.totalorder %s467, %s469
      %p476 = scmp.eq.s32.totalorder %s92, 1
      %p477 = por %p475, %p476
      %p478 = scmp.ne.s32.totalorder %s469, %s470
      %p479 = scmp.eq.s32.totalorder %s92, 0
      %p480 = por %p478, %p479
      %p481 = scmp.ne.s32.totalorder %s469, %s470
      %p482 = scmp.eq.s32.totalorder %s93, 1
      %p483 = por %p481, %p482
      %p485 = scmp.ne.s32.totalorder %s470, %s484
      %p486 = scmp.eq.s32.totalorder %s93, 0
      %p487 = por %p485, %p486
      %s489 = sadd.s32 %s488, 1
      %p492 = scmp.eq.s32.totalorder %s87, 1
      %p493 = scmp.ne.s32.totalorder %s488, %s490
      %p494 = scmp.eq.s32.totalorder %s87, 0
      %p495 = por %p493, %p494
      %p496 = scmp.ne.s32.totalorder %s488, %s490
      %p497 = scmp.eq.s32.totalorder %s92, 1
      %p498 = por %p496, %p497
      %p499 = scmp.ne.s32.totalorder %s490, %s491
      %p500 = scmp.eq.s32.totalorder %s92, 0
      %p501 = por %p499, %p500
      %p502 = scmp.ne.s32.totalorder %s490, %s491
      %p503 = scmp.eq.s32.totalorder %s93, 1
      %p504 = por %p502, %p503
      %p506 = scmp.ne.s32.totalorder %s491, %s505
      %p507 = scmp.eq.s32.totalorder %s93, 0
      %p508 = por %p506, %p507
      %s510 = sadd.s32 %s509, 1
      %p513 = scmp.eq.s32.totalorder %s87, 1
      %p514 = scmp.ne.s32.totalorder %s509, %s511
      %p515 = scmp.eq.s32.totalorder %s87, 0
      %p516 = por %p514, %p515
      %p517 = scmp.ne.s32.totalorder %s509, %s511
      %p518 = scmp.eq.s32.totalorder %s92, 1
      %p519 = por %p517, %p518
      %p520 = scmp.ne.s32.totalorder %s511, %s512
      %p521 = scmp.eq.s32.totalorder %s92, 0
      %p522 = por %p520, %p521
      %p523 = scmp.ne.s32.totalorder %s511, %s512
      %p524 = scmp.eq.s32.totalorder %s93, 1
      %p525 = por %p523, %p524
      %p527 = scmp.ne.s32.totalorder %s512, %s526
      %p528 = scmp.eq.s32.totalorder %s93, 0
      %p529 = por %p527, %p528
      %s531 = sadd.s32 %s530, 1
      %p534 = scmp.eq.s32.totalorder %s87, 1
      %p535 = scmp.ne.s32.totalorder %s530, %s532
      %p536 = scmp.eq.s32.totalorder %s87, 0
      %p537 = por %p535, %p536
      %p538 = scmp.ne.s32.totalorder %s530, %s532
      %p539 = scmp.eq.s32.totalorder %s92, 1
      %p540 = por %p538, %p539
      %p541 = scmp.ne.s32.totalorder %s532, %s533
      %p542 = scmp.eq.s32.totalorder %s92, 0
      %p543 = por %p541, %p542
      %p544 = scmp.ne.s32.totalorder %s532, %s533
      %p545 = scmp.eq.s32.totalorder %s93, 1
      %p546 = por %p544, %p545
      %p548 = scmp.ne.s32.totalorder %s533, %s547
      %p549 = scmp.eq.s32.totalorder %s93, 0
      %p550 = por %p548, %p549
      %s552 = sadd.s32 %s551, 1
      %p555 = scmp.eq.s32.totalorder %s87, 1
      %p556 = scmp.ne.s32.totalorder %s551, %s553
      %p557 = scmp.eq.s32.totalorder %s87, 0
      %p558 = por %p556, %p557
      %p559 = scmp.ne.s32.totalorder %s551, %s553
      %p560 = scmp.eq.s32.totalorder %s92, 1
      %p561 = por %p559, %p560
      %p562 = scmp.ne.s32.totalorder %s553, %s554
      %p563 = scmp.eq.s32.totalorder %s92, 0
      %p564 = por %p562, %p563
      %p565 = scmp.ne.s32.totalorder %s553, %s554
      %p566 = scmp.eq.s32.totalorder %s93, 1
      %p567 = por %p565, %p566
      %p569 = scmp.ne.s32.totalorder %s554, %s568
      %p570 = scmp.eq.s32.totalorder %s93, 0
      %p571 = por %p569, %p570
      %s573 = sadd.s32 %s572, 1
      %p576 = scmp.eq.s32.totalorder %s87, 1
      %p577 = scmp.ne.s32.totalorder %s572, %s574
      %p578 = scmp.eq.s32.totalorder %s87, 0
      %p579 = por %p577, %p578
      %p580 = scmp.ne.s32.totalorder %s572, %s574
      %p581 = scmp.eq.s32.totalorder %s92, 1
      %p582 = por %p580, %p581
      %p583 = scmp.ne.s32.totalorder %s574, %s575
      %p584 = scmp.eq.s32.totalorder %s92, 0
      %p585 = por %p583, %p584
      %p586 = scmp.ne.s32.totalorder %s574, %s575
      %p587 = scmp.eq.s32.totalorder %s93, 1
      %p588 = por %p586, %p587
      %p590 = scmp.ne.s32.totalorder %s575, %s589
      %p591 = scmp.eq.s32.totalorder %s93, 0
      %p592 = por %p590, %p591
      %s594 = sadd.s32 %s593, 1
      %p597 = scmp.eq.s32.totalorder %s87, 1
      %p598 = scmp.ne.s32.totalorder %s593, %s595
      %p599 = scmp.eq.s32.totalorder %s87, 0
      %p600 = por %p598, %p599
      %p601 = scmp.ne.s32.totalorder %s593, %s595
      %p602 = scmp.eq.s32.totalorder %s92, 1
      %p603 = por %p601, %p602
      %p604 = scmp.ne.s32.totalorder %s595, %s596
      %p605 = scmp.eq.s32.totalorder %s92, 0
      %p606 = por %p604, %p605
      %p607 = scmp.ne.s32.totalorder %s595, %s596
      %p608 = scmp.eq.s32.totalorder %s93, 1
      %p609 = por %p607, %p608
      %p611 = scmp.ne.s32.totalorder %s596, %s610
      %p612 = scmp.eq.s32.totalorder %s93, 0
      %p613 = por %p611, %p612
      %s615 = sadd.s32 %s614, 1
      %p618 = scmp.eq.s32.totalorder %s87, 1
      %p619 = scmp.ne.s32.totalorder %s614, %s616
      %p620 = scmp.eq.s32.totalorder %s87, 0
      %p621 = por %p619, %p620
      %p622 = scmp.ne.s32.totalorder %s614, %s616
      %p623 = scmp.eq.s32.totalorder %s92, 1
      %p624 = por %p622, %p623
      %p625 = scmp.ne.s32.totalorder %s616, %s617
      %p626 = scmp.eq.s32.totalorder %s92, 0
      %p627 = por %p625, %p626
      %p628 = scmp.ne.s32.totalorder %s616, %s617
      %p629 = scmp.eq.s32.totalorder %s93, 1
      %p630 = por %p628, %p629
      %p632 = scmp.ne.s32.totalorder %s617, %s631
      %p633 = scmp.eq.s32.totalorder %s93, 0
      %p634 = por %p632, %p633
      %s636 = sadd.s32 %s635, 1
      %p639 = scmp.eq.s32.totalorder %s87, 1
      %p640 = scmp.ne.s32.totalorder %s635, %s637
      %p641 = scmp.eq.s32.totalorder %s87, 0
      %p642 = por %p640, %p641
      %p643 = scmp.ne.s32.totalorder %s635, %s637
      %p644 = scmp.eq.s32.totalorder %s92, 1
      %p645 = por %p643, %p644
      %p646 = scmp.ne.s32.totalorder %s637, %s638
      %p647 = scmp.eq.s32.totalorder %s92, 0
      %p648 = por %p646, %p647
      %p649 = scmp.ne.s32.totalorder %s637, %s638
      %p650 = scmp.eq.s32.totalorder %s93, 1
      %p651 = por %p649, %p650
      %p653 = scmp.ne.s32.totalorder %s638, %s652
      %p654 = scmp.eq.s32.totalorder %s93, 0
      %p655 = por %p653, %p654
      %s657 = sadd.s32 %s656, 1
      %p660 = scmp.eq.s32.totalorder %s87, 1
      %p661 = scmp.ne.s32.totalorder %s656, %s658
      %p662 = scmp.eq.s32.totalorder %s87, 0
      %p663 = por %p661, %p662
      %p664 = scmp.ne.s32.totalorder %s656, %s658
      %p665 = scmp.eq.s32.totalorder %s92, 1
      %p666 = por %p664, %p665
      %p667 = scmp.ne.s32.totalorder %s658, %s659
      %p668 = scmp.eq.s32.totalorder %s92, 0
      %p669 = por %p667, %p668
      %p670 = scmp.ne.s32.totalorder %s658, %s659
      %p671 = scmp.eq.s32.totalorder %s93, 1
      %p672 = por %p670, %p671
      %p674 = scmp.ne.s32.totalorder %s659, %s673
      %p675 = scmp.eq.s32.totalorder %s93, 0
      %p676 = por %p674, %p675
      %s678 = sadd.s32 %s677, 1
      %p681 = scmp.eq.s32.totalorder %s87, 1
      %p682 = scmp.ne.s32.totalorder %s677, %s679
      %p683 = scmp.eq.s32.totalorder %s87, 0
      %p684 = por %p682, %p683
      %p685 = scmp.ne.s32.totalorder %s677, %s679
      %p686 = scmp.eq.s32.totalorder %s92, 1
      %p687 = por %p685, %p686
      %p688 = scmp.ne.s32.totalorder %s679, %s680
      %p689 = scmp.eq.s32.totalorder %s92, 0
      %p690 = por %p688, %p689
      %p691 = scmp.ne.s32.totalorder %s679, %s680
      %p692 = scmp.eq.s32.totalorder %s93, 1
      %p693 = por %p691, %p692
      %p695 = scmp.ne.s32.totalorder %s680, %s694
      %p696 = scmp.eq.s32.totalorder %s93, 0
      %p697 = por %p695, %p696
      %s699 = sadd.s32 %s698, 1
      %p702 = scmp.eq.s32.totalorder %s87, 1
      %p703 = scmp.ne.s32.totalorder %s698, %s700
      %p704 = scmp.eq.s32.totalorder %s87, 0
      %p705 = por %p703, %p704
      %p706 = scmp.ne.s32.totalorder %s698, %s700
      %p707 = scmp.eq.s32.totalorder %s92, 1
      %p708 = por %p706, %p707
      %p709 = scmp.ne.s32.totalorder %s700, %s701
      %p710 = scmp.eq.s32.totalorder %s92, 0
      %p711 = por %p709, %p710
      %p712 = scmp.ne.s32.totalorder %s700, %s701
      %p713 = scmp.eq.s32.totalorder %s93, 1
      %p714 = por %p712, %p713
      %p716 = scmp.ne.s32.totalorder %s701, %s715
      %p717 = scmp.eq.s32.totalorder %s93, 0
      %p718 = por %p716, %p717
      %s719 = ssub.s32 %s87, %s94
      %p720 = scmp.eq.s32.totalorder %s719, 0
      %s722 = sadd.s32 %s721, 1
      %s723 = scalar_select %p720, %s721, %s722
      %p726 = pneg %p720
      %p727 = scmp.eq.s32.totalorder %s87, 1
      %p728 = por %p726, %p727
      %p729 = scmp.ne.s32.totalorder %s721, %s724
      %p730 = scmp.eq.s32.totalorder %s87, 0
      %p731 = por %p729, %p730
      %p732 = scmp.ne.s32.totalorder %s721, %s724
      %p733 = scmp.eq.s32.totalorder %s92, 1
      %p734 = por %p732, %p733
      %p735 = scmp.ne.s32.totalorder %s724, %s725
      %p736 = scmp.eq.s32.totalorder %s92, 0
      %p737 = por %p735, %p736
      %p738 = scmp.ne.s32.totalorder %s724, %s725
      %p739 = scmp.eq.s32.totalorder %s93, 1
      %p740 = por %p738, %p739
      %p742 = scmp.ne.s32.totalorder %s725, %s741
      %p743 = scmp.eq.s32.totalorder %s93, 0
      %p744 = por %p742, %p743
      %s745 = ssub.s32 %s87, %s94
      %p746 = scmp.eq.s32.totalorder %s745, 0
      %s748 = sadd.s32 %s747, 1
      %s749 = scalar_select %p746, %s747, %s748
      %p752 = pneg %p746
      %p753 = scmp.eq.s32.totalorder %s87, 1
      %p754 = por %p752, %p753
      %p755 = scmp.ne.s32.totalorder %s747, %s750
      %p756 = scmp.eq.s32.totalorder %s87, 0
      %p757 = por %p755, %p756
      %p758 = scmp.ne.s32.totalorder %s747, %s750
      %p759 = scmp.eq.s32.totalorder %s92, 1
      %p760 = por %p758, %p759
      %p761 = scmp.ne.s32.totalorder %s750, %s751
      %p762 = scmp.eq.s32.totalorder %s92, 0
      %p763 = por %p761, %p762
      %p764 = scmp.ne.s32.totalorder %s750, %s751
      %p765 = scmp.eq.s32.totalorder %s93, 1
      %p766 = por %p764, %p765
      %p768 = scmp.ne.s32.totalorder %s751, %s767
      %p769 = scmp.eq.s32.totalorder %s93, 0
      %p770 = por %p768, %p769
      %s771 = ssub.s32 %s87, %s94
      %p772 = scmp.eq.s32.totalorder %s771, 0
      %s774 = sadd.s32 %s773, 1
      %s775 = scalar_select %p772, %s773, %s774
      %p778 = pneg %p772
      %p779 = scmp.eq.s32.totalorder %s87, 1
      %p780 = por %p778, %p779
      %p781 = scmp.ne.s32.totalorder %s773, %s776
      %p782 = scmp.eq.s32.totalorder %s87, 0
      %p783 = por %p781, %p782
      %p784 = scmp.ne.s32.totalorder %s773, %s776
      %p785 = scmp.eq.s32.totalorder %s92, 1
      %p786 = por %p784, %p785
      %p787 = scmp.ne.s32.totalorder %s776, %s777
      %p788 = scmp.eq.s32.totalorder %s92, 0
      %p789 = por %p787, %p788
      %p790 = scmp.ne.s32.totalorder %s776, %s777
      %p791 = scmp.eq.s32.totalorder %s93, 1
      %p792 = por %p790, %p791
      %p794 = scmp.ne.s32.totalorder %s777, %s793
      %p795 = scmp.eq.s32.totalorder %s93, 0
      %p796 = por %p794, %p795
      %p797 = scmp.le.s32.totalorder 1, %s87
      %p798 = scmp.lt.s32.totalorder %s87, 3
      %p799 = pnand %p797, %p798
      %p800 = pneg %p799
      // Predicated region
      $region9: #{tpu_custom_call.1} parent=5 // pred_check
        _
      $region10: #{tpu_custom_call.1} parent=5 // pred_check_branch
        %802 = sbr.rel (%p799) target = $region12
      $region11: #{tpu_custom_call.1} parent=5 // pred_region
        %s803 = ssub.s32 %s87, 1
        // Predicated region
        $region13: #{tpu_custom_call.1} parent=11 // pred_check
          %p804 = pneg %p186
        $region14: #{tpu_custom_call.1} parent=11 // pred_check_branch
          %806 = sbr.rel (%p804) target = $region16
        $region15: #{tpu_custom_call.1} parent=11 // pred_region
          _
        $region16: #{tpu_custom_call.1} parent=11 // pred_fallthru
          _
        // Predicated region
        $region17: #{tpu_custom_call.1} parent=11 // pred_check
          %p807 = pneg %p207
        $region18: #{tpu_custom_call.1} parent=11 // pred_check_branch
          %809 = sbr.rel (%p807) target = $region20
        $region19: #{tpu_custom_call.1} parent=11 // pred_region
          _
        $region20: #{tpu_custom_call.1} parent=11 // pred_fallthru
          _
        // Predicated region
        $region21: #{tpu_custom_call.1} parent=11 // pred_check
          %p810 = pneg %p228
        $region22: #{tpu_custom_call.1} parent=11 // pred_check_branch
          %812 = sbr.rel (%p810) target = $region24
        $region23: #{tpu_custom_call.1} parent=11 // pred_region
          %s814 = ssub.s32 6144, 6144
          %815 = vsyncadd [#allocation9], %s814
          %s816 = sshll.u32 [#allocation8], 4
          %s817 = int_to_ptr.vmem [resolvable:$true] %s816
          %822 = dma.hbm_to_vmem [thread:$0]  %s11, 6144, %s817, [#allocation9], 128, 128, 8
        $region24: #{tpu_custom_call.1} parent=11 // pred_fallthru
          _
        // Predicated region
        $region25: #{tpu_custom_call.1} parent=11 // pred_check
          %p823 = pneg %p249
        $region26: #{tpu_custom_call.1} parent=11 // pred_check_branch
          %825 = sbr.rel (%p823) target = $region28
        $region27: #{tpu_custom_call.1} parent=11 // pred_region
          _
        $region28: #{tpu_custom_call.1} parent=11 // pred_fallthru
          _
        // Predicated region
        $region29: #{tpu_custom_call.1} parent=11 // pred_check
          %p826 = pneg %p270
        $region30: #{tpu_custom_call.1} parent=11 // pred_check_branch
          %828 = sbr.rel (%p826) target = $region32
        $region31: #{tpu_custom_call.1} parent=11 // pred_region
          %s830 = ssub.s32 6144, 6144
          %831 = vsyncadd [#allocation9], %s830
          %s832 = sshll.u32 [#allocation10], 4
          %s833 = int_to_ptr.vmem [resolvable:$true] %s832
          %838 = dma.hbm_to_vmem [thread:$0]  %s15, 6144, %s833, [#allocation9], 128, 128, 8
        $region32: #{tpu_custom_call.1} parent=11 // pred_fallthru
          _
        // Predicated region
        $region33: #{tpu_custom_call.1} parent=11 // pred_check
          %p839 = pneg %p291
        $region34: #{tpu_custom_call.1} parent=11 // pred_check_branch
          %841 = sbr.rel (%p839) target = $region36
        $region35: #{tpu_custom_call.1} parent=11 // pred_region
          _
        $region36: #{tpu_custom_call.1} parent=11 // pred_fallthru
          _
        // Predicated region
        $region37: #{tpu_custom_call.1} parent=11 // pred_check
          %p842 = pneg %p312
        $region38: #{tpu_custom_call.1} parent=11 // pred_check_branch
          %844 = sbr.rel (%p842) target = $region40
        $region39: #{tpu_custom_call.1} parent=11 // pred_region
          %s846 = ssub.s32 6144, 6144
          %847 = vsyncadd [#allocation12], %s846
          %s848 = sshll.u32 [#allocation11], 4
          %s849 = int_to_ptr.vmem [resolvable:$true] %s848
          %854 = dma.hbm_to_vmem [thread:$0]  %s19, 6144, %s849, [#allocation12], 128, 128, 8
        $region40: #{tpu_custom_call.1} parent=11 // pred_fallthru
          _
        // Predicated region
        $region41: #{tpu_custom_call.1} parent=11 // pred_check
          %p855 = pneg %p333
        $region42: #{tpu_custom_call.1} parent=11 // pred_check_branch
          %857 = sbr.rel (%p855) target = $region44
        $region43: #{tpu_custom_call.1} parent=11 // pred_region
          _
        $region44: #{tpu_custom_call.1} parent=11 // pred_fallthru
          _
        // Predicated region
        $region45: #{tpu_custom_call.1} parent=11 // pred_check
          %p858 = pneg %p354
        $region46: #{tpu_custom_call.1} parent=11 // pred_check_branch
          %860 = sbr.rel (%p858) target = $region48
        $region47: #{tpu_custom_call.1} parent=11 // pred_region
          %s862 = ssub.s32 6144, 6144
          %863 = vsyncadd [#allocation12], %s862
          %s864 = sshll.u32 [#allocation13], 4
          %s865 = int_to_ptr.vmem [resolvable:$true] %s864
          %870 = dma.hbm_to_vmem [thread:$0]  %s23, 6144, %s865, [#allocation12], 128, 128, 8
        $region48: #{tpu_custom_call.1} parent=11 // pred_fallthru
          _
        // Predicated region
        $region49: #{tpu_custom_call.1} parent=11 // pred_check
          %p871 = pneg %p375
        $region50: #{tpu_custom_call.1} parent=11 // pred_check_branch
          %873 = sbr.rel (%p871) target = $region52
        $region51: #{tpu_custom_call.1} parent=11 // pred_region
          _
        $region52: #{tpu_custom_call.1} parent=11 // pred_fallthru
          _
        // Predicated region
        $region53: #{tpu_custom_call.1} parent=11 // pred_check
          %p874 = pneg %p396
        $region54: #{tpu_custom_call.1} parent=11 // pred_check_branch
          %876 = sbr.rel (%p874) target = $region56
        $region55: #{tpu_custom_call.1} parent=11 // pred_region
          %s878 = ssub.s32 6144, 6144
          %879 = vsyncadd [#allocation15], %s878
          %s880 = sshll.u32 [#allocation14], 4
          %s881 = int_to_ptr.vmem [resolvable:$true] %s880
          %886 = dma.hbm_to_vmem [thread:$0]  %s27, 6144, %s881, [#allocation15], 128, 128, 8
        $region56: #{tpu_custom_call.1} parent=11 // pred_fallthru
          _
        // Predicated region
        $region57: #{tpu_custom_call.1} parent=11 // pred_check
          %p887 = pneg %p417
        $region58: #{tpu_custom_call.1} parent=11 // pred_check_branch
          %889 = sbr.rel (%p887) target = $region60
        $region59: #{tpu_custom_call.1} parent=11 // pred_region
          _
        $region60: #{tpu_custom_call.1} parent=11 // pred_fallthru
          _
        // Predicated region
        $region61: #{tpu_custom_call.1} parent=11 // pred_check
          %p890 = pneg %p438
        $region62: #{tpu_custom_call.1} parent=11 // pred_check_branch
          %892 = sbr.rel (%p890) target = $region64
        $region63: #{tpu_custom_call.1} parent=11 // pred_region
          %s894 = ssub.s32 2048, 2048
          %895 = vsyncadd [#allocation15], %s894
          %s896 = sshll.u32 [#allocation16], 4
          %s897 = int_to_ptr.vmem [resolvable:$true] %s896
          %902 = dma.hbm_to_vmem [thread:$0]  %s31, 2048, %s897, [#allocation15], 128, 128, 8
        $region64: #{tpu_custom_call.1} parent=11 // pred_fallthru
          _
        // Predicated region
        $region65: #{tpu_custom_call.1} parent=11 // pred_check
          %p903 = pneg %p459
        $region66: #{tpu_custom_call.1} parent=11 // pred_check_branch
          %905 = sbr.rel (%p903) target = $region68
        $region67: #{tpu_custom_call.1} parent=11 // pred_region
          _
        $region68: #{tpu_custom_call.1} parent=11 // pred_fallthru
          _
        // Predicated region
        $region69: #{tpu_custom_call.1} parent=11 // pred_check
          %p906 = pneg %p480
        $region70: #{tpu_custom_call.1} parent=11 // pred_check_branch
          %908 = sbr.rel (%p906) target = $region72
        $region71: #{tpu_custom_call.1} parent=11 // pred_region
          %s910 = ssub.s32 2048, 2048
          %911 = vsyncadd [#allocation18], %s910
          %s912 = sshll.u32 [#allocation17], 4
          %s913 = int_to_ptr.vmem [resolvable:$true] %s912
          %918 = dma.hbm_to_vmem [thread:$0]  %s35, 2048, %s913, [#allocation18], 128, 128, 8
        $region72: #{tpu_custom_call.1} parent=11 // pred_fallthru
          _
        // Predicated region
        $region73: #{tpu_custom_call.1} parent=11 // pred_check
          %p919 = pneg %p501
        $region74: #{tpu_custom_call.1} parent=11 // pred_check_branch
          %921 = sbr.rel (%p919) target = $region76
        $region75: #{tpu_custom_call.1} parent=11 // pred_region
          _
        $region76: #{tpu_custom_call.1} parent=11 // pred_fallthru
          _
        // Predicated region
        $region77: #{tpu_custom_call.1} parent=11 // pred_check
          %p922 = pneg %p522
        $region78: #{tpu_custom_call.1} parent=11 // pred_check_branch
          %924 = sbr.rel (%p922) target = $region80
        $region79: #{tpu_custom_call.1} parent=11 // pred_region
          %s926 = ssub.s32 6144, 6144
          %927 = vsyncadd [#allocation18], %s926
          %s928 = sshll.u32 [#allocation19], 4
          %s929 = int_to_ptr.vmem [resolvable:$true] %s928
          %934 = dma.hbm_to_vmem [thread:$0]  %s39, 6144, %s929, [#allocation18], 128, 128, 8
        $region80: #{tpu_custom_call.1} parent=11 // pred_fallthru
          _
        // Predicated region
        $region81: #{tpu_custom_call.1} parent=11 // pred_check
          %p935 = pneg %p543
        $region82: #{tpu_custom_call.1} parent=11 // pred_check_branch
          %937 = sbr.rel (%p935) target = $region84
        $region83: #{tpu_custom_call.1} parent=11 // pred_region
          _
        $region84: #{tpu_custom_call.1} parent=11 // pred_fallthru
          _
        // Predicated region
        $region85: #{tpu_custom_call.1} parent=11 // pred_check
          %p938 = pneg %p564
        $region86: #{tpu_custom_call.1} parent=11 // pred_check_branch
          %940 = sbr.rel (%p938) target = $region88
        $region87: #{tpu_custom_call.1} parent=11 // pred_region
          %s942 = ssub.s32 2048, 2048
          %943 = vsyncadd [#allocation21], %s942
          %s944 = sshll.u32 [#allocation20], 4
          %s945 = int_to_ptr.vmem [resolvable:$true] %s944
          %950 = dma.hbm_to_vmem [thread:$0]  %s43, 2048, %s945, [#allocation21], 128, 128, 8
        $region88: #{tpu_custom_call.1} parent=11 // pred_fallthru
          _
        // Predicated region
        $region89: #{tpu_custom_call.1} parent=11 // pred_check
          %p951 = pneg %p585
        $region90: #{tpu_custom_call.1} parent=11 // pred_check_branch
          %953 = sbr.rel (%p951) target = $region92
        $region91: #{tpu_custom_call.1} parent=11 // pred_region
          _
        $region92: #{tpu_custom_call.1} parent=11 // pred_fallthru
          _
        // Predicated region
        $region93: #{tpu_custom_call.1} parent=11 // pred_check
          %p954 = pneg %p606
        $region94: #{tpu_custom_call.1} parent=11 // pred_check_branch
          %956 = sbr.rel (%p954) target = $region96
        $region95: #{tpu_custom_call.1} parent=11 // pred_region
          _
        $region96: #{tpu_custom_call.1} parent=11 // pred_fallthru
          _
        // Predicated region
        $region97: #{tpu_custom_call.1} parent=11 // pred_check
          %p957 = pneg %p627
        $region98: #{tpu_custom_call.1} parent=11 // pred_check_branch
          %959 = sbr.rel (%p957) target = $region100
        $region99: #{tpu_custom_call.1} parent=11 // pred_region
          _
        $region100: #{tpu_custom_call.1} parent=11 // pred_fallthru
          _
        // Predicated region
        $region101: #{tpu_custom_call.1} parent=11 // pred_check
          %p960 = pneg %p648
        $region102: #{tpu_custom_call.1} parent=11 // pred_check_branch
          %962 = sbr.rel (%p960) target = $region104
        $region103: #{tpu_custom_call.1} parent=11 // pred_region
          _
        $region104: #{tpu_custom_call.1} parent=11 // pred_fallthru
          _
        // Predicated region
        $region105: #{tpu_custom_call.1} parent=11 // pred_check
          %p963 = pneg %p669
        $region106: #{tpu_custom_call.1} parent=11 // pred_check_branch
          %965 = sbr.rel (%p963) target = $region108
        $region107: #{tpu_custom_call.1} parent=11 // pred_region
          _
        $region108: #{tpu_custom_call.1} parent=11 // pred_fallthru
          _
        // Predicated region
        $region109: #{tpu_custom_call.1} parent=11 // pred_check
          %p966 = pneg %p690
        $region110: #{tpu_custom_call.1} parent=11 // pred_check_branch
          %968 = sbr.rel (%p966) target = $region112
        $region111: #{tpu_custom_call.1} parent=11 // pred_region
          %s970 = ssub.s32 6144, 6144
          %971 = vsyncadd [#allocation21], %s970
          %s972 = sshll.u32 [#allocation22], 4
          %s973 = int_to_ptr.vmem [resolvable:$true] %s972
          %978 = dma.hbm_to_vmem [thread:$0]  %s55, 6144, %s973, [#allocation21], 128, 128, 8
        $region112: #{tpu_custom_call.1} parent=11 // pred_fallthru
          _
        // Predicated region
        $region113: #{tpu_custom_call.1} parent=11 // pred_check
          %p979 = pneg %p711
        $region114: #{tpu_custom_call.1} parent=11 // pred_check_branch
          %981 = sbr.rel (%p979) target = $region116
        $region115: #{tpu_custom_call.1} parent=11 // pred_region
          _
        $region116: #{tpu_custom_call.1} parent=11 // pred_fallthru
          _
      $region12: #{tpu_custom_call.1} parent=5 // pred_fallthru
        _
      %p982 = scmp.lt.s32.totalorder %s87, 2
      // Predicated region
      $region117: #{tpu_custom_call.1} parent=5 // pred_check
        %p983 = pneg %p982
      $region118: #{tpu_custom_call.1} parent=5 // pred_check_branch
        %985 = sbr.rel (%p983) target = $region120
      $region119: #{tpu_custom_call.1} parent=5 // pred_region
        // Predicated region
        $region121: #{tpu_custom_call.1} parent=119 // pred_check
          %p986 = pneg %p107
        $region122: #{tpu_custom_call.1} parent=119 // pred_check_branch
          %988 = sbr.rel (%p986) target = $region124
        $region123: #{tpu_custom_call.1} parent=119 // pred_region
          %s989 = sand.u32 %s97, 1
          %s990 = scalar_lea.sflag [#allocation3], %s989
          %s991 = sand.u32 %s97, 1
          %s992 = smul.addr %s991, 16
          %s993 = scalar_lea.vmem [#allocation2], %s992
          %s995 = ssub.s32 256, 256
          %996 = vsyncadd %s990, %s995
          %s997 = smul.addr %s87, 2
          %s998 = smul.addr %s997, 128
          %s999 = scalar_lea.hbm %s1, %s998
          %s1000 = sshll.u32 %s993, 4
          %s1001 = int_to_ptr.vmem [resolvable:$true] %s1000
          %1006 = dma.hbm_to_vmem [thread:$0]  %s999, 256, %s1001, %s990, 128, 128, 8
        $region124: #{tpu_custom_call.1} parent=119 // pred_fallthru
          _
        // Predicated region
        $region125: #{tpu_custom_call.1} parent=119 // pred_check
          %p1007 = pneg %p133
        $region126: #{tpu_custom_call.1} parent=119 // pred_check_branch
          %1009 = sbr.rel (%p1007) target = $region128
        $region127: #{tpu_custom_call.1} parent=119 // pred_region
          %s1010 = sand.u32 %s87, 1
          %s1011 = scalar_lea.sflag [#allocation6], %s1010
          %s1012 = sand.u32 %s123, 1
          %s1013 = smul.addr %s1012, 8
          %s1014 = scalar_lea.vmem [#allocation5], %s1013
          %s1016 = ssub.s32 128, 128
          %1017 = vsyncadd %s1011, %s1016
          %s1018 = smul.addr %s87, 128
          %s1019 = scalar_lea.hbm %s3, %s1018
          %s1021 = sshll.u32 %s1014, 4
          %s1022 = int_to_ptr.vmem [resolvable:$true] %s1021
          %1024 = dma.hbm_to_vmem [thread:$0]  %s1019, 128, %s1022, %s1011
        $region128: #{tpu_custom_call.1} parent=119 // pred_fallthru
          _
        // Predicated region
        $region129: #{tpu_custom_call.1} parent=119 // pred_check
          %p1025 = pneg %p159
        $region130: #{tpu_custom_call.1} parent=119 // pred_check_branch
          %1027 = sbr.rel (%p1025) target = $region132
        $region131: #{tpu_custom_call.1} parent=119 // pred_region
          %s1028 = sand.u32 %s87, 1
          %s1029 = scalar_lea.sflag [#allocation6], %s1028
          %s1030 = sand.u32 %s149, 1
          %s1031 = smul.addr %s1030, 4
          %s1032 = scalar_lea.vmem [#allocation7], %s1031
          %s1034 = ssub.s32 64, 64
          %1035 = vsyncadd %s1029, %s1034
          %s1036 = smul.addr %s87, 64
          %s1037 = scalar_lea.hbm %s5, %s1036
          %s1039 = sshll.u32 %s1032, 4
          %s1040 = int_to_ptr.vmem [resolvable:$true] %s1039
          %1042 = dma.hbm_to_vmem [thread:$0]  %s1037, 64, %s1040, %s1029
        $region132: #{tpu_custom_call.1} parent=119 // pred_fallthru
          _
      $region120: #{tpu_custom_call.1} parent=5 // pred_fallthru
        _
      %p1043 = scmp.le.s32.totalorder 1, %s87
      %p1044 = scmp.lt.s32.totalorder %s87, 3
      %p1045 = pnand %p1043, %p1044
      %p1046 = pneg %p1045
      // Predicated region
      $region133: #{tpu_custom_call.1} parent=5 // pred_check
        _
      $region134: #{tpu_custom_call.1} parent=5 // pred_check_branch
        %1048 = sbr.rel (%p1045) target = $region136
      $region135: #{tpu_custom_call.1} parent=5 // pred_region
        %s1049 = ssub.s32 %s87, 1
        %s1050 = sand.u32 %s100, 1
        %s1051 = scalar_lea.sflag [#allocation3], %s1050
        %s1052 = sand.u32 %s100, 1
        %s1053 = smul.addr %s1052, 16
        %s1054 = scalar_lea.vmem [#allocation2], %s1053
        // Predicated region
        $region137: #{tpu_custom_call.1} parent=135 // pred_check
          %p1055 = pneg %p113
        $region138: #{tpu_custom_call.1} parent=135 // pred_check_branch
          %1057 = sbr.rel (%p1055) target = $region140
        $region139: #{tpu_custom_call.1} parent=135 // pred_region
          %1058 = dma.done %s1051, 256
        $region140: #{tpu_custom_call.1} parent=135 // pred_fallthru
          _
        %s1059 = sand.u32 %s92, 1
        %s1060 = scalar_lea.sflag [#allocation6], %s1059
        %s1061 = sand.u32 %s126, 1
        %s1062 = smul.addr %s1061, 8
        %s1063 = scalar_lea.vmem [#allocation5], %s1062
        // Predicated region
        $region141: #{tpu_custom_call.1} parent=135 // pred_check
          %p1064 = pneg %p139
        $region142: #{tpu_custom_call.1} parent=135 // pred_check_branch
          %1066 = sbr.rel (%p1064) target = $region144
        $region143: #{tpu_custom_call.1} parent=135 // pred_region
          %1067 = dma.done %s1060, 128
        $region144: #{tpu_custom_call.1} parent=135 // pred_fallthru
          _
        %s1068 = sand.u32 %s92, 1
        %s1069 = scalar_lea.sflag [#allocation6], %s1068
        %s1070 = sand.u32 %s152, 1
        %s1071 = smul.addr %s1070, 4
        %s1072 = scalar_lea.vmem [#allocation7], %s1071
        // Predicated region
        $region145: #{tpu_custom_call.1} parent=135 // pred_check
          %p1073 = pneg %p165
        $region146: #{tpu_custom_call.1} parent=135 // pred_check_branch
          %1075 = sbr.rel (%p1073) target = $region148
        $region147: #{tpu_custom_call.1} parent=135 // pred_region
          %1076 = dma.done %s1069, 64
        $region148: #{tpu_custom_call.1} parent=135 // pred_fallthru
          _
        // Predicated region
        $region149: #{tpu_custom_call.1} parent=135 // pred_check
          %p1077 = pneg %p228
        $region150: #{tpu_custom_call.1} parent=135 // pred_check_branch
          %1079 = sbr.rel (%p1077) target = $region152
        $region151: #{tpu_custom_call.1} parent=135 // pred_region
          %1080 = dma.done [#allocation9], 6144
        $region152: #{tpu_custom_call.1} parent=135 // pred_fallthru
          _
        // Predicated region
        $region153: #{tpu_custom_call.1} parent=135 // pred_check
          %p1081 = pneg %p270
        $region154: #{tpu_custom_call.1} parent=135 // pred_check_branch
          %1083 = sbr.rel (%p1081) target = $region156
        $region155: #{tpu_custom_call.1} parent=135 // pred_region
          %1084 = dma.done [#allocation9], 6144
        $region156: #{tpu_custom_call.1} parent=135 // pred_fallthru
          _
        // Predicated region
        $region157: #{tpu_custom_call.1} parent=135 // pred_check
          %p1085 = pneg %p312
        $region158: #{tpu_custom_call.1} parent=135 // pred_check_branch
          %1087 = sbr.rel (%p1085) target = $region160
        $region159: #{tpu_custom_call.1} parent=135 // pred_region
          %1088 = dma.done [#allocation12], 6144
        $region160: #{tpu_custom_call.1} parent=135 // pred_fallthru
          _
        // Predicated region
        $region161: #{tpu_custom_call.1} parent=135 // pred_check
          %p1089 = pneg %p354
        $region162: #{tpu_custom_call.1} parent=135 // pred_check_branch
          %1091 = sbr.rel (%p1089) target = $region164
        $region163: #{tpu_custom_call.1} parent=135 // pred_region
          %1092 = dma.done [#allocation12], 6144
        $region164: #{tpu_custom_call.1} parent=135 // pred_fallthru
          _
        // Predicated region
        $region165: #{tpu_custom_call.1} parent=135 // pred_check
          %p1093 = pneg %p396
        $region166: #{tpu_custom_call.1} parent=135 // pred_check_branch
          %1095 = sbr.rel (%p1093) target = $region168
        $region167: #{tpu_custom_call.1} parent=135 // pred_region
          %1096 = dma.done [#allocation15], 6144
        $region168: #{tpu_custom_call.1} parent=135 // pred_fallthru
          _
        // Predicated region
        $region169: #{tpu_custom_call.1} parent=135 // pred_check
          %p1097 = pneg %p438
        $region170: #{tpu_custom_call.1} parent=135 // pred_check_branch
          %1099 = sbr.rel (%p1097) target = $region172
        $region171: #{tpu_custom_call.1} parent=135 // pred_region
          %1100 = dma.done [#allocation15], 2048
        $region172: #{tpu_custom_call.1} parent=135 // pred_fallthru
          _
        // Predicated region
        $region173: #{tpu_custom_call.1} parent=135 // pred_check
          %p1101 = pneg %p480
        $region174: #{tpu_custom_call.1} parent=135 // pred_check_branch
          %1103 = sbr.rel (%p1101) target = $region176
        $region175: #{tpu_custom_call.1} parent=135 // pred_region
          %1104 = dma.done [#allocation18], 2048
        $region176: #{tpu_custom_call.1} parent=135 // pred_fallthru
          _
        // Predicated region
        $region177: #{tpu_custom_call.1} parent=135 // pred_check
          %p1105 = pneg %p522
        $region178: #{tpu_custom_call.1} parent=135 // pred_check_branch
          %1107 = sbr.rel (%p1105) target = $region180
        $region179: #{tpu_custom_call.1} parent=135 // pred_region
          %1108 = dma.done [#allocation18], 6144
        $region180: #{tpu_custom_call.1} parent=135 // pred_fallthru
          _
        // Predicated region
        $region181: #{tpu_custom_call.1} parent=135 // pred_check
          %p1109 = pneg %p564
        $region182: #{tpu_custom_call.1} parent=135 // pred_check_branch
          %1111 = sbr.rel (%p1109) target = $region184
        $region183: #{tpu_custom_call.1} parent=135 // pred_region
          %1112 = dma.done [#allocation21], 2048
        $region184: #{tpu_custom_call.1} parent=135 // pred_fallthru
          _
        // Predicated region
        $region185: #{tpu_custom_call.1} parent=135 // pred_check
          %p1113 = pneg %p690
        $region186: #{tpu_custom_call.1} parent=135 // pred_check_branch
          %1115 = sbr.rel (%p1113) target = $region188
        $region187: #{tpu_custom_call.1} parent=135 // pred_region
          %1116 = dma.done [#allocation21], 6144
        $region188: #{tpu_custom_call.1} parent=135 // pred_fallthru
          _
        %s1117 = sand.u32 %s100, 1
        %s1118 = scalar_lea.sflag [#allocation3], %s1117
        %s1119 = sand.u32 %s100, 1
        %s1120 = smul.addr %s1119, 16
        %s1121 = scalar_lea.vmem [#allocation2], %s1120
        %p1122 = pneg %p113
        %p1123 = pneg %p110
        %s1124 = sand.u32 %s92, 1
        %s1125 = scalar_lea.sflag [#allocation6], %s1124
        %s1126 = sand.u32 %s126, 1
        %s1127 = smul.addr %s1126, 8
        %s1128 = scalar_lea.vmem [#allocation5], %s1127
        %p1129 = pneg %p139
        %p1130 = pneg %p136
        %s1131 = sand.u32 %s92, 1
        %s1132 = scalar_lea.sflag [#allocation6], %s1131
        %s1133 = sand.u32 %s152, 1
        %s1134 = smul.addr %s1133, 4
        %s1135 = scalar_lea.vmem [#allocation7], %s1134
        %p1136 = pneg %p165
        %p1137 = pneg %p162
        %p1138 = pneg %p186
        %p1139 = pneg %p183
        %p1140 = pneg %p207
        %p1141 = pneg %p204
        %p1142 = pneg %p228
        %p1143 = pneg %p225
        %p1144 = pneg %p249
        %p1145 = pneg %p246
        %p1146 = pneg %p270
        %p1147 = pneg %p267
        %p1148 = pneg %p291
        %p1149 = pneg %p288
        %p1150 = pneg %p312
        %p1151 = pneg %p309
        %p1152 = pneg %p333
        %p1153 = pneg %p330
        %p1154 = pneg %p354
        %p1155 = pneg %p351
        %p1156 = pneg %p375
        %p1157 = pneg %p372
        %p1158 = pneg %p396
        %p1159 = pneg %p393
        %p1160 = pneg %p417
        %p1161 = pneg %p414
        %p1162 = pneg %p438
        %p1163 = pneg %p435
        %p1164 = pneg %p459
        %p1165 = pneg %p456
        %p1166 = pneg %p480
        %p1167 = pneg %p477
        %p1168 = pneg %p501
        %p1169 = pneg %p498
        %p1170 = pneg %p522
        %p1171 = pneg %p519
        %p1172 = pneg %p543
        %p1173 = pneg %p540
        %p1174 = pneg %p564
        %p1175 = pneg %p561
        %p1176 = pneg %p585
        %p1177 = pneg %p582
        %p1178 = pneg %p606
        %p1179 = pneg %p603
        %p1180 = pneg %p627
        %p1181 = pneg %p624
        %p1182 = pneg %p648
        %p1183 = pneg %p645
        %p1184 = pneg %p669
        %p1185 = pneg %p666
        %p1186 = pneg %p690
        %p1187 = pneg %p687
        %p1188 = pneg %p711
        %p1189 = pneg %p708
        %p1190 = pneg %p737
        %p1191 = pneg %p734
        %s1192 = sand.u32 %s724, 1
        %s1193 = scalar_lea.sflag [#allocation4], %s1192
        %s1194 = sand.u32 %s724, 1
        %s1195 = smul.addr %s1194, 16
        %s1196 = scalar_lea.vmem [#allocation23], %s1195
        %p1197 = pneg %p763
        %p1198 = pneg %p760
        %s1199 = sand.u32 %s92, 1
        %s1200 = scalar_lea.sflag [#allocation25], %s1199
        %s1201 = sand.u32 %s750, 1
        %s1202 = smul.addr %s1201, 8
        %s1203 = scalar_lea.vmem [#allocation24], %s1202
        %p1204 = pneg %p789
        %p1205 = pneg %p786
        %s1206 = sand.u32 %s92, 1
        %s1207 = scalar_lea.sflag [#allocation25], %s1206
        %s1208 = sand.u32 %s776, 1
        %s1209 = smul.addr %s1208, 4
        %s1210 = scalar_lea.vmem [#allocation26], %s1209
        %v1211 = vld [vmem:[%s1054] sm:$0xff]
        %v1212 = vld [vmem:[%s1054 + $0x8] sm:$0xff]
        %v1213 = vld [vmem:[%s1063] sm:$0xff]
        %v1214 = vld [vmem:[%s1072] sm:$0xf]
        %v1215 = vld [vmem:[%s7] sm:$0xff]
        %v1216 = vld [vmem:[%s7 + $0x8] sm:$0xff]
        %v1217 = vld [vmem:[%s7 + $0x10] sm:$0xff]
        %v1218 = vld [vmem:[%s7 + $0x18] sm:$0xff]
        %v1219 = vld [vmem:[%s7 + $0x20] sm:$0xff]
        %v1220 = vld [vmem:[%s7 + $0x28] sm:$0xff]
        %v1221 = vld [vmem:[%s7 + $0x30] sm:$0xff]
        %v1222 = vld [vmem:[%s7 + $0x38] sm:$0xff]
        %v1223 = vld [vmem:[%s7 + $0x40] sm:$0xff]
        %v1224 = vld [vmem:[%s7 + $0x48] sm:$0xff]
        %v1225 = vld [vmem:[%s7 + $0x50] sm:$0xff]
        %v1226 = vld [vmem:[%s7 + $0x58] sm:$0xff]
        %v1227 = vld [vmem:[%s7 + $0x60] sm:$0xff]
        %v1228 = vld [vmem:[%s7 + $0x68] sm:$0xff]
        %v1229 = vld [vmem:[%s7 + $0x70] sm:$0xff]
        %v1230 = vld [vmem:[%s7 + $0x78] sm:$0xff]
        %v1231 = vld [vmem:[%s7 + $0x80] sm:$0xff]
        %v1232 = vld [vmem:[%s7 + $0x88] sm:$0xff]
        %v1233 = vld [vmem:[%s7 + $0x90] sm:$0xff]
        %v1234 = vld [vmem:[%s7 + $0x98] sm:$0xff]
        %v1235 = vld [vmem:[%s7 + $0xa0] sm:$0xff]
        %v1236 = vld [vmem:[%s7 + $0xa8] sm:$0xff]
        %v1237 = vld [vmem:[%s7 + $0xb0] sm:$0xff]
        %v1238 = vld [vmem:[%s7 + $0xb8] sm:$0xff]
        %v1239 = vld [vmem:[%s7 + $0xc0] sm:$0xff]
        %v1240 = vld [vmem:[%s7 + $0xc8] sm:$0xff]
        %v1241 = vld [vmem:[%s7 + $0xd0] sm:$0xff]
        %v1242 = vld [vmem:[%s7 + $0xd8] sm:$0xff]
        %v1243 = vld [vmem:[%s7 + $0xe0] sm:$0xff]
        %v1244 = vld [vmem:[%s7 + $0xe8] sm:$0xff]
        %v1245 = vld [vmem:[%s7 + $0xf0] sm:$0xff]
        %v1246 = vld [vmem:[%s7 + $0xf8] sm:$0xff]
        %v1247 = vld [vmem:[%s7 + $0x100] sm:$0xff]
        %v1248 = vld [vmem:[%s7 + $0x108] sm:$0xff]
        %v1249 = vld [vmem:[%s7 + $0x110] sm:$0xff]
        %v1250 = vld [vmem:[%s7 + $0x118] sm:$0xff]
        %v1251 = vld [vmem:[%s7 + $0x120] sm:$0xff]
        %v1252 = vld [vmem:[%s7 + $0x128] sm:$0xff]
        %v1253 = vld [vmem:[%s7 + $0x130] sm:$0xff]
        %v1254 = vld [vmem:[%s7 + $0x138] sm:$0xff]
        %v1255 = vld [vmem:[%s7 + $0x140] sm:$0xff]
        %v1256 = vld [vmem:[%s7 + $0x148] sm:$0xff]
        %v1257 = vld [vmem:[%s7 + $0x150] sm:$0xff]
        %v1258 = vld [vmem:[%s7 + $0x158] sm:$0xff]
        %v1259 = vld [vmem:[%s7 + $0x160] sm:$0xff]
        %v1260 = vld [vmem:[%s7 + $0x168] sm:$0xff]
        %v1261 = vld [vmem:[%s7 + $0x170] sm:$0xff]
        %v1262 = vld [vmem:[%s7 + $0x178] sm:$0xff]
        %v1263 = vld [vmem:[%s9] sm:$0x1]
        %v1264 = vld [vmem:[#allocation8] sm:$0xff]
        %v1265 = vld [vmem:[#allocation8 + $0x8] sm:$0xff]
        %v1266 = vld [vmem:[#allocation8 + $0x10] sm:$0xff]
        %v1267 = vld [vmem:[#allocation8 + $0x18] sm:$0xff]
        %v1268 = vld [vmem:[#allocation8 + $0x20] sm:$0xff]
        %v1269 = vld [vmem:[#allocation8 + $0x28] sm:$0xff]
        %v1270 = vld [vmem:[#allocation8 + $0x30] sm:$0xff]
        %v1271 = vld [vmem:[#allocation8 + $0x38] sm:$0xff]
        %v1272 = vld [vmem:[#allocation8 + $0x40] sm:$0xff]
        %v1273 = vld [vmem:[#allocation8 + $0x48] sm:$0xff]
        %v1274 = vld [vmem:[#allocation8 + $0x50] sm:$0xff]
        %v1275 = vld [vmem:[#allocation8 + $0x58] sm:$0xff]
        %v1276 = vld [vmem:[#allocation8 + $0x60] sm:$0xff]
        %v1277 = vld [vmem:[#allocation8 + $0x68] sm:$0xff]
        %v1278 = vld [vmem:[#allocation8 + $0x70] sm:$0xff]
        %v1279 = vld [vmem:[#allocation8 + $0x78] sm:$0xff]
        %v1280 = vld [vmem:[#allocation8 + $0x80] sm:$0xff]
        %v1281 = vld [vmem:[#allocation8 + $0x88] sm:$0xff]
        %v1282 = vld [vmem:[#allocation8 + $0x90] sm:$0xff]
        %v1283 = vld [vmem:[#allocation8 + $0x98] sm:$0xff]
        %v1284 = vld [vmem:[#allocation8 + $0xa0] sm:$0xff]
        %v1285 = vld [vmem:[#allocation8 + $0xa8] sm:$0xff]
        %v1286 = vld [vmem:[#allocation8 + $0xb0] sm:$0xff]
        %v1287 = vld [vmem:[#allocation8 + $0xb8] sm:$0xff]
        %v1288 = vld [vmem:[#allocation8 + $0xc0] sm:$0xff]
        %v1289 = vld [vmem:[#allocation8 + $0xc8] sm:$0xff]
        %v1290 = vld [vmem:[#allocation8 + $0xd0] sm:$0xff]
        %v1291 = vld [vmem:[#allocation8 + $0xd8] sm:$0xff]
        %v1292 = vld [vmem:[#allocation8 + $0xe0] sm:$0xff]
        %v1293 = vld [vmem:[#allocation8 + $0xe8] sm:$0xff]
        %v1294 = vld [vmem:[#allocation8 + $0xf0] sm:$0xff]
        %v1295 = vld [vmem:[#allocation8 + $0xf8] sm:$0xff]
        %v1296 = vld [vmem:[#allocation8 + $0x100] sm:$0xff]
        %v1297 = vld [vmem:[#allocation8 + $0x108] sm:$0xff]
        %v1298 = vld [vmem:[#allocation8 + $0x110] sm:$0xff]
        %v1299 = vld [vmem:[#allocation8 + $0x118] sm:$0xff]
        %v1300 = vld [vmem:[#allocation8 + $0x120] sm:$0xff]
        %v1301 = vld [vmem:[#allocation8 + $0x128] sm:$0xff]
        %v1302 = vld [vmem:[#allocation8 + $0x130] sm:$0xff]
        %v1303 = vld [vmem:[#allocation8 + $0x138] sm:$0xff]
        %v1304 = vld [vmem:[#allocation8 + $0x140] sm:$0xff]
        %v1305 = vld [vmem:[#allocation8 + $0x148] sm:$0xff]
        %v1306 = vld [vmem:[#allocation8 + $0x150] sm:$0xff]
        %v1307 = vld [vmem:[#allocation8 + $0x158] sm:$0xff]
        %v1308 = vld [vmem:[#allocation8 + $0x160] sm:$0xff]
        %v1309 = vld [vmem:[#allocation8 + $0x168] sm:$0xff]
        %v1310 = vld [vmem:[#allocation8 + $0x170] sm:$0xff]
        %v1311 = vld [vmem:[#allocation8 + $0x178] sm:$0xff]
        %v1312 = vld [vmem:[%s13] sm:$0x1]
        %vm1315 = vcmask 1040384
        %v1316 = vrot.slane %v1211, 7
        %v1317 = vrot.slane %v1212, 7
        %v1318 = vsel %vm1315, %v1316, %v1317
        %v1321 = vsel %vm1315, 0.0, %v1316
        %vm1322 = vcmask 1046528
        %v1323 = vrot.slane %v1211, 1
        %v1324 = vrot.slane %v1212, 1
        %v1325 = vsel %vm1322, %v1323, %v1324
        %v1328 = vsel %vm1322, %v1324, 0.0
        %1329 = vmatprep.subr.mxu0 0.0
        %1330 = vmatpush1.msra.mxu0 %v1246
        %1331 = vmatprep.subr.mxu0 0.0
        %1332 = vmatpush1.msra.mxu0 %v1245
        %1333 = vmatprep.subr.mxu0 0.0
        %1334 = vmatpush1.msra.mxu0 %v1244
        %1335 = vmatprep.subr.mxu0 0.0
        %1336 = vmatpush1.msra.mxu0 %v1243
        %1337 = vmatprep.subr.mxu0 0.0
        %1338 = vmatpush1.msra.mxu0 %v1242
        %1339 = vmatprep.subr.mxu0 0.0
        %1340 = vmatpush1.msra.mxu0 %v1241
        %1341 = vmatprep.subr.mxu0 0.0
        %1342 = vmatpush1.msra.mxu0 %v1240
        %1343 = vmatprep.subr.mxu0 0.0
        %1344 = vmatpush1.msra.mxu0 %v1239
        %1345 = vmatprep.subr.mxu0 0.0
        %1346 = vmatpush1.msra.mxu0 %v1238
        %1347 = vmatprep.subr.mxu0 0.0
        %1348 = vmatpush1.msra.mxu0 %v1237
        %1349 = vmatprep.subr.mxu0 0.0
        %1350 = vmatpush1.msra.mxu0 %v1236
        %1351 = vmatprep.subr.mxu0 0.0
        %1352 = vmatpush1.msra.mxu0 %v1235
        %1353 = vmatprep.subr.mxu0 0.0
        %1354 = vmatpush1.msra.mxu0 %v1234
        %1355 = vmatprep.subr.mxu0 0.0
        %1356 = vmatpush1.msra.mxu0 %v1233
        %1357 = vmatprep.subr.mxu0 0.0
        %1358 = vmatpush1.msra.mxu0 %v1232
        %1359 = vmatprep.subr.mxu0 0.0
        %1360 = vmatpush1.msra.mxu0 %v1231
        %1361 = vmatprep.subr.mxu0 0.0
        %1362 = vmatpush2.msra.mxu0 0.0
        %1363 = vmatprep.subr.mxu0 0.0
        %1364 = vmatpush2.msra.mxu0 0.0
        %1365 = vmatprep.subr.mxu0 0.0
        %1366 = vmatpush2.msra.mxu0 0.0
        %1367 = vmatprep.subr.mxu0 0.0
        %1368 = vmatpush2.msra.mxu0 0.0
        %1369 = vmatprep.subr.mxu0 0.0
        %1370 = vmatpush2.msra.mxu0 0.0
        %1371 = vmatprep.subr.mxu0 0.0
        %1372 = vmatpush2.msra.mxu0 0.0
        %1373 = vmatprep.subr.mxu0 0.0
        %1374 = vmatpush2.msra.mxu0 0.0
        %1375 = vmatprep.subr.mxu0 0.0
        %1376 = vmatpush2.msra.mxu0 0.0
        %1377 = vmatprep.subr.mxu0 0.0
        %1378 = vmatpush2.msra.mxu0 0.0
        %1379 = vmatprep.subr.mxu0 0.0
        %1380 = vmatpush2.msra.mxu0 0.0
        %1381 = vmatprep.subr.mxu0 0.0
        %1382 = vmatpush2.msra.mxu0 0.0
        %1383 = vmatprep.subr.mxu0 0.0
        %1384 = vmatpush2.msra.mxu0 0.0
        %1385 = vmatprep.subr.mxu0 0.0
        %1386 = vmatpush2.msra.mxu0 0.0
        %1387 = vmatprep.subr.mxu0 0.0
        %1388 = vmatpush2.msra.mxu0 0.0
        %1389 = vmatprep.subr.mxu0 0.0
        %1390 = vmatpush2.msra.mxu0 0.0
        %1391 = vmatprep.subr.mxu0 0.0
        %1392 = vmatpush2.msra.mxu0 0.0
        %1393 = vmatprep.mubr.f32.mxu0 0.0
        %1394 = vmatmul.mubr.f32.gmra.mxu0 %v1211
        %v1395 = vpop.f32.mrf.mxu0
        %v1396 = vadd.f32 0.0, %v1395
        %v1397 = vpop.f32.mrf.mxu0
        %1398 = vmatprep.mubr.f32.mxu0 0.0
        %1399 = vmatmul.mubr.f32.gmra.mxu0 %v1212
        %v1400 = vpop.f32.mrf.mxu0
        %v1401 = vadd.f32 0.0, %v1400
        %v1402 = vpop.f32.mrf.mxu0
        %1403 = vdwg.mxu0
        %1404 = vmatprep.subr.mxu0 0.0
        %1405 = vmatpush1.msra.mxu0 %v1230
        %1406 = vmatprep.subr.mxu0 0.0
        %1407 = vmatpush1.msra.mxu0 %v1229
        %1408 = vmatprep.subr.mxu0 0.0
        %1409 = vmatpush1.msra.mxu0 %v1228
        %1410 = vmatprep.subr.mxu0 0.0
        %1411 = vmatpush1.msra.mxu0 %v1227
        %1412 = vmatprep.subr.mxu0 0.0
        %1413 = vmatpush1.msra.mxu0 %v1226
        %1414 = vmatprep.subr.mxu0 0.0
        %1415 = vmatpush1.msra.mxu0 %v1225
        %1416 = vmatprep.subr.mxu0 0.0
        %1417 = vmatpush1.msra.mxu0 %v1224
        %1418 = vmatprep.subr.mxu0 0.0
        %1419 = vmatpush1.msra.mxu0 %v1223
        %1420 = vmatprep.subr.mxu0 0.0
        %1421 = vmatpush1.msra.mxu0 %v1222
        %1422 = vmatprep.subr.mxu0 0.0
        %1423 = vmatpush1.msra.mxu0 %v1221
        %1424 = vmatprep.subr.mxu0 0.0
        %1425 = vmatpush1.msra.mxu0 %v1220
        %1426 = vmatprep.subr.mxu0 0.0
        %1427 = vmatpush1.msra.mxu0 %v1219
        %1428 = vmatprep.subr.mxu0 0.0
        %1429 = vmatpush1.msra.mxu0 %v1218
        %1430 = vmatprep.subr.mxu0 0.0
        %1431 = vmatpush1.msra.mxu0 %v1217
        %1432 = vmatprep.subr.mxu0 0.0
        %1433 = vmatpush1.msra.mxu0 %v1216
        %1434 = vmatprep.subr.mxu0 0.0
        %1435 = vmatpush1.msra.mxu0 %v1215
        %1436 = vmatprep.subr.mxu0 0.0
        %1437 = vmatpush2.msra.mxu0 0.0
        %1438 = vmatprep.subr.mxu0 0.0
        %1439 = vmatpush2.msra.mxu0 0.0
        %1440 = vmatprep.subr.mxu0 0.0
        %1441 = vmatpush2.msra.mxu0 0.0
        %1442 = vmatprep.subr.mxu0 0.0
        %1443 = vmatpush2.msra.mxu0 0.0
        %1444 = vmatprep.subr.mxu0 0.0
        %1445 = vmatpush2.msra.mxu0 0.0
        %1446 = vmatprep.subr.mxu0 0.0
        %1447 = vmatpush2.msra.mxu0 0.0
        %1448 = vmatprep.subr.mxu0 0.0
        %1449 = vmatpush2.msra.mxu0 0.0
        %1450 = vmatprep.subr.mxu0 0.0
        %1451 = vmatpush2.msra.mxu0 0.0
        %1452 = vmatprep.subr.mxu0 0.0
        %1453 = vmatpush2.msra.mxu0 0.0
        %1454 = vmatprep.subr.mxu0 0.0
        %1455 = vmatpush2.msra.mxu0 0.0
        %1456 = vmatprep.subr.mxu0 0.0
        %1457 = vmatpush2.msra.mxu0 0.0
        %1458 = vmatprep.subr.mxu0 0.0
        %1459 = vmatpush2.msra.mxu0 0.0
        %1460 = vmatprep.subr.mxu0 0.0
        %1461 = vmatpush2.msra.mxu0 0.0
        %1462 = vmatprep.subr.mxu0 0.0
        %1463 = vmatpush2.msra.mxu0 0.0
        %1464 = vmatprep.subr.mxu0 0.0
        %1465 = vmatpush2.msra.mxu0 0.0
        %1466 = vmatprep.subr.mxu0 0.0
        %1467 = vmatpush2.msra.mxu0 0.0
        %1468 = vmatprep.mubr.f32.mxu0 0.0
        %1469 = vmatmul.mubr.f32.gmra.mxu0 %v1321
        %v1470 = vpop.f32.mrf.mxu0
        %v1471 = vadd.f32 %v1396, %v1470
        %v1472 = vpop.f32.mrf.mxu0
        %1473 = vmatprep.mubr.f32.mxu0 0.0
        %1474 = vmatmul.mubr.f32.gmra.mxu0 %v1318
        %v1475 = vpop.f32.mrf.mxu0
        %v1476 = vadd.f32 %v1401, %v1475
        %v1477 = vpop.f32.mrf.mxu0
        %1478 = vdwg.mxu0
        %1479 = vmatprep.subr.mxu0 0.0
        %1480 = vmatpush1.msra.mxu0 %v1262
        %1481 = vmatprep.subr.mxu0 0.0
        %1482 = vmatpush1.msra.mxu0 %v1261
        %1483 = vmatprep.subr.mxu0 0.0
        %1484 = vmatpush1.msra.mxu0 %v1260
        %1485 = vmatprep.subr.mxu0 0.0
        %1486 = vmatpush1.msra.mxu0 %v1259
        %1487 = vmatprep.subr.mxu0 0.0
        %1488 = vmatpush1.msra.mxu0 %v1258
        %1489 = vmatprep.subr.mxu0 0.0
        %1490 = vmatpush1.msra.mxu0 %v1257
        %1491 = vmatprep.subr.mxu0 0.0
        %1492 = vmatpush1.msra.mxu0 %v1256
        %1493 = vmatprep.subr.mxu0 0.0
        %1494 = vmatpush1.msra.mxu0 %v1255
        %1495 = vmatprep.subr.mxu0 0.0
        %1496 = vmatpush1.msra.mxu0 %v1254
        %1497 = vmatprep.subr.mxu0 0.0
        %1498 = vmatpush1.msra.mxu0 %v1253
        %1499 = vmatprep.subr.mxu0 0.0
        %1500 = vmatpush1.msra.mxu0 %v1252
        %1501 = vmatprep.subr.mxu0 0.0
        %1502 = vmatpush1.msra.mxu0 %v1251
        %1503 = vmatprep.subr.mxu0 0.0
        %1504 = vmatpush1.msra.mxu0 %v1250
        %1505 = vmatprep.subr.mxu0 0.0
        %1506 = vmatpush1.msra.mxu0 %v1249
        %1507 = vmatprep.subr.mxu0 0.0
        %1508 = vmatpush1.msra.mxu0 %v1248
        %1509 = vmatprep.subr.mxu0 0.0
        %1510 = vmatpush1.msra.mxu0 %v1247
        %1511 = vmatprep.subr.mxu0 0.0
        %1512 = vmatpush2.msra.mxu0 0.0
        %1513 = vmatprep.subr.mxu0 0.0
        %1514 = vmatpush2.msra.mxu0 0.0
        %1515 = vmatprep.subr.mxu0 0.0
        %1516 = vmatpush2.msra.mxu0 0.0
        %1517 = vmatprep.subr.mxu0 0.0
        %1518 = vmatpush2.msra.mxu0 0.0
        %1519 = vmatprep.subr.mxu0 0.0
        %1520 = vmatpush2.msra.mxu0 0.0
        %1521 = vmatprep.subr.mxu0 0.0
        %1522 = vmatpush2.msra.mxu0 0.0
        %1523 = vmatprep.subr.mxu0 0.0
        %1524 = vmatpush2.msra.mxu0 0.0
        %1525 = vmatprep.subr.mxu0 0.0
        %1526 = vmatpush2.msra.mxu0 0.0
        %1527 = vmatprep.subr.mxu0 0.0
        %1528 = vmatpush2.msra.mxu0 0.0
        %1529 = vmatprep.subr.mxu0 0.0
        %1530 = vmatpush2.msra.mxu0 0.0
        %1531 = vmatprep.subr.mxu0 0.0
        %1532 = vmatpush2.msra.mxu0 0.0
        %1533 = vmatprep.subr.mxu0 0.0
        %1534 = vmatpush2.msra.mxu0 0.0
        %1535 = vmatprep.subr.mxu0 0.0
        %1536 = vmatpush2.msra.mxu0 0.0
        %1537 = vmatprep.subr.mxu0 0.0
        %1538 = vmatpush2.msra.mxu0 0.0
        %1539 = vmatprep.subr.mxu0 0.0
        %1540 = vmatpush2.msra.mxu0 0.0
        %1541 = vmatprep.subr.mxu0 0.0
        %1542 = vmatpush2.msra.mxu0 0.0
        %1543 = vmatprep.mubr.f32.mxu0 0.0
        %1544 = vmatmul.mubr.f32.gmra.mxu0 %v1325
        %v1545 = vpop.f32.mrf.mxu0
        %v1546 = vadd.f32 0.0, %v1545
        %v1547 = vpop.f32.mrf.mxu0
        %1548 = vmatprep.mubr.f32.mxu0 0.0
        %1549 = vmatmul.mubr.f32.gmra.mxu0 %v1328
        %v1550 = vpop.f32.mrf.mxu0
        %v1551 = vadd.f32 0.0, %v1550
        %v1552 = vpop.f32.mrf.mxu0
        %1553 = vdwg.mxu0
        %v1554 = vadd.f32 %v1471, %v1546
        %v1555 = vadd.f32 %v1476, %v1551
        %v1557 = vlaneseq
        %v1558 = vshrl.u32 %v1557, 7
        %v1559 = vsub.s32 0, %v1558
        %v1560 = vrot.slane %v1263, %v1559
        %v1562 = vadd.f32 %v1554, %v1560
        %v1563 = vadd.f32 %v1555, %v1560
        %v1564 = vmax.f32 %v1562, 0.0
        %v1565 = vmax.f32 %v1563, 0.0
        %v1568 = vrot.slane %v1564, 7
        %v1569 = vrot.slane %v1565, 7
        %v1570 = vsel %vm1315, %v1568, %v1569
        %v1573 = vsel %vm1315, 0.0, %v1568
        %v1574 = vrot.slane %v1564, 1
        %v1575 = vrot.slane %v1565, 1
        %v1576 = vsel %vm1322, %v1574, %v1575
        %v1579 = vsel %vm1322, %v1575, 0.0
        %1580 = vmatprep.subr.mxu0 0.0
        %1581 = vmatpush1.msra.mxu0 %v1295
        %1582 = vmatprep.subr.mxu0 0.0
        %1583 = vmatpush1.msra.mxu0 %v1294
        %1584 = vmatprep.subr.mxu0 0.0
        %1585 = vmatpush1.msra.mxu0 %v1293
        %1586 = vmatprep.subr.mxu0 0.0
        %1587 = vmatpush1.msra.mxu0 %v1292
        %1588 = vmatprep.subr.mxu0 0.0
        %1589 = vmatpush1.msra.mxu0 %v1291
        %1590 = vmatprep.subr.mxu0 0.0
        %1591 = vmatpush1.msra.mxu0 %v1290
        %1592 = vmatprep.subr.mxu0 0.0
        %1593 = vmatpush1.msra.mxu0 %v1289
        %1594 = vmatprep.subr.mxu0 0.0
        %1595 = vmatpush1.msra.mxu0 %v1288
        %1596 = vmatprep.subr.mxu0 0.0
        %1597 = vmatpush1.msra.mxu0 %v1287
        %1598 = vmatprep.subr.mxu0 0.0
        %1599 = vmatpush1.msra.mxu0 %v1286
        %1600 = vmatprep.subr.mxu0 0.0
        %1601 = vmatpush1.msra.mxu0 %v1285
        %1602 = vmatprep.subr.mxu0 0.0
        %1603 = vmatpush1.msra.mxu0 %v1284
        %1604 = vmatprep.subr.mxu0 0.0
        %1605 = vmatpush1.msra.mxu0 %v1283
        %1606 = vmatprep.subr.mxu0 0.0
        %1607 = vmatpush1.msra.mxu0 %v1282
        %1608 = vmatprep.subr.mxu0 0.0
        %1609 = vmatpush1.msra.mxu0 %v1281
        %1610 = vmatprep.subr.mxu0 0.0
        %1611 = vmatpush1.msra.mxu0 %v1280
        %1612 = vmatprep.subr.mxu0 0.0
        %1613 = vmatpush2.msra.mxu0 0.0
        %1614 = vmatprep.subr.mxu0 0.0
        %1615 = vmatpush2.msra.mxu0 0.0
        %1616 = vmatprep.subr.mxu0 0.0
        %1617 = vmatpush2.msra.mxu0 0.0
        %1618 = vmatprep.subr.mxu0 0.0
        %1619 = vmatpush2.msra.mxu0 0.0
        %1620 = vmatprep.subr.mxu0 0.0
        %1621 = vmatpush2.msra.mxu0 0.0
        %1622 = vmatprep.subr.mxu0 0.0
        %1623 = vmatpush2.msra.mxu0 0.0
        %1624 = vmatprep.subr.mxu0 0.0
        %1625 = vmatpush2.msra.mxu0 0.0
        %1626 = vmatprep.subr.mxu0 0.0
        %1627 = vmatpush2.msra.mxu0 0.0
        %1628 = vmatprep.subr.mxu0 0.0
        %1629 = vmatpush2.msra.mxu0 0.0
        %1630 = vmatprep.subr.mxu0 0.0
        %1631 = vmatpush2.msra.mxu0 0.0
        %1632 = vmatprep.subr.mxu0 0.0
        %1633 = vmatpush2.msra.mxu0 0.0
        %1634 = vmatprep.subr.mxu0 0.0
        %1635 = vmatpush2.msra.mxu0 0.0
        %1636 = vmatprep.subr.mxu0 0.0
        %1637 = vmatpush2.msra.mxu0 0.0
        %1638 = vmatprep.subr.mxu0 0.0
        %1639 = vmatpush2.msra.mxu0 0.0
        %1640 = vmatprep.subr.mxu0 0.0
        %1641 = vmatpush2.msra.mxu0 0.0
        %1642 = vmatprep.subr.mxu0 0.0
        %1643 = vmatpush2.msra.mxu0 0.0
        %1644 = vmatprep.mubr.f32.mxu0 0.0
        %1645 = vmatmul.mubr.f32.gmra.mxu0 %v1564
        %v1646 = vpop.f32.mrf.mxu0
        %v1647 = vadd.f32 0.0, %v1646
        %v1648 = vpop.f32.mrf.mxu0
        %1649 = vmatprep.mubr.f32.mxu0 0.0
        %1650 = vmatmul.mubr.f32.gmra.mxu0 %v1565
        %v1651 = vpop.f32.mrf.mxu0
        %v1652 = vadd.f32 0.0, %v1651
        %v1653 = vpop.f32.mrf.mxu0
        %1654 = vdwg.mxu0
        %1655 = vmatprep.subr.mxu0 0.0
        %1656 = vmatpush1.msra.mxu0 %v1279
        %1657 = vmatprep.subr.mxu0 0.0
        %1658 = vmatpush1.msra.mxu0 %v1278
        %1659 = vmatprep.subr.mxu0 0.0
        %1660 = vmatpush1.msra.mxu0 %v1277
        %1661 = vmatprep.subr.mxu0 0.0
        %1662 = vmatpush1.msra.mxu0 %v1276
        %1663 = vmatprep.subr.mxu0 0.0
        %1664 = vmatpush1.msra.mxu0 %v1275
        %1665 = vmatprep.subr.mxu0 0.0
        %1666 = vmatpush1.msra.mxu0 %v1274
        %1667 = vmatprep.subr.mxu0 0.0
        %1668 = vmatpush1.msra.mxu0 %v1273
        %1669 = vmatprep.subr.mxu0 0.0
        %1670 = vmatpush1.msra.mxu0 %v1272
        %1671 = vmatprep.subr.mxu0 0.0
        %1672 = vmatpush1.msra.mxu0 %v1271
        %1673 = vmatprep.subr.mxu0 0.0
        %1674 = vmatpush1.msra.mxu0 %v1270
        %1675 = vmatprep.subr.mxu0 0.0
        %1676 = vmatpush1.msra.mxu0 %v1269
        %1677 = vmatprep.subr.mxu0 0.0
        %1678 = vmatpush1.msra.mxu0 %v1268
        %1679 = vmatprep.subr.mxu0 0.0
        %1680 = vmatpush1.msra.mxu0 %v1267
        %1681 = vmatprep.subr.mxu0 0.0
        %1682 = vmatpush1.msra.mxu0 %v1266
        %1683 = vmatprep.subr.mxu0 0.0
        %1684 = vmatpush1.msra.mxu0 %v1265
        %1685 = vmatprep.subr.mxu0 0.0
        %1686 = vmatpush1.msra.mxu0 %v1264
        %1687 = vmatprep.subr.mxu0 0.0
        %1688 = vmatpush2.msra.mxu0 0.0
        %1689 = vmatprep.subr.mxu0 0.0
        %1690 = vmatpush2.msra.mxu0 0.0
        %1691 = vmatprep.subr.mxu0 0.0
        %1692 = vmatpush2.msra.mxu0 0.0
        %1693 = vmatprep.subr.mxu0 0.0
        %1694 = vmatpush2.msra.mxu0 0.0
        %1695 = vmatprep.subr.mxu0 0.0
        %1696 = vmatpush2.msra.mxu0 0.0
        %1697 = vmatprep.subr.mxu0 0.0
        %1698 = vmatpush2.msra.mxu0 0.0
        %1699 = vmatprep.subr.mxu0 0.0
        %1700 = vmatpush2.msra.mxu0 0.0
        %1701 = vmatprep.subr.mxu0 0.0
        %1702 = vmatpush2.msra.mxu0 0.0
        %1703 = vmatprep.subr.mxu0 0.0
        %1704 = vmatpush2.msra.mxu0 0.0
        %1705 = vmatprep.subr.mxu0 0.0
        %1706 = vmatpush2.msra.mxu0 0.0
        %1707 = vmatprep.subr.mxu0 0.0
        %1708 = vmatpush2.msra.mxu0 0.0
        %1709 = vmatprep.subr.mxu0 0.0
        %1710 = vmatpush2.msra.mxu0 0.0
        %1711 = vmatprep.subr.mxu0 0.0
        %1712 = vmatpush2.msra.mxu0 0.0
        %1713 = vmatprep.subr.mxu0 0.0
        %1714 = vmatpush2.msra.mxu0 0.0
        %1715 = vmatprep.subr.mxu0 0.0
        %1716 = vmatpush2.msra.mxu0 0.0
        %1717 = vmatprep.subr.mxu0 0.0
        %1718 = vmatpush2.msra.mxu0 0.0
        %1719 = vmatprep.mubr.f32.mxu0 0.0
        %1720 = vmatmul.mubr.f32.gmra.mxu0 %v1573
        %v1721 = vpop.f32.mrf.mxu0
        %v1722 = vadd.f32 %v1647, %v1721
        %v1723 = vpop.f32.mrf.mxu0
        %1724 = vmatprep.mubr.f32.mxu0 0.0
        %1725 = vmatmul.mubr.f32.gmra.mxu0 %v1570
        %v1726 = vpop.f32.mrf.mxu0
        %v1727 = vadd.f32 %v1652, %v1726
        %v1728 = vpop.f32.mrf.mxu0
        %1729 = vdwg.mxu0
        %1730 = vmatprep.subr.mxu0 0.0
        %1731 = vmatpush1.msra.mxu0 %v1311
        %1732 = vmatprep.subr.mxu0 0.0
        %1733 = vmatpush1.msra.mxu0 %v1310
        %1734 = vmatprep.subr.mxu0 0.0
        %1735 = vmatpush1.msra.mxu0 %v1309
        %1736 = vmatprep.subr.mxu0 0.0
        %1737 = vmatpush1.msra.mxu0 %v1308
        %1738 = vmatprep.subr.mxu0 0.0
        %1739 = vmatpush1.msra.mxu0 %v1307
        %1740 = vmatprep.subr.mxu0 0.0
        %1741 = vmatpush1.msra.mxu0 %v1306
        %1742 = vmatprep.subr.mxu0 0.0
        %1743 = vmatpush1.msra.mxu0 %v1305
        %1744 = vmatprep.subr.mxu0 0.0
        %1745 = vmatpush1.msra.mxu0 %v1304
        %1746 = vmatprep.subr.mxu0 0.0
        %1747 = vmatpush1.msra.mxu0 %v1303
        %1748 = vmatprep.subr.mxu0 0.0
        %1749 = vmatpush1.msra.mxu0 %v1302
        %1750 = vmatprep.subr.mxu0 0.0
        %1751 = vmatpush1.msra.mxu0 %v1301
        %1752 = vmatprep.subr.mxu0 0.0
        %1753 = vmatpush1.msra.mxu0 %v1300
        %1754 = vmatprep.subr.mxu0 0.0
        %1755 = vmatpush1.msra.mxu0 %v1299
        %1756 = vmatprep.subr.mxu0 0.0
        %1757 = vmatpush1.msra.mxu0 %v1298
        %1758 = vmatprep.subr.mxu0 0.0
        %1759 = vmatpush1.msra.mxu0 %v1297
        %1760 = vmatprep.subr.mxu0 0.0
        %1761 = vmatpush1.msra.mxu0 %v1296
        %1762 = vmatprep.subr.mxu0 0.0
        %1763 = vmatpush2.msra.mxu0 0.0
        %1764 = vmatprep.subr.mxu0 0.0
        %1765 = vmatpush2.msra.mxu0 0.0
        %1766 = vmatprep.subr.mxu0 0.0
        %1767 = vmatpush2.msra.mxu0 0.0
        %1768 = vmatprep.subr.mxu0 0.0
        %1769 = vmatpush2.msra.mxu0 0.0
        %1770 = vmatprep.subr.mxu0 0.0
        %1771 = vmatpush2.msra.mxu0 0.0
        %1772 = vmatprep.subr.mxu0 0.0
        %1773 = vmatpush2.msra.mxu0 0.0
        %1774 = vmatprep.subr.mxu0 0.0
        %1775 = vmatpush2.msra.mxu0 0.0
        %1776 = vmatprep.subr.mxu0 0.0
        %1777 = vmatpush2.msra.mxu0 0.0
        %1778 = vmatprep.subr.mxu0 0.0
        %1779 = vmatpush2.msra.mxu0 0.0
        %1780 = vmatprep.subr.mxu0 0.0
        %1781 = vmatpush2.msra.mxu0 0.0
        %1782 = vmatprep.subr.mxu0 0.0
        %1783 = vmatpush2.msra.mxu0 0.0
        %1784 = vmatprep.subr.mxu0 0.0
        %1785 = vmatpush2.msra.mxu0 0.0
        %1786 = vmatprep.subr.mxu0 0.0
        %1787 = vmatpush2.msra.mxu0 0.0
        %1788 = vmatprep.subr.mxu0 0.0
        %1789 = vmatpush2.msra.mxu0 0.0
        %1790 = vmatprep.subr.mxu0 0.0
        %1791 = vmatpush2.msra.mxu0 0.0
        %1792 = vmatprep.subr.mxu0 0.0
        %1793 = vmatpush2.msra.mxu0 0.0
        %1794 = vmatprep.mubr.f32.mxu0 0.0
        %1795 = vmatmul.mubr.f32.gmra.mxu0 %v1576
        %v1796 = vpop.f32.mrf.mxu0
        %v1797 = vadd.f32 0.0, %v1796
        %v1798 = vpop.f32.mrf.mxu0
        %1799 = vmatprep.mubr.f32.mxu0 0.0
        %1800 = vmatmul.mubr.f32.gmra.mxu0 %v1579
        %v1801 = vpop.f32.mrf.mxu0
        %v1802 = vadd.f32 0.0, %v1801
        %v1803 = vpop.f32.mrf.mxu0
        %1804 = vdwg.mxu0
        %v1805 = vadd.f32 %v1722, %v1797
        %v1806 = vadd.f32 %v1727, %v1802
        %v1808 = vlaneseq
        %v1809 = vshrl.u32 %v1808, 7
        %v1810 = vsub.s32 0, %v1809
        %v1811 = vrot.slane %v1312, %v1810
        %v1813 = vadd.f32 %v1805, %v1811
        %v1814 = vadd.f32 %v1806, %v1811
        %v1815 = vadd.f32 %v1813, %v1211
        %v1816 = vadd.f32 %v1814, %v1212
        %v1817 = vmax.f32 %v1815, 0.0
        %v1818 = vmax.f32 %v1816, 0.0
        %v1819 = vld [vmem:[#allocation10] sm:$0xff]
        %v1820 = vld [vmem:[#allocation10 + $0x8] sm:$0xff]
        %v1821 = vld [vmem:[#allocation10 + $0x10] sm:$0xff]
        %v1822 = vld [vmem:[#allocation10 + $0x18] sm:$0xff]
        %v1823 = vld [vmem:[#allocation10 + $0x20] sm:$0xff]
        %v1824 = vld [vmem:[#allocation10 + $0x28] sm:$0xff]
        %v1825 = vld [vmem:[#allocation10 + $0x30] sm:$0xff]
        %v1826 = vld [vmem:[#allocation10 + $0x38] sm:$0xff]
        %v1827 = vld [vmem:[#allocation10 + $0x40] sm:$0xff]
        %v1828 = vld [vmem:[#allocation10 + $0x48] sm:$0xff]
        %v1829 = vld [vmem:[#allocation10 + $0x50] sm:$0xff]
        %v1830 = vld [vmem:[#allocation10 + $0x58] sm:$0xff]
        %v1831 = vld [vmem:[#allocation10 + $0x60] sm:$0xff]
        %v1832 = vld [vmem:[#allocation10 + $0x68] sm:$0xff]
        %v1833 = vld [vmem:[#allocation10 + $0x70] sm:$0xff]
        %v1834 = vld [vmem:[#allocation10 + $0x78] sm:$0xff]
        %v1835 = vld [vmem:[#allocation10 + $0x80] sm:$0xff]
        %v1836 = vld [vmem:[#allocation10 + $0x88] sm:$0xff]
        %v1837 = vld [vmem:[#allocation10 + $0x90] sm:$0xff]
        %v1838 = vld [vmem:[#allocation10 + $0x98] sm:$0xff]
        %v1839 = vld [vmem:[#allocation10 + $0xa0] sm:$0xff]
        %v1840 = vld [vmem:[#allocation10 + $0xa8] sm:$0xff]
        %v1841 = vld [vmem:[#allocation10 + $0xb0] sm:$0xff]
        %v1842 = vld [vmem:[#allocation10 + $0xb8] sm:$0xff]
        %v1843 = vld [vmem:[#allocation10 + $0xc0] sm:$0xff]
        %v1844 = vld [vmem:[#allocation10 + $0xc8] sm:$0xff]
        %v1845 = vld [vmem:[#allocation10 + $0xd0] sm:$0xff]
        %v1846 = vld [vmem:[#allocation10 + $0xd8] sm:$0xff]
        %v1847 = vld [vmem:[#allocation10 + $0xe0] sm:$0xff]
        %v1848 = vld [vmem:[#allocation10 + $0xe8] sm:$0xff]
        %v1849 = vld [vmem:[#allocation10 + $0xf0] sm:$0xff]
        %v1850 = vld [vmem:[#allocation10 + $0xf8] sm:$0xff]
        %v1851 = vld [vmem:[#allocation10 + $0x100] sm:$0xff]
        %v1852 = vld [vmem:[#allocation10 + $0x108] sm:$0xff]
        %v1853 = vld [vmem:[#allocation10 + $0x110] sm:$0xff]
        %v1854 = vld [vmem:[#allocation10 + $0x118] sm:$0xff]
        %v1855 = vld [vmem:[#allocation10 + $0x120] sm:$0xff]
        %v1856 = vld [vmem:[#allocation10 + $0x128] sm:$0xff]
        %v1857 = vld [vmem:[#allocation10 + $0x130] sm:$0xff]
        %v1858 = vld [vmem:[#allocation10 + $0x138] sm:$0xff]
        %v1859 = vld [vmem:[#allocation10 + $0x140] sm:$0xff]
        %v1860 = vld [vmem:[#allocation10 + $0x148] sm:$0xff]
        %v1861 = vld [vmem:[#allocation10 + $0x150] sm:$0xff]
        %v1862 = vld [vmem:[#allocation10 + $0x158] sm:$0xff]
        %v1863 = vld [vmem:[#allocation10 + $0x160] sm:$0xff]
        %v1864 = vld [vmem:[#allocation10 + $0x168] sm:$0xff]
        %v1865 = vld [vmem:[#allocation10 + $0x170] sm:$0xff]
        %v1866 = vld [vmem:[#allocation10 + $0x178] sm:$0xff]
        %v1867 = vld [vmem:[%s17] sm:$0x1]
        %v1868 = vld [vmem:[#allocation11] sm:$0xff]
        %v1869 = vld [vmem:[#allocation11 + $0x8] sm:$0xff]
        %v1870 = vld [vmem:[#allocation11 + $0x10] sm:$0xff]
        %v1871 = vld [vmem:[#allocation11 + $0x18] sm:$0xff]
        %v1872 = vld [vmem:[#allocation11 + $0x20] sm:$0xff]
        %v1873 = vld [vmem:[#allocation11 + $0x28] sm:$0xff]
        %v1874 = vld [vmem:[#allocation11 + $0x30] sm:$0xff]
        %v1875 = vld [vmem:[#allocation11 + $0x38] sm:$0xff]
        %v1876 = vld [vmem:[#allocation11 + $0x40] sm:$0xff]
        %v1877 = vld [vmem:[#allocation11 + $0x48] sm:$0xff]
        %v1878 = vld [vmem:[#allocation11 + $0x50] sm:$0xff]
        %v1879 = vld [vmem:[#allocation11 + $0x58] sm:$0xff]
        %v1880 = vld [vmem:[#allocation11 + $0x60] sm:$0xff]
        %v1881 = vld [vmem:[#allocation11 + $0x68] sm:$0xff]
        %v1882 = vld [vmem:[#allocation11 + $0x70] sm:$0xff]
        %v1883 = vld [vmem:[#allocation11 + $0x78] sm:$0xff]
        %v1884 = vld [vmem:[#allocation11 + $0x80] sm:$0xff]
        %v1885 = vld [vmem:[#allocation11 + $0x88] sm:$0xff]
        %v1886 = vld [vmem:[#allocation11 + $0x90] sm:$0xff]
        %v1887 = vld [vmem:[#allocation11 + $0x98] sm:$0xff]
        %v1888 = vld [vmem:[#allocation11 + $0xa0] sm:$0xff]
        %v1889 = vld [vmem:[#allocation11 + $0xa8] sm:$0xff]
        %v1890 = vld [vmem:[#allocation11 + $0xb0] sm:$0xff]
        %v1891 = vld [vmem:[#allocation11 + $0xb8] sm:$0xff]
        %v1892 = vld [vmem:[#allocation11 + $0xc0] sm:$0xff]
        %v1893 = vld [vmem:[#allocation11 + $0xc8] sm:$0xff]
        %v1894 = vld [vmem:[#allocation11 + $0xd0] sm:$0xff]
        %v1895 = vld [vmem:[#allocation11 + $0xd8] sm:$0xff]
        %v1896 = vld [vmem:[#allocation11 + $0xe0] sm:$0xff]
        %v1897 = vld [vmem:[#allocation11 + $0xe8] sm:$0xff]
        %v1898 = vld [vmem:[#allocation11 + $0xf0] sm:$0xff]
        %v1899 = vld [vmem:[#allocation11 + $0xf8] sm:$0xff]
        %v1900 = vld [vmem:[#allocation11 + $0x100] sm:$0xff]
        %v1901 = vld [vmem:[#allocation11 + $0x108] sm:$0xff]
        %v1902 = vld [vmem:[#allocation11 + $0x110] sm:$0xff]
        %v1903 = vld [vmem:[#allocation11 + $0x118] sm:$0xff]
        %v1904 = vld [vmem:[#allocation11 + $0x120] sm:$0xff]
        %v1905 = vld [vmem:[#allocation11 + $0x128] sm:$0xff]
        %v1906 = vld [vmem:[#allocation11 + $0x130] sm:$0xff]
        %v1907 = vld [vmem:[#allocation11 + $0x138] sm:$0xff]
        %v1908 = vld [vmem:[#allocation11 + $0x140] sm:$0xff]
        %v1909 = vld [vmem:[#allocation11 + $0x148] sm:$0xff]
        %v1910 = vld [vmem:[#allocation11 + $0x150] sm:$0xff]
        %v1911 = vld [vmem:[#allocation11 + $0x158] sm:$0xff]
        %v1912 = vld [vmem:[#allocation11 + $0x160] sm:$0xff]
        %v1913 = vld [vmem:[#allocation11 + $0x168] sm:$0xff]
        %v1914 = vld [vmem:[#allocation11 + $0x170] sm:$0xff]
        %v1915 = vld [vmem:[#allocation11 + $0x178] sm:$0xff]
        %v1916 = vld [vmem:[%s21] sm:$0x1]
        %v1918 = vrot.slane %v1213, 7
        %v1920 = vsel %vm1315, 0.0, %v1918
        %v1921 = vrot.slane %v1213, 1
        %v1923 = vsel %vm1322, %v1921, 0.0
        %1924 = vmatprep.subr.mxu0 0.0
        %1925 = vmatpush1.msra.mxu0 %v1850
        %1926 = vmatprep.subr.mxu0 0.0
        %1927 = vmatpush1.msra.mxu0 %v1849
        %1928 = vmatprep.subr.mxu0 0.0
        %1929 = vmatpush1.msra.mxu0 %v1848
        %1930 = vmatprep.subr.mxu0 0.0
        %1931 = vmatpush1.msra.mxu0 %v1847
        %1932 = vmatprep.subr.mxu0 0.0
        %1933 = vmatpush1.msra.mxu0 %v1846
        %1934 = vmatprep.subr.mxu0 0.0
        %1935 = vmatpush1.msra.mxu0 %v1845
        %1936 = vmatprep.subr.mxu0 0.0
        %1937 = vmatpush1.msra.mxu0 %v1844
        %1938 = vmatprep.subr.mxu0 0.0
        %1939 = vmatpush1.msra.mxu0 %v1843
        %1940 = vmatprep.subr.mxu0 0.0
        %1941 = vmatpush1.msra.mxu0 %v1842
        %1942 = vmatprep.subr.mxu0 0.0
        %1943 = vmatpush1.msra.mxu0 %v1841
        %1944 = vmatprep.subr.mxu0 0.0
        %1945 = vmatpush1.msra.mxu0 %v1840
        %1946 = vmatprep.subr.mxu0 0.0
        %1947 = vmatpush1.msra.mxu0 %v1839
        %1948 = vmatprep.subr.mxu0 0.0
        %1949 = vmatpush1.msra.mxu0 %v1838
        %1950 = vmatprep.subr.mxu0 0.0
        %1951 = vmatpush1.msra.mxu0 %v1837
        %1952 = vmatprep.subr.mxu0 0.0
        %1953 = vmatpush1.msra.mxu0 %v1836
        %1954 = vmatprep.subr.mxu0 0.0
        %1955 = vmatpush1.msra.mxu0 %v1835
        %1956 = vmatprep.subr.mxu0 0.0
        %1957 = vmatpush2.msra.mxu0 0.0
        %1958 = vmatprep.subr.mxu0 0.0
        %1959 = vmatpush2.msra.mxu0 0.0
        %1960 = vmatprep.subr.mxu0 0.0
        %1961 = vmatpush2.msra.mxu0 0.0
        %1962 = vmatprep.subr.mxu0 0.0
        %1963 = vmatpush2.msra.mxu0 0.0
        %1964 = vmatprep.subr.mxu0 0.0
        %1965 = vmatpush2.msra.mxu0 0.0
        %1966 = vmatprep.subr.mxu0 0.0
        %1967 = vmatpush2.msra.mxu0 0.0
        %1968 = vmatprep.subr.mxu0 0.0
        %1969 = vmatpush2.msra.mxu0 0.0
        %1970 = vmatprep.subr.mxu0 0.0
        %1971 = vmatpush2.msra.mxu0 0.0
        %1972 = vmatprep.subr.mxu0 0.0
        %1973 = vmatpush2.msra.mxu0 0.0
        %1974 = vmatprep.subr.mxu0 0.0
        %1975 = vmatpush2.msra.mxu0 0.0
        %1976 = vmatprep.subr.mxu0 0.0
        %1977 = vmatpush2.msra.mxu0 0.0
        %1978 = vmatprep.subr.mxu0 0.0
        %1979 = vmatpush2.msra.mxu0 0.0
        %1980 = vmatprep.subr.mxu0 0.0
        %1981 = vmatpush2.msra.mxu0 0.0
        %1982 = vmatprep.subr.mxu0 0.0
        %1983 = vmatpush2.msra.mxu0 0.0
        %1984 = vmatprep.subr.mxu0 0.0
        %1985 = vmatpush2.msra.mxu0 0.0
        %1986 = vmatprep.subr.mxu0 0.0
        %1987 = vmatpush2.msra.mxu0 0.0
        %1988 = vmatprep.mubr.f32.mxu0 0.0
        %1989 = vmatmul.mubr.f32.gmra.mxu0 %v1213
        %v1990 = vpop.f32.mrf.mxu0
        %v1991 = vadd.f32 0.0, %v1990
        %v1992 = vpop.f32.mrf.mxu0
        %1993 = vdwg.mxu0
        %1994 = vmatprep.subr.mxu0 0.0
        %1995 = vmatpush1.msra.mxu0 %v1834
        %1996 = vmatprep.subr.mxu0 0.0
        %1997 = vmatpush1.msra.mxu0 %v1833
        %1998 = vmatprep.subr.mxu0 0.0
        %1999 = vmatpush1.msra.mxu0 %v1832
        %2000 = vmatprep.subr.mxu0 0.0
        %2001 = vmatpush1.msra.mxu0 %v1831
        %2002 = vmatprep.subr.mxu0 0.0
        %2003 = vmatpush1.msra.mxu0 %v1830
        %2004 = vmatprep.subr.mxu0 0.0
        %2005 = vmatpush1.msra.mxu0 %v1829
        %2006 = vmatprep.subr.mxu0 0.0
        %2007 = vmatpush1.msra.mxu0 %v1828
        %2008 = vmatprep.subr.mxu0 0.0
        %2009 = vmatpush1.msra.mxu0 %v1827
        %2010 = vmatprep.subr.mxu0 0.0
        %2011 = vmatpush1.msra.mxu0 %v1826
        %2012 = vmatprep.subr.mxu0 0.0
        %2013 = vmatpush1.msra.mxu0 %v1825
        %2014 = vmatprep.subr.mxu0 0.0
        %2015 = vmatpush1.msra.mxu0 %v1824
        %2016 = vmatprep.subr.mxu0 0.0
        %2017 = vmatpush1.msra.mxu0 %v1823
        %2018 = vmatprep.subr.mxu0 0.0
        %2019 = vmatpush1.msra.mxu0 %v1822
        %2020 = vmatprep.subr.mxu0 0.0
        %2021 = vmatpush1.msra.mxu0 %v1821
        %2022 = vmatprep.subr.mxu0 0.0
        %2023 = vmatpush1.msra.mxu0 %v1820
        %2024 = vmatprep.subr.mxu0 0.0
        %2025 = vmatpush1.msra.mxu0 %v1819
        %2026 = vmatprep.subr.mxu0 0.0
        %2027 = vmatpush2.msra.mxu0 0.0
        %2028 = vmatprep.subr.mxu0 0.0
        %2029 = vmatpush2.msra.mxu0 0.0
        %2030 = vmatprep.subr.mxu0 0.0
        %2031 = vmatpush2.msra.mxu0 0.0
        %2032 = vmatprep.subr.mxu0 0.0
        %2033 = vmatpush2.msra.mxu0 0.0
        %2034 = vmatprep.subr.mxu0 0.0
        %2035 = vmatpush2.msra.mxu0 0.0
        %2036 = vmatprep.subr.mxu0 0.0
        %2037 = vmatpush2.msra.mxu0 0.0
        %2038 = vmatprep.subr.mxu0 0.0
        %2039 = vmatpush2.msra.mxu0 0.0
        %2040 = vmatprep.subr.mxu0 0.0
        %2041 = vmatpush2.msra.mxu0 0.0
        %2042 = vmatprep.subr.mxu0 0.0
        %2043 = vmatpush2.msra.mxu0 0.0
        %2044 = vmatprep.subr.mxu0 0.0
        %2045 = vmatpush2.msra.mxu0 0.0
        %2046 = vmatprep.subr.mxu0 0.0
        %2047 = vmatpush2.msra.mxu0 0.0
        %2048 = vmatprep.subr.mxu0 0.0
        %2049 = vmatpush2.msra.mxu0 0.0
        %2050 = vmatprep.subr.mxu0 0.0
        %2051 = vmatpush2.msra.mxu0 0.0
        %2052 = vmatprep.subr.mxu0 0.0
        %2053 = vmatpush2.msra.mxu0 0.0
        %2054 = vmatprep.subr.mxu0 0.0
        %2055 = vmatpush2.msra.mxu0 0.0
        %2056 = vmatprep.subr.mxu0 0.0
        %2057 = vmatpush2.msra.mxu0 0.0
        %2058 = vmatprep.mubr.f32.mxu0 0.0
        %2059 = vmatmul.mubr.f32.gmra.mxu0 %v1920
        %v2060 = vpop.f32.mrf.mxu0
        %v2061 = vadd.f32 %v1991, %v2060
        %v2062 = vpop.f32.mrf.mxu0
        %2063 = vdwg.mxu0
        %2064 = vmatprep.subr.mxu0 0.0
        %2065 = vmatpush1.msra.mxu0 %v1866
        %2066 = vmatprep.subr.mxu0 0.0
        %2067 = vmatpush1.msra.mxu0 %v1865
        %2068 = vmatprep.subr.mxu0 0.0
        %2069 = vmatpush1.msra.mxu0 %v1864
        %2070 = vmatprep.subr.mxu0 0.0
        %2071 = vmatpush1.msra.mxu0 %v1863
        %2072 = vmatprep.subr.mxu0 0.0
        %2073 = vmatpush1.msra.mxu0 %v1862
        %2074 = vmatprep.subr.mxu0 0.0
        %2075 = vmatpush1.msra.mxu0 %v1861
        %2076 = vmatprep.subr.mxu0 0.0
        %2077 = vmatpush1.msra.mxu0 %v1860
        %2078 = vmatprep.subr.mxu0 0.0
        %2079 = vmatpush1.msra.mxu0 %v1859
        %2080 = vmatprep.subr.mxu0 0.0
        %2081 = vmatpush1.msra.mxu0 %v1858
        %2082 = vmatprep.subr.mxu0 0.0
        %2083 = vmatpush1.msra.mxu0 %v1857
        %2084 = vmatprep.subr.mxu0 0.0
        %2085 = vmatpush1.msra.mxu0 %v1856
        %2086 = vmatprep.subr.mxu0 0.0
        %2087 = vmatpush1.msra.mxu0 %v1855
        %2088 = vmatprep.subr.mxu0 0.0
        %2089 = vmatpush1.msra.mxu0 %v1854
        %2090 = vmatprep.subr.mxu0 0.0
        %2091 = vmatpush1.msra.mxu0 %v1853
        %2092 = vmatprep.subr.mxu0 0.0
        %2093 = vmatpush1.msra.mxu0 %v1852
        %2094 = vmatprep.subr.mxu0 0.0
        %2095 = vmatpush1.msra.mxu0 %v1851
        %2096 = vmatprep.subr.mxu0 0.0
        %2097 = vmatpush2.msra.mxu0 0.0
        %2098 = vmatprep.subr.mxu0 0.0
        %2099 = vmatpush2.msra.mxu0 0.0
        %2100 = vmatprep.subr.mxu0 0.0
        %2101 = vmatpush2.msra.mxu0 0.0
        %2102 = vmatprep.subr.mxu0 0.0
        %2103 = vmatpush2.msra.mxu0 0.0
        %2104 = vmatprep.subr.mxu0 0.0
        %2105 = vmatpush2.msra.mxu0 0.0
        %2106 = vmatprep.subr.mxu0 0.0
        %2107 = vmatpush2.msra.mxu0 0.0
        %2108 = vmatprep.subr.mxu0 0.0
        %2109 = vmatpush2.msra.mxu0 0.0
        %2110 = vmatprep.subr.mxu0 0.0
        %2111 = vmatpush2.msra.mxu0 0.0
        %2112 = vmatprep.subr.mxu0 0.0
        %2113 = vmatpush2.msra.mxu0 0.0
        %2114 = vmatprep.subr.mxu0 0.0
        %2115 = vmatpush2.msra.mxu0 0.0
        %2116 = vmatprep.subr.mxu0 0.0
        %2117 = vmatpush2.msra.mxu0 0.0
        %2118 = vmatprep.subr.mxu0 0.0
        %2119 = vmatpush2.msra.mxu0 0.0
        %2120 = vmatprep.subr.mxu0 0.0
        %2121 = vmatpush2.msra.mxu0 0.0
        %2122 = vmatprep.subr.mxu0 0.0
        %2123 = vmatpush2.msra.mxu0 0.0
        %2124 = vmatprep.subr.mxu0 0.0
        %2125 = vmatpush2.msra.mxu0 0.0
        %2126 = vmatprep.subr.mxu0 0.0
        %2127 = vmatpush2.msra.mxu0 0.0
        %2128 = vmatprep.mubr.f32.mxu0 0.0
        %2129 = vmatmul.mubr.f32.gmra.mxu0 %v1923
        %v2130 = vpop.f32.mrf.mxu0
        %v2131 = vadd.f32 0.0, %v2130
        %v2132 = vpop.f32.mrf.mxu0
        %2133 = vdwg.mxu0
        %v2134 = vadd.f32 %v2061, %v2131
        %v2136 = vlaneseq
        %v2137 = vshrl.u32 %v2136, 7
        %v2138 = vsub.s32 0, %v2137
        %v2139 = vrot.slane %v1867, %v2138
        %v2141 = vadd.f32 %v2134, %v2139
        %v2142 = vmax.f32 %v2141, 0.0
        %v2144 = vrot.slane %v2142, 7
        %v2146 = vsel %vm1315, 0.0, %v2144
        %v2147 = vrot.slane %v2142, 1
        %v2149 = vsel %vm1322, %v2147, 0.0
        %2150 = vmatprep.subr.mxu0 0.0
        %2151 = vmatpush1.msra.mxu0 %v1899
        %2152 = vmatprep.subr.mxu0 0.0
        %2153 = vmatpush1.msra.mxu0 %v1898
        %2154 = vmatprep.subr.mxu0 0.0
        %2155 = vmatpush1.msra.mxu0 %v1897
        %2156 = vmatprep.subr.mxu0 0.0
        %2157 = vmatpush1.msra.mxu0 %v1896
        %2158 = vmatprep.subr.mxu0 0.0
        %2159 = vmatpush1.msra.mxu0 %v1895
        %2160 = vmatprep.subr.mxu0 0.0
        %2161 = vmatpush1.msra.mxu0 %v1894
        %2162 = vmatprep.subr.mxu0 0.0
        %2163 = vmatpush1.msra.mxu0 %v1893
        %2164 = vmatprep.subr.mxu0 0.0
        %2165 = vmatpush1.msra.mxu0 %v1892
        %2166 = vmatprep.subr.mxu0 0.0
        %2167 = vmatpush1.msra.mxu0 %v1891
        %2168 = vmatprep.subr.mxu0 0.0
        %2169 = vmatpush1.msra.mxu0 %v1890
        %2170 = vmatprep.subr.mxu0 0.0
        %2171 = vmatpush1.msra.mxu0 %v1889
        %2172 = vmatprep.subr.mxu0 0.0
        %2173 = vmatpush1.msra.mxu0 %v1888
        %2174 = vmatprep.subr.mxu0 0.0
        %2175 = vmatpush1.msra.mxu0 %v1887
        %2176 = vmatprep.subr.mxu0 0.0
        %2177 = vmatpush1.msra.mxu0 %v1886
        %2178 = vmatprep.subr.mxu0 0.0
        %2179 = vmatpush1.msra.mxu0 %v1885
        %2180 = vmatprep.subr.mxu0 0.0
        %2181 = vmatpush1.msra.mxu0 %v1884
        %2182 = vmatprep.subr.mxu0 0.0
        %2183 = vmatpush2.msra.mxu0 0.0
        %2184 = vmatprep.subr.mxu0 0.0
        %2185 = vmatpush2.msra.mxu0 0.0
        %2186 = vmatprep.subr.mxu0 0.0
        %2187 = vmatpush2.msra.mxu0 0.0
        %2188 = vmatprep.subr.mxu0 0.0
        %2189 = vmatpush2.msra.mxu0 0.0
        %2190 = vmatprep.subr.mxu0 0.0
        %2191 = vmatpush2.msra.mxu0 0.0
        %2192 = vmatprep.subr.mxu0 0.0
        %2193 = vmatpush2.msra.mxu0 0.0
        %2194 = vmatprep.subr.mxu0 0.0
        %2195 = vmatpush2.msra.mxu0 0.0
        %2196 = vmatprep.subr.mxu0 0.0
        %2197 = vmatpush2.msra.mxu0 0.0
        %2198 = vmatprep.subr.mxu0 0.0
        %2199 = vmatpush2.msra.mxu0 0.0
        %2200 = vmatprep.subr.mxu0 0.0
        %2201 = vmatpush2.msra.mxu0 0.0
        %2202 = vmatprep.subr.mxu0 0.0
        %2203 = vmatpush2.msra.mxu0 0.0
        %2204 = vmatprep.subr.mxu0 0.0
        %2205 = vmatpush2.msra.mxu0 0.0
        %2206 = vmatprep.subr.mxu0 0.0
        %2207 = vmatpush2.msra.mxu0 0.0
        %2208 = vmatprep.subr.mxu0 0.0
        %2209 = vmatpush2.msra.mxu0 0.0
        %2210 = vmatprep.subr.mxu0 0.0
        %2211 = vmatpush2.msra.mxu0 0.0
        %2212 = vmatprep.subr.mxu0 0.0
        %2213 = vmatpush2.msra.mxu0 0.0
        %2214 = vmatprep.mubr.f32.mxu0 0.0
        %2215 = vmatmul.mubr.f32.gmra.mxu0 %v2142
        %v2216 = vpop.f32.mrf.mxu0
        %v2217 = vadd.f32 0.0, %v2216
        %v2218 = vpop.f32.mrf.mxu0
        %2219 = vdwg.mxu0
        %2220 = vmatprep.subr.mxu0 0.0
        %2221 = vmatpush1.msra.mxu0 %v1883
        %2222 = vmatprep.subr.mxu0 0.0
        %2223 = vmatpush1.msra.mxu0 %v1882
        %2224 = vmatprep.subr.mxu0 0.0
        %2225 = vmatpush1.msra.mxu0 %v1881
        %2226 = vmatprep.subr.mxu0 0.0
        %2227 = vmatpush1.msra.mxu0 %v1880
        %2228 = vmatprep.subr.mxu0 0.0
        %2229 = vmatpush1.msra.mxu0 %v1879
        %2230 = vmatprep.subr.mxu0 0.0
        %2231 = vmatpush1.msra.mxu0 %v1878
        %2232 = vmatprep.subr.mxu0 0.0
        %2233 = vmatpush1.msra.mxu0 %v1877
        %2234 = vmatprep.subr.mxu0 0.0
        %2235 = vmatpush1.msra.mxu0 %v1876
        %2236 = vmatprep.subr.mxu0 0.0
        %2237 = vmatpush1.msra.mxu0 %v1875
        %2238 = vmatprep.subr.mxu0 0.0
        %2239 = vmatpush1.msra.mxu0 %v1874
        %2240 = vmatprep.subr.mxu0 0.0
        %2241 = vmatpush1.msra.mxu0 %v1873
        %2242 = vmatprep.subr.mxu0 0.0
        %2243 = vmatpush1.msra.mxu0 %v1872
        %2244 = vmatprep.subr.mxu0 0.0
        %2245 = vmatpush1.msra.mxu0 %v1871
        %2246 = vmatprep.subr.mxu0 0.0
        %2247 = vmatpush1.msra.mxu0 %v1870
        %2248 = vmatprep.subr.mxu0 0.0
        %2249 = vmatpush1.msra.mxu0 %v1869
        %2250 = vmatprep.subr.mxu0 0.0
        %2251 = vmatpush1.msra.mxu0 %v1868
        %2252 = vmatprep.subr.mxu0 0.0
        %2253 = vmatpush2.msra.mxu0 0.0
        %2254 = vmatprep.subr.mxu0 0.0
        %2255 = vmatpush2.msra.mxu0 0.0
        %2256 = vmatprep.subr.mxu0 0.0
        %2257 = vmatpush2.msra.mxu0 0.0
        %2258 = vmatprep.subr.mxu0 0.0
        %2259 = vmatpush2.msra.mxu0 0.0
        %2260 = vmatprep.subr.mxu0 0.0
        %2261 = vmatpush2.msra.mxu0 0.0
        %2262 = vmatprep.subr.mxu0 0.0
        %2263 = vmatpush2.msra.mxu0 0.0
        %2264 = vmatprep.subr.mxu0 0.0
        %2265 = vmatpush2.msra.mxu0 0.0
        %2266 = vmatprep.subr.mxu0 0.0
        %2267 = vmatpush2.msra.mxu0 0.0
        %2268 = vmatprep.subr.mxu0 0.0
        %2269 = vmatpush2.msra.mxu0 0.0
        %2270 = vmatprep.subr.mxu0 0.0
        %2271 = vmatpush2.msra.mxu0 0.0
        %2272 = vmatprep.subr.mxu0 0.0
        %2273 = vmatpush2.msra.mxu0 0.0
        %2274 = vmatprep.subr.mxu0 0.0
        %2275 = vmatpush2.msra.mxu0 0.0
        %2276 = vmatprep.subr.mxu0 0.0
        %2277 = vmatpush2.msra.mxu0 0.0
        %2278 = vmatprep.subr.mxu0 0.0
        %2279 = vmatpush2.msra.mxu0 0.0
        %2280 = vmatprep.subr.mxu0 0.0
        %2281 = vmatpush2.msra.mxu0 0.0
        %2282 = vmatprep.subr.mxu0 0.0
        %2283 = vmatpush2.msra.mxu0 0.0
        %2284 = vmatprep.mubr.f32.mxu0 0.0
        %2285 = vmatmul.mubr.f32.gmra.mxu0 %v2146
        %v2286 = vpop.f32.mrf.mxu0
        %v2287 = vadd.f32 %v2217, %v2286
        %v2288 = vpop.f32.mrf.mxu0
        %2289 = vdwg.mxu0
        %2290 = vmatprep.subr.mxu0 0.0
        %2291 = vmatpush1.msra.mxu0 %v1915
        %2292 = vmatprep.subr.mxu0 0.0
        %2293 = vmatpush1.msra.mxu0 %v1914
        %2294 = vmatprep.subr.mxu0 0.0
        %2295 = vmatpush1.msra.mxu0 %v1913
        %2296 = vmatprep.subr.mxu0 0.0
        %2297 = vmatpush1.msra.mxu0 %v1912
        %2298 = vmatprep.subr.mxu0 0.0
        %2299 = vmatpush1.msra.mxu0 %v1911
        %2300 = vmatprep.subr.mxu0 0.0
        %2301 = vmatpush1.msra.mxu0 %v1910
        %2302 = vmatprep.subr.mxu0 0.0
        %2303 = vmatpush1.msra.mxu0 %v1909
        %2304 = vmatprep.subr.mxu0 0.0
        %2305 = vmatpush1.msra.mxu0 %v1908
        %2306 = vmatprep.subr.mxu0 0.0
        %2307 = vmatpush1.msra.mxu0 %v1907
        %2308 = vmatprep.subr.mxu0 0.0
        %2309 = vmatpush1.msra.mxu0 %v1906
        %2310 = vmatprep.subr.mxu0 0.0
        %2311 = vmatpush1.msra.mxu0 %v1905
        %2312 = vmatprep.subr.mxu0 0.0
        %2313 = vmatpush1.msra.mxu0 %v1904
        %2314 = vmatprep.subr.mxu0 0.0
        %2315 = vmatpush1.msra.mxu0 %v1903
        %2316 = vmatprep.subr.mxu0 0.0
        %2317 = vmatpush1.msra.mxu0 %v1902
        %2318 = vmatprep.subr.mxu0 0.0
        %2319 = vmatpush1.msra.mxu0 %v1901
        %2320 = vmatprep.subr.mxu0 0.0
        %2321 = vmatpush1.msra.mxu0 %v1900
        %2322 = vmatprep.subr.mxu0 0.0
        %2323 = vmatpush2.msra.mxu0 0.0
        %2324 = vmatprep.subr.mxu0 0.0
        %2325 = vmatpush2.msra.mxu0 0.0
        %2326 = vmatprep.subr.mxu0 0.0
        %2327 = vmatpush2.msra.mxu0 0.0
        %2328 = vmatprep.subr.mxu0 0.0
        %2329 = vmatpush2.msra.mxu0 0.0
        %2330 = vmatprep.subr.mxu0 0.0
        %2331 = vmatpush2.msra.mxu0 0.0
        %2332 = vmatprep.subr.mxu0 0.0
        %2333 = vmatpush2.msra.mxu0 0.0
        %2334 = vmatprep.subr.mxu0 0.0
        %2335 = vmatpush2.msra.mxu0 0.0
        %2336 = vmatprep.subr.mxu0 0.0
        %2337 = vmatpush2.msra.mxu0 0.0
        %2338 = vmatprep.subr.mxu0 0.0
        %2339 = vmatpush2.msra.mxu0 0.0
        %2340 = vmatprep.subr.mxu0 0.0
        %2341 = vmatpush2.msra.mxu0 0.0
        %2342 = vmatprep.subr.mxu0 0.0
        %2343 = vmatpush2.msra.mxu0 0.0
        %2344 = vmatprep.subr.mxu0 0.0
        %2345 = vmatpush2.msra.mxu0 0.0
        %2346 = vmatprep.subr.mxu0 0.0
        %2347 = vmatpush2.msra.mxu0 0.0
        %2348 = vmatprep.subr.mxu0 0.0
        %2349 = vmatpush2.msra.mxu0 0.0
        %2350 = vmatprep.subr.mxu0 0.0
        %2351 = vmatpush2.msra.mxu0 0.0
        %2352 = vmatprep.subr.mxu0 0.0
        %2353 = vmatpush2.msra.mxu0 0.0
        %2354 = vmatprep.mubr.f32.mxu0 0.0
        %2355 = vmatmul.mubr.f32.gmra.mxu0 %v2149
        %v2356 = vpop.f32.mrf.mxu0
        %v2357 = vadd.f32 0.0, %v2356
        %v2358 = vpop.f32.mrf.mxu0
        %2359 = vdwg.mxu0
        %v2360 = vadd.f32 %v2287, %v2357
        %v2362 = vlaneseq
        %v2363 = vshrl.u32 %v2362, 7
        %v2364 = vsub.s32 0, %v2363
        %v2365 = vrot.slane %v1916, %v2364
        %v2367 = vadd.f32 %v2360, %v2365
        %v2368 = vadd.f32 %v2367, %v1213
        %v2369 = vmax.f32 %v2368, 0.0
        %v2370 = vld [vmem:[#allocation13] sm:$0xff]
        %v2371 = vld [vmem:[#allocation13 + $0x8] sm:$0xff]
        %v2372 = vld [vmem:[#allocation13 + $0x10] sm:$0xff]
        %v2373 = vld [vmem:[#allocation13 + $0x18] sm:$0xff]
        %v2374 = vld [vmem:[#allocation13 + $0x20] sm:$0xff]
        %v2375 = vld [vmem:[#allocation13 + $0x28] sm:$0xff]
        %v2376 = vld [vmem:[#allocation13 + $0x30] sm:$0xff]
        %v2377 = vld [vmem:[#allocation13 + $0x38] sm:$0xff]
        %v2378 = vld [vmem:[#allocation13 + $0x40] sm:$0xff]
        %v2379 = vld [vmem:[#allocation13 + $0x48] sm:$0xff]
        %v2380 = vld [vmem:[#allocation13 + $0x50] sm:$0xff]
        %v2381 = vld [vmem:[#allocation13 + $0x58] sm:$0xff]
        %v2382 = vld [vmem:[#allocation13 + $0x60] sm:$0xff]
        %v2383 = vld [vmem:[#allocation13 + $0x68] sm:$0xff]
        %v2384 = vld [vmem:[#allocation13 + $0x70] sm:$0xff]
        %v2385 = vld [vmem:[#allocation13 + $0x78] sm:$0xff]
        %v2386 = vld [vmem:[#allocation13 + $0x80] sm:$0xff]
        %v2387 = vld [vmem:[#allocation13 + $0x88] sm:$0xff]
        %v2388 = vld [vmem:[#allocation13 + $0x90] sm:$0xff]
        %v2389 = vld [vmem:[#allocation13 + $0x98] sm:$0xff]
        %v2390 = vld [vmem:[#allocation13 + $0xa0] sm:$0xff]
        %v2391 = vld [vmem:[#allocation13 + $0xa8] sm:$0xff]
        %v2392 = vld [vmem:[#allocation13 + $0xb0] sm:$0xff]
        %v2393 = vld [vmem:[#allocation13 + $0xb8] sm:$0xff]
        %v2394 = vld [vmem:[#allocation13 + $0xc0] sm:$0xff]
        %v2395 = vld [vmem:[#allocation13 + $0xc8] sm:$0xff]
        %v2396 = vld [vmem:[#allocation13 + $0xd0] sm:$0xff]
        %v2397 = vld [vmem:[#allocation13 + $0xd8] sm:$0xff]
        %v2398 = vld [vmem:[#allocation13 + $0xe0] sm:$0xff]
        %v2399 = vld [vmem:[#allocation13 + $0xe8] sm:$0xff]
        %v2400 = vld [vmem:[#allocation13 + $0xf0] sm:$0xff]
        %v2401 = vld [vmem:[#allocation13 + $0xf8] sm:$0xff]
        %v2402 = vld [vmem:[#allocation13 + $0x100] sm:$0xff]
        %v2403 = vld [vmem:[#allocation13 + $0x108] sm:$0xff]
        %v2404 = vld [vmem:[#allocation13 + $0x110] sm:$0xff]
        %v2405 = vld [vmem:[#allocation13 + $0x118] sm:$0xff]
        %v2406 = vld [vmem:[#allocation13 + $0x120] sm:$0xff]
        %v2407 = vld [vmem:[#allocation13 + $0x128] sm:$0xff]
        %v2408 = vld [vmem:[#allocation13 + $0x130] sm:$0xff]
        %v2409 = vld [vmem:[#allocation13 + $0x138] sm:$0xff]
        %v2410 = vld [vmem:[#allocation13 + $0x140] sm:$0xff]
        %v2411 = vld [vmem:[#allocation13 + $0x148] sm:$0xff]
        %v2412 = vld [vmem:[#allocation13 + $0x150] sm:$0xff]
        %v2413 = vld [vmem:[#allocation13 + $0x158] sm:$0xff]
        %v2414 = vld [vmem:[#allocation13 + $0x160] sm:$0xff]
        %v2415 = vld [vmem:[#allocation13 + $0x168] sm:$0xff]
        %v2416 = vld [vmem:[#allocation13 + $0x170] sm:$0xff]
        %v2417 = vld [vmem:[#allocation13 + $0x178] sm:$0xff]
        %v2418 = vld [vmem:[%s25] sm:$0x1]
        %v2419 = vld [vmem:[#allocation14] sm:$0xff]
        %v2420 = vld [vmem:[#allocation14 + $0x8] sm:$0xff]
        %v2421 = vld [vmem:[#allocation14 + $0x10] sm:$0xff]
        %v2422 = vld [vmem:[#allocation14 + $0x18] sm:$0xff]
        %v2423 = vld [vmem:[#allocation14 + $0x20] sm:$0xff]
        %v2424 = vld [vmem:[#allocation14 + $0x28] sm:$0xff]
        %v2425 = vld [vmem:[#allocation14 + $0x30] sm:$0xff]
        %v2426 = vld [vmem:[#allocation14 + $0x38] sm:$0xff]
        %v2427 = vld [vmem:[#allocation14 + $0x40] sm:$0xff]
        %v2428 = vld [vmem:[#allocation14 + $0x48] sm:$0xff]
        %v2429 = vld [vmem:[#allocation14 + $0x50] sm:$0xff]
        %v2430 = vld [vmem:[#allocation14 + $0x58] sm:$0xff]
        %v2431 = vld [vmem:[#allocation14 + $0x60] sm:$0xff]
        %v2432 = vld [vmem:[#allocation14 + $0x68] sm:$0xff]
        %v2433 = vld [vmem:[#allocation14 + $0x70] sm:$0xff]
        %v2434 = vld [vmem:[#allocation14 + $0x78] sm:$0xff]
        %v2435 = vld [vmem:[#allocation14 + $0x80] sm:$0xff]
        %v2436 = vld [vmem:[#allocation14 + $0x88] sm:$0xff]
        %v2437 = vld [vmem:[#allocation14 + $0x90] sm:$0xff]
        %v2438 = vld [vmem:[#allocation14 + $0x98] sm:$0xff]
        %v2439 = vld [vmem:[#allocation14 + $0xa0] sm:$0xff]
        %v2440 = vld [vmem:[#allocation14 + $0xa8] sm:$0xff]
        %v2441 = vld [vmem:[#allocation14 + $0xb0] sm:$0xff]
        %v2442 = vld [vmem:[#allocation14 + $0xb8] sm:$0xff]
        %v2443 = vld [vmem:[#allocation14 + $0xc0] sm:$0xff]
        %v2444 = vld [vmem:[#allocation14 + $0xc8] sm:$0xff]
        %v2445 = vld [vmem:[#allocation14 + $0xd0] sm:$0xff]
        %v2446 = vld [vmem:[#allocation14 + $0xd8] sm:$0xff]
        %v2447 = vld [vmem:[#allocation14 + $0xe0] sm:$0xff]
        %v2448 = vld [vmem:[#allocation14 + $0xe8] sm:$0xff]
        %v2449 = vld [vmem:[#allocation14 + $0xf0] sm:$0xff]
        %v2450 = vld [vmem:[#allocation14 + $0xf8] sm:$0xff]
        %v2451 = vld [vmem:[#allocation14 + $0x100] sm:$0xff]
        %v2452 = vld [vmem:[#allocation14 + $0x108] sm:$0xff]
        %v2453 = vld [vmem:[#allocation14 + $0x110] sm:$0xff]
        %v2454 = vld [vmem:[#allocation14 + $0x118] sm:$0xff]
        %v2455 = vld [vmem:[#allocation14 + $0x120] sm:$0xff]
        %v2456 = vld [vmem:[#allocation14 + $0x128] sm:$0xff]
        %v2457 = vld [vmem:[#allocation14 + $0x130] sm:$0xff]
        %v2458 = vld [vmem:[#allocation14 + $0x138] sm:$0xff]
        %v2459 = vld [vmem:[#allocation14 + $0x140] sm:$0xff]
        %v2460 = vld [vmem:[#allocation14 + $0x148] sm:$0xff]
        %v2461 = vld [vmem:[#allocation14 + $0x150] sm:$0xff]
        %v2462 = vld [vmem:[#allocation14 + $0x158] sm:$0xff]
        %v2463 = vld [vmem:[#allocation14 + $0x160] sm:$0xff]
        %v2464 = vld [vmem:[#allocation14 + $0x168] sm:$0xff]
        %v2465 = vld [vmem:[#allocation14 + $0x170] sm:$0xff]
        %v2466 = vld [vmem:[#allocation14 + $0x178] sm:$0xff]
        %v2467 = vld [vmem:[%s29] sm:$0x1]
        %v2469 = vrot.slane %v1214, 7
        %v2471 = vsel %vm1315, 0.0, %v2469
        %v2472 = vrot.slane %v1214, 1
        %vm2474 = vcmask 1042432
        %v2475 = vsel %vm2474, %v2472, 0.0
        %2476 = vmatprep.subr.mxu0 0.0
        %2477 = vmatpush1.msra.mxu0 %v2401
        %2478 = vmatprep.subr.mxu0 0.0
        %2479 = vmatpush1.msra.mxu0 %v2400
        %2480 = vmatprep.subr.mxu0 0.0
        %2481 = vmatpush1.msra.mxu0 %v2399
        %2482 = vmatprep.subr.mxu0 0.0
        %2483 = vmatpush1.msra.mxu0 %v2398
        %2484 = vmatprep.subr.mxu0 0.0
        %2485 = vmatpush1.msra.mxu0 %v2397
        %2486 = vmatprep.subr.mxu0 0.0
        %2487 = vmatpush1.msra.mxu0 %v2396
        %2488 = vmatprep.subr.mxu0 0.0
        %2489 = vmatpush1.msra.mxu0 %v2395
        %2490 = vmatprep.subr.mxu0 0.0
        %2491 = vmatpush1.msra.mxu0 %v2394
        %2492 = vmatprep.subr.mxu0 0.0
        %2493 = vmatpush1.msra.mxu0 %v2393
        %2494 = vmatprep.subr.mxu0 0.0
        %2495 = vmatpush1.msra.mxu0 %v2392
        %2496 = vmatprep.subr.mxu0 0.0
        %2497 = vmatpush1.msra.mxu0 %v2391
        %2498 = vmatprep.subr.mxu0 0.0
        %2499 = vmatpush1.msra.mxu0 %v2390
        %2500 = vmatprep.subr.mxu0 0.0
        %2501 = vmatpush1.msra.mxu0 %v2389
        %2502 = vmatprep.subr.mxu0 0.0
        %2503 = vmatpush1.msra.mxu0 %v2388
        %2504 = vmatprep.subr.mxu0 0.0
        %2505 = vmatpush1.msra.mxu0 %v2387
        %2506 = vmatprep.subr.mxu0 0.0
        %2507 = vmatpush1.msra.mxu0 %v2386
        %2508 = vmatprep.subr.mxu0 0.0
        %2509 = vmatpush2.msra.mxu0 0.0
        %2510 = vmatprep.subr.mxu0 0.0
        %2511 = vmatpush2.msra.mxu0 0.0
        %2512 = vmatprep.subr.mxu0 0.0
        %2513 = vmatpush2.msra.mxu0 0.0
        %2514 = vmatprep.subr.mxu0 0.0
        %2515 = vmatpush2.msra.mxu0 0.0
        %2516 = vmatprep.subr.mxu0 0.0
        %2517 = vmatpush2.msra.mxu0 0.0
        %2518 = vmatprep.subr.mxu0 0.0
        %2519 = vmatpush2.msra.mxu0 0.0
        %2520 = vmatprep.subr.mxu0 0.0
        %2521 = vmatpush2.msra.mxu0 0.0
        %2522 = vmatprep.subr.mxu0 0.0
        %2523 = vmatpush2.msra.mxu0 0.0
        %2524 = vmatprep.subr.mxu0 0.0
        %2525 = vmatpush2.msra.mxu0 0.0
        %2526 = vmatprep.subr.mxu0 0.0
        %2527 = vmatpush2.msra.mxu0 0.0
        %2528 = vmatprep.subr.mxu0 0.0
        %2529 = vmatpush2.msra.mxu0 0.0
        %2530 = vmatprep.subr.mxu0 0.0
        %2531 = vmatpush2.msra.mxu0 0.0
        %2532 = vmatprep.subr.mxu0 0.0
        %2533 = vmatpush2.msra.mxu0 0.0
        %2534 = vmatprep.subr.mxu0 0.0
        %2535 = vmatpush2.msra.mxu0 0.0
        %2536 = vmatprep.subr.mxu0 0.0
        %2537 = vmatpush2.msra.mxu0 0.0
        %2538 = vmatprep.subr.mxu0 0.0
        %2539 = vmatpush2.msra.mxu0 0.0
        %2540 = vmatprep.mubr.f32.mxu0 0.0
        %2541 = vmatmul.mubr.f32.gmra.mxu0 %v1214
        %v2542 = vpop.f32.mrf.mxu0
        %v2543 = vadd.f32 0.0, %v2542
        %v2544 = vpop.f32.mrf.mxu0
        %2545 = vdwg.mxu0
        %2546 = vmatprep.subr.mxu0 0.0
        %2547 = vmatpush1.msra.mxu0 %v2385
        %2548 = vmatprep.subr.mxu0 0.0
        %2549 = vmatpush1.msra.mxu0 %v2384
        %2550 = vmatprep.subr.mxu0 0.0
        %2551 = vmatpush1.msra.mxu0 %v2383
        %2552 = vmatprep.subr.mxu0 0.0
        %2553 = vmatpush1.msra.mxu0 %v2382
        %2554 = vmatprep.subr.mxu0 0.0
        %2555 = vmatpush1.msra.mxu0 %v2381
        %2556 = vmatprep.subr.mxu0 0.0
        %2557 = vmatpush1.msra.mxu0 %v2380
        %2558 = vmatprep.subr.mxu0 0.0
        %2559 = vmatpush1.msra.mxu0 %v2379
        %2560 = vmatprep.subr.mxu0 0.0
        %2561 = vmatpush1.msra.mxu0 %v2378
        %2562 = vmatprep.subr.mxu0 0.0
        %2563 = vmatpush1.msra.mxu0 %v2377
        %2564 = vmatprep.subr.mxu0 0.0
        %2565 = vmatpush1.msra.mxu0 %v2376
        %2566 = vmatprep.subr.mxu0 0.0
        %2567 = vmatpush1.msra.mxu0 %v2375
        %2568 = vmatprep.subr.mxu0 0.0
        %2569 = vmatpush1.msra.mxu0 %v2374
        %2570 = vmatprep.subr.mxu0 0.0
        %2571 = vmatpush1.msra.mxu0 %v2373
        %2572 = vmatprep.subr.mxu0 0.0
        %2573 = vmatpush1.msra.mxu0 %v2372
        %2574 = vmatprep.subr.mxu0 0.0
        %2575 = vmatpush1.msra.mxu0 %v2371
        %2576 = vmatprep.subr.mxu0 0.0
        %2577 = vmatpush1.msra.mxu0 %v2370
        %2578 = vmatprep.subr.mxu0 0.0
        %2579 = vmatpush2.msra.mxu0 0.0
        %2580 = vmatprep.subr.mxu0 0.0
        %2581 = vmatpush2.msra.mxu0 0.0
        %2582 = vmatprep.subr.mxu0 0.0
        %2583 = vmatpush2.msra.mxu0 0.0
        %2584 = vmatprep.subr.mxu0 0.0
        %2585 = vmatpush2.msra.mxu0 0.0
        %2586 = vmatprep.subr.mxu0 0.0
        %2587 = vmatpush2.msra.mxu0 0.0
        %2588 = vmatprep.subr.mxu0 0.0
        %2589 = vmatpush2.msra.mxu0 0.0
        %2590 = vmatprep.subr.mxu0 0.0
        %2591 = vmatpush2.msra.mxu0 0.0
        %2592 = vmatprep.subr.mxu0 0.0
        %2593 = vmatpush2.msra.mxu0 0.0
        %2594 = vmatprep.subr.mxu0 0.0
        %2595 = vmatpush2.msra.mxu0 0.0
        %2596 = vmatprep.subr.mxu0 0.0
        %2597 = vmatpush2.msra.mxu0 0.0
        %2598 = vmatprep.subr.mxu0 0.0
        %2599 = vmatpush2.msra.mxu0 0.0
        %2600 = vmatprep.subr.mxu0 0.0
        %2601 = vmatpush2.msra.mxu0 0.0
        %2602 = vmatprep.subr.mxu0 0.0
        %2603 = vmatpush2.msra.mxu0 0.0
        %2604 = vmatprep.subr.mxu0 0.0
        %2605 = vmatpush2.msra.mxu0 0.0
        %2606 = vmatprep.subr.mxu0 0.0
        %2607 = vmatpush2.msra.mxu0 0.0
        %2608 = vmatprep.subr.mxu0 0.0
        %2609 = vmatpush2.msra.mxu0 0.0
        %2610 = vmatprep.mubr.f32.mxu0 0.0
        %2611 = vmatmul.mubr.f32.gmra.mxu0 %v2471
        %v2612 = vpop.f32.mrf.mxu0
        %v2613 = vadd.f32 %v2543, %v2612
        %v2614 = vpop.f32.mrf.mxu0
        %2615 = vdwg.mxu0
        %2616 = vmatprep.subr.mxu0 0.0
        %2617 = vmatpush1.msra.mxu0 %v2417
        %2618 = vmatprep.subr.mxu0 0.0
        %2619 = vmatpush1.msra.mxu0 %v2416
        %2620 = vmatprep.subr.mxu0 0.0
        %2621 = vmatpush1.msra.mxu0 %v2415
        %2622 = vmatprep.subr.mxu0 0.0
        %2623 = vmatpush1.msra.mxu0 %v2414
        %2624 = vmatprep.subr.mxu0 0.0
        %2625 = vmatpush1.msra.mxu0 %v2413
        %2626 = vmatprep.subr.mxu0 0.0
        %2627 = vmatpush1.msra.mxu0 %v2412
        %2628 = vmatprep.subr.mxu0 0.0
        %2629 = vmatpush1.msra.mxu0 %v2411
        %2630 = vmatprep.subr.mxu0 0.0
        %2631 = vmatpush1.msra.mxu0 %v2410
        %2632 = vmatprep.subr.mxu0 0.0
        %2633 = vmatpush1.msra.mxu0 %v2409
        %2634 = vmatprep.subr.mxu0 0.0
        %2635 = vmatpush1.msra.mxu0 %v2408
        %2636 = vmatprep.subr.mxu0 0.0
        %2637 = vmatpush1.msra.mxu0 %v2407
        %2638 = vmatprep.subr.mxu0 0.0
        %2639 = vmatpush1.msra.mxu0 %v2406
        %2640 = vmatprep.subr.mxu0 0.0
        %2641 = vmatpush1.msra.mxu0 %v2405
        %2642 = vmatprep.subr.mxu0 0.0
        %2643 = vmatpush1.msra.mxu0 %v2404
        %2644 = vmatprep.subr.mxu0 0.0
        %2645 = vmatpush1.msra.mxu0 %v2403
        %2646 = vmatprep.subr.mxu0 0.0
        %2647 = vmatpush1.msra.mxu0 %v2402
        %2648 = vmatprep.subr.mxu0 0.0
        %2649 = vmatpush2.msra.mxu0 0.0
        %2650 = vmatprep.subr.mxu0 0.0
        %2651 = vmatpush2.msra.mxu0 0.0
        %2652 = vmatprep.subr.mxu0 0.0
        %2653 = vmatpush2.msra.mxu0 0.0
        %2654 = vmatprep.subr.mxu0 0.0
        %2655 = vmatpush2.msra.mxu0 0.0
        %2656 = vmatprep.subr.mxu0 0.0
        %2657 = vmatpush2.msra.mxu0 0.0
        %2658 = vmatprep.subr.mxu0 0.0
        %2659 = vmatpush2.msra.mxu0 0.0
        %2660 = vmatprep.subr.mxu0 0.0
        %2661 = vmatpush2.msra.mxu0 0.0
        %2662 = vmatprep.subr.mxu0 0.0
        %2663 = vmatpush2.msra.mxu0 0.0
        %2664 = vmatprep.subr.mxu0 0.0
        %2665 = vmatpush2.msra.mxu0 0.0
        %2666 = vmatprep.subr.mxu0 0.0
        %2667 = vmatpush2.msra.mxu0 0.0
        %2668 = vmatprep.subr.mxu0 0.0
        %2669 = vmatpush2.msra.mxu0 0.0
        %2670 = vmatprep.subr.mxu0 0.0
        %2671 = vmatpush2.msra.mxu0 0.0
        %2672 = vmatprep.subr.mxu0 0.0
        %2673 = vmatpush2.msra.mxu0 0.0
        %2674 = vmatprep.subr.mxu0 0.0
        %2675 = vmatpush2.msra.mxu0 0.0
        %2676 = vmatprep.subr.mxu0 0.0
        %2677 = vmatpush2.msra.mxu0 0.0
        %2678 = vmatprep.subr.mxu0 0.0
        %2679 = vmatpush2.msra.mxu0 0.0
        %2680 = vmatprep.mubr.f32.mxu0 0.0
        %2681 = vmatmul.mubr.f32.gmra.mxu0 %v2475
        %v2682 = vpop.f32.mrf.mxu0
        %v2683 = vadd.f32 0.0, %v2682
        %v2684 = vpop.f32.mrf.mxu0
        %2685 = vdwg.mxu0
        %v2686 = vadd.f32 %v2613, %v2683
        %v2688 = vlaneseq
        %v2689 = vshrl.u32 %v2688, 7
        %v2690 = vsub.s32 0, %v2689
        %v2691 = vrot.slane %v2418, %v2690
        %v2693 = vadd.f32 %v2686, %v2691
        %v2694 = vmax.f32 %v2693, 0.0
        %v2696 = vrot.slane %v2694, 7
        %v2698 = vsel %vm1315, 0.0, %v2696
        %v2699 = vrot.slane %v2694, 1
        %v2701 = vsel %vm2474, %v2699, 0.0
        %2702 = vmatprep.subr.mxu0 0.0
        %2703 = vmatpush1.msra.mxu0 %v2450
        %2704 = vmatprep.subr.mxu0 0.0
        %2705 = vmatpush1.msra.mxu0 %v2449
        %2706 = vmatprep.subr.mxu0 0.0
        %2707 = vmatpush1.msra.mxu0 %v2448
        %2708 = vmatprep.subr.mxu0 0.0
        %2709 = vmatpush1.msra.mxu0 %v2447
        %2710 = vmatprep.subr.mxu0 0.0
        %2711 = vmatpush1.msra.mxu0 %v2446
        %2712 = vmatprep.subr.mxu0 0.0
        %2713 = vmatpush1.msra.mxu0 %v2445
        %2714 = vmatprep.subr.mxu0 0.0
        %2715 = vmatpush1.msra.mxu0 %v2444
        %2716 = vmatprep.subr.mxu0 0.0
        %2717 = vmatpush1.msra.mxu0 %v2443
        %2718 = vmatprep.subr.mxu0 0.0
        %2719 = vmatpush1.msra.mxu0 %v2442
        %2720 = vmatprep.subr.mxu0 0.0
        %2721 = vmatpush1.msra.mxu0 %v2441
        %2722 = vmatprep.subr.mxu0 0.0
        %2723 = vmatpush1.msra.mxu0 %v2440
        %2724 = vmatprep.subr.mxu0 0.0
        %2725 = vmatpush1.msra.mxu0 %v2439
        %2726 = vmatprep.subr.mxu0 0.0
        %2727 = vmatpush1.msra.mxu0 %v2438
        %2728 = vmatprep.subr.mxu0 0.0
        %2729 = vmatpush1.msra.mxu0 %v2437
        %2730 = vmatprep.subr.mxu0 0.0
        %2731 = vmatpush1.msra.mxu0 %v2436
        %2732 = vmatprep.subr.mxu0 0.0
        %2733 = vmatpush1.msra.mxu0 %v2435
        %2734 = vmatprep.subr.mxu0 0.0
        %2735 = vmatpush2.msra.mxu0 0.0
        %2736 = vmatprep.subr.mxu0 0.0
        %2737 = vmatpush2.msra.mxu0 0.0
        %2738 = vmatprep.subr.mxu0 0.0
        %2739 = vmatpush2.msra.mxu0 0.0
        %2740 = vmatprep.subr.mxu0 0.0
        %2741 = vmatpush2.msra.mxu0 0.0
        %2742 = vmatprep.subr.mxu0 0.0
        %2743 = vmatpush2.msra.mxu0 0.0
        %2744 = vmatprep.subr.mxu0 0.0
        %2745 = vmatpush2.msra.mxu0 0.0
        %2746 = vmatprep.subr.mxu0 0.0
        %2747 = vmatpush2.msra.mxu0 0.0
        %2748 = vmatprep.subr.mxu0 0.0
        %2749 = vmatpush2.msra.mxu0 0.0
        %2750 = vmatprep.subr.mxu0 0.0
        %2751 = vmatpush2.msra.mxu0 0.0
        %2752 = vmatprep.subr.mxu0 0.0
        %2753 = vmatpush2.msra.mxu0 0.0
        %2754 = vmatprep.subr.mxu0 0.0
        %2755 = vmatpush2.msra.mxu0 0.0
        %2756 = vmatprep.subr.mxu0 0.0
        %2757 = vmatpush2.msra.mxu0 0.0
        %2758 = vmatprep.subr.mxu0 0.0
        %2759 = vmatpush2.msra.mxu0 0.0
        %2760 = vmatprep.subr.mxu0 0.0
        %2761 = vmatpush2.msra.mxu0 0.0
        %2762 = vmatprep.subr.mxu0 0.0
        %2763 = vmatpush2.msra.mxu0 0.0
        %2764 = vmatprep.subr.mxu0 0.0
        %2765 = vmatpush2.msra.mxu0 0.0
        %2766 = vmatprep.mubr.f32.mxu0 0.0
        %2767 = vmatmul.mubr.f32.gmra.mxu0 %v2694
        %v2768 = vpop.f32.mrf.mxu0
        %v2769 = vadd.f32 0.0, %v2768
        %v2770 = vpop.f32.mrf.mxu0
        %2771 = vdwg.mxu0
        %2772 = vmatprep.subr.mxu0 0.0
        %2773 = vmatpush1.msra.mxu0 %v2434
        %2774 = vmatprep.subr.mxu0 0.0
        %2775 = vmatpush1.msra.mxu0 %v2433
        %2776 = vmatprep.subr.mxu0 0.0
        %2777 = vmatpush1.msra.mxu0 %v2432
        %2778 = vmatprep.subr.mxu0 0.0
        %2779 = vmatpush1.msra.mxu0 %v2431
        %2780 = vmatprep.subr.mxu0 0.0
        %2781 = vmatpush1.msra.mxu0 %v2430
        %2782 = vmatprep.subr.mxu0 0.0
        %2783 = vmatpush1.msra.mxu0 %v2429
        %2784 = vmatprep.subr.mxu0 0.0
        %2785 = vmatpush1.msra.mxu0 %v2428
        %2786 = vmatprep.subr.mxu0 0.0
        %2787 = vmatpush1.msra.mxu0 %v2427
        %2788 = vmatprep.subr.mxu0 0.0
        %2789 = vmatpush1.msra.mxu0 %v2426
        %2790 = vmatprep.subr.mxu0 0.0
        %2791 = vmatpush1.msra.mxu0 %v2425
        %2792 = vmatprep.subr.mxu0 0.0
        %2793 = vmatpush1.msra.mxu0 %v2424
        %2794 = vmatprep.subr.mxu0 0.0
        %2795 = vmatpush1.msra.mxu0 %v2423
        %2796 = vmatprep.subr.mxu0 0.0
        %2797 = vmatpush1.msra.mxu0 %v2422
        %2798 = vmatprep.subr.mxu0 0.0
        %2799 = vmatpush1.msra.mxu0 %v2421
        %2800 = vmatprep.subr.mxu0 0.0
        %2801 = vmatpush1.msra.mxu0 %v2420
        %2802 = vmatprep.subr.mxu0 0.0
        %2803 = vmatpush1.msra.mxu0 %v2419
        %2804 = vmatprep.subr.mxu0 0.0
        %2805 = vmatpush2.msra.mxu0 0.0
        %2806 = vmatprep.subr.mxu0 0.0
        %2807 = vmatpush2.msra.mxu0 0.0
        %2808 = vmatprep.subr.mxu0 0.0
        %2809 = vmatpush2.msra.mxu0 0.0
        %2810 = vmatprep.subr.mxu0 0.0
        %2811 = vmatpush2.msra.mxu0 0.0
        %2812 = vmatprep.subr.mxu0 0.0
        %2813 = vmatpush2.msra.mxu0 0.0
        %2814 = vmatprep.subr.mxu0 0.0
        %2815 = vmatpush2.msra.mxu0 0.0
        %2816 = vmatprep.subr.mxu0 0.0
        %2817 = vmatpush2.msra.mxu0 0.0
        %2818 = vmatprep.subr.mxu0 0.0
        %2819 = vmatpush2.msra.mxu0 0.0
        %2820 = vmatprep.subr.mxu0 0.0
        %2821 = vmatpush2.msra.mxu0 0.0
        %2822 = vmatprep.subr.mxu0 0.0
        %2823 = vmatpush2.msra.mxu0 0.0
        %2824 = vmatprep.subr.mxu0 0.0
        %2825 = vmatpush2.msra.mxu0 0.0
        %2826 = vmatprep.subr.mxu0 0.0
        %2827 = vmatpush2.msra.mxu0 0.0
        %2828 = vmatprep.subr.mxu0 0.0
        %2829 = vmatpush2.msra.mxu0 0.0
        %2830 = vmatprep.subr.mxu0 0.0
        %2831 = vmatpush2.msra.mxu0 0.0
        %2832 = vmatprep.subr.mxu0 0.0
        %2833 = vmatpush2.msra.mxu0 0.0
        %2834 = vmatprep.subr.mxu0 0.0
        %2835 = vmatpush2.msra.mxu0 0.0
        %2836 = vmatprep.mubr.f32.mxu0 0.0
        %2837 = vmatmul.mubr.f32.gmra.mxu0 %v2698
        %v2838 = vpop.f32.mrf.mxu0
        %v2839 = vadd.f32 %v2769, %v2838
        %v2840 = vpop.f32.mrf.mxu0
        %2841 = vdwg.mxu0
        %2842 = vmatprep.subr.mxu0 0.0
        %2843 = vmatpush1.msra.mxu0 %v2466
        %2844 = vmatprep.subr.mxu0 0.0
        %2845 = vmatpush1.msra.mxu0 %v2465
        %2846 = vmatprep.subr.mxu0 0.0
        %2847 = vmatpush1.msra.mxu0 %v2464
        %2848 = vmatprep.subr.mxu0 0.0
        %2849 = vmatpush1.msra.mxu0 %v2463
        %2850 = vmatprep.subr.mxu0 0.0
        %2851 = vmatpush1.msra.mxu0 %v2462
        %2852 = vmatprep.subr.mxu0 0.0
        %2853 = vmatpush1.msra.mxu0 %v2461
        %2854 = vmatprep.subr.mxu0 0.0
        %2855 = vmatpush1.msra.mxu0 %v2460
        %2856 = vmatprep.subr.mxu0 0.0
        %2857 = vmatpush1.msra.mxu0 %v2459
        %2858 = vmatprep.subr.mxu0 0.0
        %2859 = vmatpush1.msra.mxu0 %v2458
        %2860 = vmatprep.subr.mxu0 0.0
        %2861 = vmatpush1.msra.mxu0 %v2457
        %2862 = vmatprep.subr.mxu0 0.0
        %2863 = vmatpush1.msra.mxu0 %v2456
        %2864 = vmatprep.subr.mxu0 0.0
        %2865 = vmatpush1.msra.mxu0 %v2455
        %2866 = vmatprep.subr.mxu0 0.0
        %2867 = vmatpush1.msra.mxu0 %v2454
        %2868 = vmatprep.subr.mxu0 0.0
        %2869 = vmatpush1.msra.mxu0 %v2453
        %2870 = vmatprep.subr.mxu0 0.0
        %2871 = vmatpush1.msra.mxu0 %v2452
        %2872 = vmatprep.subr.mxu0 0.0
        %2873 = vmatpush1.msra.mxu0 %v2451
        %2874 = vmatprep.subr.mxu0 0.0
        %2875 = vmatpush2.msra.mxu0 0.0
        %2876 = vmatprep.subr.mxu0 0.0
        %2877 = vmatpush2.msra.mxu0 0.0
        %2878 = vmatprep.subr.mxu0 0.0
        %2879 = vmatpush2.msra.mxu0 0.0
        %2880 = vmatprep.subr.mxu0 0.0
        %2881 = vmatpush2.msra.mxu0 0.0
        %2882 = vmatprep.subr.mxu0 0.0
        %2883 = vmatpush2.msra.mxu0 0.0
        %2884 = vmatprep.subr.mxu0 0.0
        %2885 = vmatpush2.msra.mxu0 0.0
        %2886 = vmatprep.subr.mxu0 0.0
        %2887 = vmatpush2.msra.mxu0 0.0
        %2888 = vmatprep.subr.mxu0 0.0
        %2889 = vmatpush2.msra.mxu0 0.0
        %2890 = vmatprep.subr.mxu0 0.0
        %2891 = vmatpush2.msra.mxu0 0.0
        %2892 = vmatprep.subr.mxu0 0.0
        %2893 = vmatpush2.msra.mxu0 0.0
        %2894 = vmatprep.subr.mxu0 0.0
        %2895 = vmatpush2.msra.mxu0 0.0
        %2896 = vmatprep.subr.mxu0 0.0
        %2897 = vmatpush2.msra.mxu0 0.0
        %2898 = vmatprep.subr.mxu0 0.0
        %2899 = vmatpush2.msra.mxu0 0.0
        %2900 = vmatprep.subr.mxu0 0.0
        %2901 = vmatpush2.msra.mxu0 0.0
        %2902 = vmatprep.subr.mxu0 0.0
        %2903 = vmatpush2.msra.mxu0 0.0
        %2904 = vmatprep.subr.mxu0 0.0
        %2905 = vmatpush2.msra.mxu0 0.0
        %2906 = vmatprep.mubr.f32.mxu0 0.0
        %2907 = vmatmul.mubr.f32.gmra.mxu0 %v2701
        %v2908 = vpop.f32.mrf.mxu0
        %v2909 = vadd.f32 0.0, %v2908
        %v2910 = vpop.f32.mrf.mxu0
        %2911 = vdwg.mxu0
        %v2912 = vadd.f32 %v2839, %v2909
        %v2914 = vlaneseq
        %v2915 = vshrl.u32 %v2914, 7
        %v2916 = vsub.s32 0, %v2915
        %v2917 = vrot.slane %v2467, %v2916
        %v2919 = vadd.f32 %v2912, %v2917
        %v2920 = vadd.f32 %v2919, %v1214
        %v2921 = vmax.f32 %v2920, 0.0
        %v2922 = vld [vmem:[#allocation16] sm:$0xff]
        %v2923 = vld [vmem:[#allocation16 + $0x8] sm:$0xff]
        %v2924 = vld [vmem:[#allocation16 + $0x10] sm:$0xff]
        %v2925 = vld [vmem:[#allocation16 + $0x18] sm:$0xff]
        %v2926 = vld [vmem:[#allocation16 + $0x20] sm:$0xff]
        %v2927 = vld [vmem:[#allocation16 + $0x28] sm:$0xff]
        %v2928 = vld [vmem:[#allocation16 + $0x30] sm:$0xff]
        %v2929 = vld [vmem:[#allocation16 + $0x38] sm:$0xff]
        %v2930 = vld [vmem:[#allocation16 + $0x40] sm:$0xff]
        %v2931 = vld [vmem:[#allocation16 + $0x48] sm:$0xff]
        %v2932 = vld [vmem:[#allocation16 + $0x50] sm:$0xff]
        %v2933 = vld [vmem:[#allocation16 + $0x58] sm:$0xff]
        %v2934 = vld [vmem:[#allocation16 + $0x60] sm:$0xff]
        %v2935 = vld [vmem:[#allocation16 + $0x68] sm:$0xff]
        %v2936 = vld [vmem:[#allocation16 + $0x70] sm:$0xff]
        %v2937 = vld [vmem:[#allocation16 + $0x78] sm:$0xff]
        %v2938 = vld [vmem:[%s33] sm:$0x1]
        %v2940 = vlaneseq
        %v2941 = vshrl.u32 %v2940, 7
        %v2942 = vsub.s32 0, %v2941
        %v2943 = vrot.slane %v2938, %v2942
        %2945 = vmatprep.subr.mxu0 0.0
        %2946 = vmatpush1.msra.mxu0 %v2937
        %2947 = vmatprep.subr.mxu0 0.0
        %2948 = vmatpush1.msra.mxu0 %v2936
        %2949 = vmatprep.subr.mxu0 0.0
        %2950 = vmatpush1.msra.mxu0 %v2935
        %2951 = vmatprep.subr.mxu0 0.0
        %2952 = vmatpush1.msra.mxu0 %v2934
        %2953 = vmatprep.subr.mxu0 0.0
        %2954 = vmatpush1.msra.mxu0 %v2933
        %2955 = vmatprep.subr.mxu0 0.0
        %2956 = vmatpush1.msra.mxu0 %v2932
        %2957 = vmatprep.subr.mxu0 0.0
        %2958 = vmatpush1.msra.mxu0 %v2931
        %2959 = vmatprep.subr.mxu0 0.0
        %2960 = vmatpush1.msra.mxu0 %v2930
        %2961 = vmatprep.subr.mxu0 0.0
        %2962 = vmatpush1.msra.mxu0 %v2929
        %2963 = vmatprep.subr.mxu0 0.0
        %2964 = vmatpush1.msra.mxu0 %v2928
        %2965 = vmatprep.subr.mxu0 0.0
        %2966 = vmatpush1.msra.mxu0 %v2927
        %2967 = vmatprep.subr.mxu0 0.0
        %2968 = vmatpush1.msra.mxu0 %v2926
        %2969 = vmatprep.subr.mxu0 0.0
        %2970 = vmatpush1.msra.mxu0 %v2925
        %2971 = vmatprep.subr.mxu0 0.0
        %2972 = vmatpush1.msra.mxu0 %v2924
        %2973 = vmatprep.subr.mxu0 0.0
        %2974 = vmatpush1.msra.mxu0 %v2923
        %2975 = vmatprep.subr.mxu0 0.0
        %2976 = vmatpush1.msra.mxu0 %v2922
        %2977 = vmatprep.subr.mxu0 0.0
        %2978 = vmatpush2.msra.mxu0 0.0
        %2979 = vmatprep.subr.mxu0 0.0
        %2980 = vmatpush2.msra.mxu0 0.0
        %2981 = vmatprep.subr.mxu0 0.0
        %2982 = vmatpush2.msra.mxu0 0.0
        %2983 = vmatprep.subr.mxu0 0.0
        %2984 = vmatpush2.msra.mxu0 0.0
        %2985 = vmatprep.subr.mxu0 0.0
        %2986 = vmatpush2.msra.mxu0 0.0
        %2987 = vmatprep.subr.mxu0 0.0
        %2988 = vmatpush2.msra.mxu0 0.0
        %2989 = vmatprep.subr.mxu0 0.0
        %2990 = vmatpush2.msra.mxu0 0.0
        %2991 = vmatprep.subr.mxu0 0.0
        %2992 = vmatpush2.msra.mxu0 0.0
        %2993 = vmatprep.subr.mxu0 0.0
        %2994 = vmatpush2.msra.mxu0 0.0
        %2995 = vmatprep.subr.mxu0 0.0
        %2996 = vmatpush2.msra.mxu0 0.0
        %2997 = vmatprep.subr.mxu0 0.0
        %2998 = vmatpush2.msra.mxu0 0.0
        %2999 = vmatprep.subr.mxu0 0.0
        %3000 = vmatpush2.msra.mxu0 0.0
        %3001 = vmatprep.subr.mxu0 0.0
        %3002 = vmatpush2.msra.mxu0 0.0
        %3003 = vmatprep.subr.mxu0 0.0
        %3004 = vmatpush2.msra.mxu0 0.0
        %3005 = vmatprep.subr.mxu0 0.0
        %3006 = vmatpush2.msra.mxu0 0.0
        %3007 = vmatprep.subr.mxu0 0.0
        %3008 = vmatpush2.msra.mxu0 0.0
        %3009 = vmatprep.mubr.f32.mxu0 0.0
        %3010 = vmatmul.mubr.f32.gmra.mxu0 %v2369
        %v3011 = vpop.f32.mrf.mxu0
        %v3012 = vadd.f32 %v2943, %v3011
        %v3013 = vpop.f32.mrf.mxu0
        %3014 = vdwg.mxu0
        %v3017 = vcombine.high %v1817, %v1817
        %v3019 = vunpack.c.l.s4 1983009808
        %v3020 = vunpack.c.0.s8 %v3019
        %v3021 = vlaneseq
        %v3022 = vshrl.u32 %v3021, 7
        %v3023 = vsub.s32 %v3020, %v3022
        %v3024 = vrot.slane %v1817, %v3023
        %v3026 = vunpack.c.l.s4 1983009808
        %v3027 = vunpack.c.0.s8 %v3026
        %v3028 = vlaneseq
        %v3029 = vshrl.u32 %v3028, 7
        %v3030 = vsub.s32 %v3027, %v3029
        %v3031 = vrot.slane %v3017, %v3030
        %v3032 = vcombine.high %v3024, %v3024
        %v3033 = vcombine.high %v3031, %v3031
        %v3034 = vcombine.high %v1818, %v1818
        %v3036 = vunpack.c.l.s4 1983009808
        %v3037 = vunpack.c.0.s8 %v3036
        %v3038 = vlaneseq
        %v3039 = vshrl.u32 %v3038, 7
        %v3040 = vsub.s32 %v3037, %v3039
        %v3041 = vrot.slane %v1818, %v3040
        %v3043 = vunpack.c.l.s4 1983009808
        %v3044 = vunpack.c.0.s8 %v3043
        %v3045 = vlaneseq
        %v3046 = vshrl.u32 %v3045, 7
        %v3047 = vsub.s32 %v3044, %v3046
        %v3048 = vrot.slane %v3034, %v3047
        %v3049 = vcombine.high %v3041, %v3041
        %v3050 = vcombine.high %v3048, %v3048
        %v3060 = vcombine.high %v3012, %v3012
        %v3062 = vunpack.c.l.s4 1966171168
        %v3063 = vunpack.c.0.s8 %v3062
        %v3064 = vlaneseq
        %v3065 = vshrl.u32 %v3064, 7
        %v3066 = vsub.s32 %v3063, %v3065
        %v3067 = vrot.slane %v3012, %v3066
        %v3069 = vunpack.c.l.s4 1966171168
        %v3070 = vunpack.c.0.s8 %v3069
        %v3071 = vlaneseq
        %v3072 = vshrl.u32 %v3071, 7
        %v3073 = vsub.s32 %v3070, %v3072
        %v3074 = vrot.slane %v3060, %v3073
        %v3075 = vcombine.high %v3067, %v3067
        %v3076 = vcombine.high %v3074, %v3074
        %v3078 = vunpack.c.l.s4 1966171168
        %v3079 = vunpack.c.0.s8 %v3078
        %v3080 = vlaneseq
        %v3081 = vshrl.u32 %v3080, 7
        %v3082 = vsub.s32 %v3079, %v3081
        %v3083 = vrot.slane %v3067, %v3082
        %v3085 = vunpack.c.l.s4 1966171168
        %v3086 = vunpack.c.0.s8 %v3085
        %v3087 = vlaneseq
        %v3088 = vshrl.u32 %v3087, 7
        %v3089 = vsub.s32 %v3086, %v3088
        %v3090 = vrot.slane %v3074, %v3089
        %v3092 = vunpack.c.l.s4 1966171168
        %v3093 = vunpack.c.0.s8 %v3092
        %v3094 = vlaneseq
        %v3095 = vshrl.u32 %v3094, 7
        %v3096 = vsub.s32 %v3093, %v3095
        %v3097 = vrot.slane %v3075, %v3096
        %v3099 = vunpack.c.l.s4 1966171168
        %v3100 = vunpack.c.0.s8 %v3099
        %v3101 = vlaneseq
        %v3102 = vshrl.u32 %v3101, 7
        %v3103 = vsub.s32 %v3100, %v3102
        %v3104 = vrot.slane %v3076, %v3103
        %v3105 = vcombine.high %v3083, %v3083
        %v3106 = vcombine.high %v3090, %v3090
        %v3107 = vcombine.high %v3097, %v3097
        %v3108 = vcombine.high %v3104, %v3104
        %v3109 = vlaneseq
        %v3110 = vshrl.u32 %v3109, 7
        %v3111 = vsub.s32 0, %v3110
        %v3112 = vrot.slane %v3083, %v3111
        %v3113 = vlaneseq
        %v3114 = vshrl.u32 %v3113, 7
        %v3115 = vsub.s32 0, %v3114
        %v3116 = vrot.slane %v3097, %v3115
        %v3117 = vlaneseq
        %v3118 = vshrl.u32 %v3117, 7
        %v3119 = vsub.s32 0, %v3118
        %v3120 = vrot.slane %v3105, %v3119
        %v3121 = vlaneseq
        %v3122 = vshrl.u32 %v3121, 7
        %v3123 = vsub.s32 0, %v3122
        %v3124 = vrot.slane %v3107, %v3123
        %v3125 = vlaneseq
        %v3126 = vshrl.u32 %v3125, 7
        %v3127 = vsub.s32 0, %v3126
        %v3128 = vrot.slane %v3090, %v3127
        %v3129 = vlaneseq
        %v3130 = vshrl.u32 %v3129, 7
        %v3131 = vsub.s32 0, %v3130
        %v3132 = vrot.slane %v3104, %v3131
        %v3133 = vlaneseq
        %v3134 = vshrl.u32 %v3133, 7
        %v3135 = vsub.s32 0, %v3134
        %v3136 = vrot.slane %v3106, %v3135
        %v3137 = vlaneseq
        %v3138 = vshrl.u32 %v3137, 7
        %v3139 = vsub.s32 0, %v3138
        %v3140 = vrot.slane %v3108, %v3139
        %v3149 = vadd.f32 %v3024, %v3112
        %v3150 = vadd.f32 %v3032, %v3116
        %v3151 = vadd.f32 %v3031, %v3120
        %v3152 = vadd.f32 %v3033, %v3124
        %v3153 = vadd.f32 %v3041, %v3128
        %v3154 = vadd.f32 %v3049, %v3132
        %v3155 = vadd.f32 %v3048, %v3136
        %v3156 = vadd.f32 %v3050, %v3140
        %v3157 = vld [vmem:[#allocation17] sm:$0xff]
        %v3158 = vld [vmem:[#allocation17 + $0x8] sm:$0xff]
        %v3159 = vld [vmem:[#allocation17 + $0x10] sm:$0xff]
        %v3160 = vld [vmem:[#allocation17 + $0x18] sm:$0xff]
        %v3161 = vld [vmem:[#allocation17 + $0x20] sm:$0xff]
        %v3162 = vld [vmem:[#allocation17 + $0x28] sm:$0xff]
        %v3163 = vld [vmem:[#allocation17 + $0x30] sm:$0xff]
        %v3164 = vld [vmem:[#allocation17 + $0x38] sm:$0xff]
        %v3165 = vld [vmem:[#allocation17 + $0x40] sm:$0xff]
        %v3166 = vld [vmem:[#allocation17 + $0x48] sm:$0xff]
        %v3167 = vld [vmem:[#allocation17 + $0x50] sm:$0xff]
        %v3168 = vld [vmem:[#allocation17 + $0x58] sm:$0xff]
        %v3169 = vld [vmem:[#allocation17 + $0x60] sm:$0xff]
        %v3170 = vld [vmem:[#allocation17 + $0x68] sm:$0xff]
        %v3171 = vld [vmem:[#allocation17 + $0x70] sm:$0xff]
        %v3172 = vld [vmem:[#allocation17 + $0x78] sm:$0xff]
        %v3173 = vld [vmem:[%s37] sm:$0x1]
        %v3175 = vlaneseq
        %v3176 = vshrl.u32 %v3175, 7
        %v3177 = vsub.s32 0, %v3176
        %v3178 = vrot.slane %v3173, %v3177
        %3180 = vmatprep.subr.mxu0 0.0
        %3181 = vmatpush1.msra.mxu0 %v3172
        %3182 = vmatprep.subr.mxu0 0.0
        %3183 = vmatpush1.msra.mxu0 %v3171
        %3184 = vmatprep.subr.mxu0 0.0
        %3185 = vmatpush1.msra.mxu0 %v3170
        %3186 = vmatprep.subr.mxu0 0.0
        %3187 = vmatpush1.msra.mxu0 %v3169
        %3188 = vmatprep.subr.mxu0 0.0
        %3189 = vmatpush1.msra.mxu0 %v3168
        %3190 = vmatprep.subr.mxu0 0.0
        %3191 = vmatpush1.msra.mxu0 %v3167
        %3192 = vmatprep.subr.mxu0 0.0
        %3193 = vmatpush1.msra.mxu0 %v3166
        %3194 = vmatprep.subr.mxu0 0.0
        %3195 = vmatpush1.msra.mxu0 %v3165
        %3196 = vmatprep.subr.mxu0 0.0
        %3197 = vmatpush1.msra.mxu0 %v3164
        %3198 = vmatprep.subr.mxu0 0.0
        %3199 = vmatpush1.msra.mxu0 %v3163
        %3200 = vmatprep.subr.mxu0 0.0
        %3201 = vmatpush1.msra.mxu0 %v3162
        %3202 = vmatprep.subr.mxu0 0.0
        %3203 = vmatpush1.msra.mxu0 %v3161
        %3204 = vmatprep.subr.mxu0 0.0
        %3205 = vmatpush1.msra.mxu0 %v3160
        %3206 = vmatprep.subr.mxu0 0.0
        %3207 = vmatpush1.msra.mxu0 %v3159
        %3208 = vmatprep.subr.mxu0 0.0
        %3209 = vmatpush1.msra.mxu0 %v3158
        %3210 = vmatprep.subr.mxu0 0.0
        %3211 = vmatpush1.msra.mxu0 %v3157
        %3212 = vmatprep.subr.mxu0 0.0
        %3213 = vmatpush2.msra.mxu0 0.0
        %3214 = vmatprep.subr.mxu0 0.0
        %3215 = vmatpush2.msra.mxu0 0.0
        %3216 = vmatprep.subr.mxu0 0.0
        %3217 = vmatpush2.msra.mxu0 0.0
        %3218 = vmatprep.subr.mxu0 0.0
        %3219 = vmatpush2.msra.mxu0 0.0
        %3220 = vmatprep.subr.mxu0 0.0
        %3221 = vmatpush2.msra.mxu0 0.0
        %3222 = vmatprep.subr.mxu0 0.0
        %3223 = vmatpush2.msra.mxu0 0.0
        %3224 = vmatprep.subr.mxu0 0.0
        %3225 = vmatpush2.msra.mxu0 0.0
        %3226 = vmatprep.subr.mxu0 0.0
        %3227 = vmatpush2.msra.mxu0 0.0
        %3228 = vmatprep.subr.mxu0 0.0
        %3229 = vmatpush2.msra.mxu0 0.0
        %3230 = vmatprep.subr.mxu0 0.0
        %3231 = vmatpush2.msra.mxu0 0.0
        %3232 = vmatprep.subr.mxu0 0.0
        %3233 = vmatpush2.msra.mxu0 0.0
        %3234 = vmatprep.subr.mxu0 0.0
        %3235 = vmatpush2.msra.mxu0 0.0
        %3236 = vmatprep.subr.mxu0 0.0
        %3237 = vmatpush2.msra.mxu0 0.0
        %3238 = vmatprep.subr.mxu0 0.0
        %3239 = vmatpush2.msra.mxu0 0.0
        %3240 = vmatprep.subr.mxu0 0.0
        %3241 = vmatpush2.msra.mxu0 0.0
        %3242 = vmatprep.subr.mxu0 0.0
        %3243 = vmatpush2.msra.mxu0 0.0
        %3244 = vmatprep.mubr.f32.mxu0 0.0
        %3245 = vmatmul.mubr.f32.gmra.mxu0 %v2921
        %v3246 = vpop.f32.mrf.mxu0
        %v3247 = vadd.f32 %v3178, %v3246
        %v3248 = vpop.f32.mrf.mxu0
        %3249 = vdwg.mxu0
        %v3252 = vunpack.c.l.s4 1966171168
        %v3253 = vunpack.c.0.s8 %v3252
        %v3254 = vlaneseq
        %v3255 = vshrl.u32 %v3254, 7
        %v3256 = vsub.s32 %v3253, %v3255
        %v3257 = vrot.slane %v3247, %v3256
        %v3258 = vcombine.high %v3257, %v3257
        %v3260 = vunpack.c.l.s4 1966171168
        %v3261 = vunpack.c.0.s8 %v3260
        %v3262 = vlaneseq
        %v3263 = vshrl.u32 %v3262, 7
        %v3264 = vsub.s32 %v3261, %v3263
        %v3265 = vrot.slane %v3257, %v3264
        %v3267 = vunpack.c.l.s4 1966171168
        %v3268 = vunpack.c.0.s8 %v3267
        %v3269 = vlaneseq
        %v3270 = vshrl.u32 %v3269, 7
        %v3271 = vsub.s32 %v3268, %v3270
        %v3272 = vrot.slane %v3258, %v3271
        %v3273 = vcombine.high %v3265, %v3265
        %v3274 = vcombine.high %v3272, %v3272
        %v3275 = vlaneseq
        %v3276 = vshrl.u32 %v3275, 7
        %v3277 = vsub.s32 0, %v3276
        %v3278 = vrot.slane %v3265, %v3277
        %v3279 = vlaneseq
        %v3280 = vshrl.u32 %v3279, 7
        %v3281 = vsub.s32 0, %v3280
        %v3282 = vrot.slane %v3272, %v3281
        %v3283 = vlaneseq
        %v3284 = vshrl.u32 %v3283, 7
        %v3285 = vsub.s32 0, %v3284
        %v3286 = vrot.slane %v3273, %v3285
        %v3287 = vlaneseq
        %v3288 = vshrl.u32 %v3287, 7
        %v3289 = vsub.s32 0, %v3288
        %v3290 = vrot.slane %v3274, %v3289
        %v3292 = vunpack.c.l.s4 1983009808
        %v3293 = vunpack.c.0.s8 %v3292
        %v3294 = vlaneseq
        %v3295 = vshrl.u32 %v3294, 7
        %v3296 = vsub.s32 %v3293, %v3295
        %v3297 = vrot.slane %v3278, %v3296
        %v3298 = vcombine.high %v3297, %v3297
        %v3300 = vunpack.c.l.s4 1983009808
        %v3301 = vunpack.c.0.s8 %v3300
        %v3302 = vlaneseq
        %v3303 = vshrl.u32 %v3302, 7
        %v3304 = vsub.s32 %v3301, %v3303
        %v3305 = vrot.slane %v3282, %v3304
        %v3306 = vcombine.high %v3305, %v3305
        %v3308 = vunpack.c.l.s4 1983009808
        %v3309 = vunpack.c.0.s8 %v3308
        %v3310 = vlaneseq
        %v3311 = vshrl.u32 %v3310, 7
        %v3312 = vsub.s32 %v3309, %v3311
        %v3313 = vrot.slane %v3286, %v3312
        %v3314 = vcombine.high %v3313, %v3313
        %v3316 = vunpack.c.l.s4 1983009808
        %v3317 = vunpack.c.0.s8 %v3316
        %v3318 = vlaneseq
        %v3319 = vshrl.u32 %v3318, 7
        %v3320 = vsub.s32 %v3317, %v3319
        %v3321 = vrot.slane %v3290, %v3320
        %v3322 = vcombine.high %v3321, %v3321
        %v3331 = vadd.f32 %v3149, %v3297
        %v3332 = vadd.f32 %v3150, %v3298
        %v3333 = vadd.f32 %v3151, %v3305
        %v3334 = vadd.f32 %v3152, %v3306
        %v3335 = vadd.f32 %v3153, %v3313
        %v3336 = vadd.f32 %v3154, %v3314
        %v3337 = vadd.f32 %v3155, %v3321
        %v3338 = vadd.f32 %v3156, %v3322
        %v3339 = vmax.f32 %v3331, 0.0
        %v3340 = vmax.f32 %v3332, 0.0
        %v3341 = vmax.f32 %v3333, 0.0
        %v3342 = vmax.f32 %v3334, 0.0
        %v3343 = vmax.f32 %v3335, 0.0
        %v3344 = vmax.f32 %v3336, 0.0
        %v3345 = vmax.f32 %v3337, 0.0
        %v3346 = vmax.f32 %v3338, 0.0
        %v3355 = vcombine.low %v3339, %v3340
        %v3356 = vcombine.low %v3341, %v3342
        %v3358 = vunpack.c.l.s4 1983009808
        %v3359 = vunpack.c.0.s8 %v3358
        %v3360 = vlaneseq
        %v3361 = vshrl.u32 %v3360, 7
        %v3362 = vsub.s32 %v3359, %v3361
        %v3363 = vrot.slane %v3355, %v3362
        %v3365 = vunpack.c.l.s4 1983009808
        %v3366 = vunpack.c.0.s8 %v3365
        %v3367 = vlaneseq
        %v3368 = vshrl.u32 %v3367, 7
        %v3369 = vsub.s32 %v3366, %v3368
        %v3370 = vrot.slane %v3356, %v3369
        %v3371 = vcombine.low %v3363, %v3370
        %v3372 = vcombine.low %v3343, %v3344
        %v3373 = vcombine.low %v3345, %v3346
        %v3375 = vunpack.c.l.s4 1983009808
        %v3376 = vunpack.c.0.s8 %v3375
        %v3377 = vlaneseq
        %v3378 = vshrl.u32 %v3377, 7
        %v3379 = vsub.s32 %v3376, %v3378
        %v3380 = vrot.slane %v3372, %v3379
        %v3382 = vunpack.c.l.s4 1983009808
        %v3383 = vunpack.c.0.s8 %v3382
        %v3384 = vlaneseq
        %v3385 = vshrl.u32 %v3384, 7
        %v3386 = vsub.s32 %v3383, %v3385
        %v3387 = vrot.slane %v3373, %v3386
        %v3388 = vcombine.low %v3380, %v3387
        %3391 = vst [vmem:[%s1196] sm:$0xff] %v3371
        %3392 = vst [vmem:[%s1196 + $0x8] sm:$0xff] %v3388
        %v3393 = vld [vmem:[#allocation19] sm:$0xff]
        %v3394 = vld [vmem:[#allocation19 + $0x8] sm:$0xff]
        %v3395 = vld [vmem:[#allocation19 + $0x10] sm:$0xff]
        %v3396 = vld [vmem:[#allocation19 + $0x18] sm:$0xff]
        %v3397 = vld [vmem:[#allocation19 + $0x20] sm:$0xff]
        %v3398 = vld [vmem:[#allocation19 + $0x28] sm:$0xff]
        %v3399 = vld [vmem:[#allocation19 + $0x30] sm:$0xff]
        %v3400 = vld [vmem:[#allocation19 + $0x38] sm:$0xff]
        %v3401 = vld [vmem:[#allocation19 + $0x40] sm:$0xff]
        %v3402 = vld [vmem:[#allocation19 + $0x48] sm:$0xff]
        %v3403 = vld [vmem:[#allocation19 + $0x50] sm:$0xff]
        %v3404 = vld [vmem:[#allocation19 + $0x58] sm:$0xff]
        %v3405 = vld [vmem:[#allocation19 + $0x60] sm:$0xff]
        %v3406 = vld [vmem:[#allocation19 + $0x68] sm:$0xff]
        %v3407 = vld [vmem:[#allocation19 + $0x70] sm:$0xff]
        %v3408 = vld [vmem:[#allocation19 + $0x78] sm:$0xff]
        %v3409 = vld [vmem:[#allocation19 + $0x80] sm:$0xff]
        %v3410 = vld [vmem:[#allocation19 + $0x88] sm:$0xff]
        %v3411 = vld [vmem:[#allocation19 + $0x90] sm:$0xff]
        %v3412 = vld [vmem:[#allocation19 + $0x98] sm:$0xff]
        %v3413 = vld [vmem:[#allocation19 + $0xa0] sm:$0xff]
        %v3414 = vld [vmem:[#allocation19 + $0xa8] sm:$0xff]
        %v3415 = vld [vmem:[#allocation19 + $0xb0] sm:$0xff]
        %v3416 = vld [vmem:[#allocation19 + $0xb8] sm:$0xff]
        %v3417 = vld [vmem:[#allocation19 + $0xc0] sm:$0xff]
        %v3418 = vld [vmem:[#allocation19 + $0xc8] sm:$0xff]
        %v3419 = vld [vmem:[#allocation19 + $0xd0] sm:$0xff]
        %v3420 = vld [vmem:[#allocation19 + $0xd8] sm:$0xff]
        %v3421 = vld [vmem:[#allocation19 + $0xe0] sm:$0xff]
        %v3422 = vld [vmem:[#allocation19 + $0xe8] sm:$0xff]
        %v3423 = vld [vmem:[#allocation19 + $0xf0] sm:$0xff]
        %v3424 = vld [vmem:[#allocation19 + $0xf8] sm:$0xff]
        %v3425 = vld [vmem:[#allocation19 + $0x100] sm:$0xff]
        %v3426 = vld [vmem:[#allocation19 + $0x108] sm:$0xff]
        %v3427 = vld [vmem:[#allocation19 + $0x110] sm:$0xff]
        %v3428 = vld [vmem:[#allocation19 + $0x118] sm:$0xff]
        %v3429 = vld [vmem:[#allocation19 + $0x120] sm:$0xff]
        %v3430 = vld [vmem:[#allocation19 + $0x128] sm:$0xff]
        %v3431 = vld [vmem:[#allocation19 + $0x130] sm:$0xff]
        %v3432 = vld [vmem:[#allocation19 + $0x138] sm:$0xff]
        %v3433 = vld [vmem:[#allocation19 + $0x140] sm:$0xff]
        %v3434 = vld [vmem:[#allocation19 + $0x148] sm:$0xff]
        %v3435 = vld [vmem:[#allocation19 + $0x150] sm:$0xff]
        %v3436 = vld [vmem:[#allocation19 + $0x158] sm:$0xff]
        %v3437 = vld [vmem:[#allocation19 + $0x160] sm:$0xff]
        %v3438 = vld [vmem:[#allocation19 + $0x168] sm:$0xff]
        %v3439 = vld [vmem:[#allocation19 + $0x170] sm:$0xff]
        %v3440 = vld [vmem:[#allocation19 + $0x178] sm:$0xff]
        %v3441 = vld [vmem:[%s41] sm:$0x1]
        %v3442 = vlaneseq
        %v3443 = vshrl.u32 %v3442, 7
        %v3444 = vsub.s32 1, %v3443
        %v3445 = vrot.slane %v3024, %v3444
        %v3446 = vlaneseq
        %v3447 = vshrl.u32 %v3446, 7
        %v3448 = vsub.s32 1, %v3447
        %v3449 = vrot.slane %v3032, %v3448
        %v3450 = vlaneseq
        %v3451 = vshrl.u32 %v3450, 7
        %v3452 = vsub.s32 1, %v3451
        %v3453 = vrot.slane %v3031, %v3452
        %v3454 = vlaneseq
        %v3455 = vshrl.u32 %v3454, 7
        %v3456 = vsub.s32 1, %v3455
        %v3457 = vrot.slane %v3033, %v3456
        %v3458 = vlaneseq
        %v3459 = vshrl.u32 %v3458, 7
        %v3460 = vsub.s32 1, %v3459
        %v3461 = vrot.slane %v3041, %v3460
        %v3462 = vlaneseq
        %v3463 = vshrl.u32 %v3462, 7
        %v3464 = vsub.s32 1, %v3463
        %v3465 = vrot.slane %v3049, %v3464
        %v3466 = vlaneseq
        %v3467 = vshrl.u32 %v3466, 7
        %v3468 = vsub.s32 1, %v3467
        %v3469 = vrot.slane %v3048, %v3468
        %vm3470 = vcmask 1042434
        %v3471 = vsel %vm3470, %v3449, %v3445
        %vm3472 = vcmask 1043459
        %v3473 = vsel %vm3472, %v3453, %v3471
        %vm3474 = vcmask 1044484
        %v3475 = vsel %vm3474, %v3457, %v3473
        %vm3476 = vcmask 1045509
        %v3477 = vsel %vm3476, %v3461, %v3475
        %vm3478 = vcmask 1046534
        %v3479 = vsel %vm3478, %v3465, %v3477
        %vm3480 = vcmask 1047559
        %v3481 = vsel %vm3480, %v3469, %v3479
        %v3483 = vsel %vm1315, 0.0, %v3481
        %v3484 = vlaneseq
        %v3485 = vshrl.u32 %v3484, 7
        %v3486 = vsub.s32 0, %v3485
        %v3487 = vrot.slane %v3024, %v3486
        %v3488 = vlaneseq
        %v3489 = vshrl.u32 %v3488, 7
        %v3490 = vsub.s32 0, %v3489
        %v3491 = vrot.slane %v3032, %v3490
        %v3492 = vlaneseq
        %v3493 = vshrl.u32 %v3492, 7
        %v3494 = vsub.s32 0, %v3493
        %v3495 = vrot.slane %v3031, %v3494
        %v3496 = vlaneseq
        %v3497 = vshrl.u32 %v3496, 7
        %v3498 = vsub.s32 0, %v3497
        %v3499 = vrot.slane %v3033, %v3498
        %v3500 = vlaneseq
        %v3501 = vshrl.u32 %v3500, 7
        %v3502 = vsub.s32 0, %v3501
        %v3503 = vrot.slane %v3041, %v3502
        %v3504 = vlaneseq
        %v3505 = vshrl.u32 %v3504, 7
        %v3506 = vsub.s32 0, %v3505
        %v3507 = vrot.slane %v3049, %v3506
        %v3508 = vlaneseq
        %v3509 = vshrl.u32 %v3508, 7
        %v3510 = vsub.s32 0, %v3509
        %v3511 = vrot.slane %v3048, %v3510
        %v3512 = vlaneseq
        %v3513 = vshrl.u32 %v3512, 7
        %v3514 = vsub.s32 0, %v3513
        %v3515 = vrot.slane %v3050, %v3514
        %vm3516 = vcmask 1041409
        %v3517 = vsel %vm3516, %v3491, %v3487
        %v3518 = vsel %vm3470, %v3495, %v3517
        %v3519 = vsel %vm3472, %v3499, %v3518
        %v3520 = vsel %vm3474, %v3503, %v3519
        %v3521 = vsel %vm3476, %v3507, %v3520
        %v3522 = vsel %vm3478, %v3511, %v3521
        %v3523 = vsel %vm3480, %v3515, %v3522
        %3525 = vmatprep.subr.mxu0 0.0
        %3526 = vmatpush1.msra.mxu0 %v3424
        %3527 = vmatprep.subr.mxu0 0.0
        %3528 = vmatpush1.msra.mxu0 %v3423
        %3529 = vmatprep.subr.mxu0 0.0
        %3530 = vmatpush1.msra.mxu0 %v3422
        %3531 = vmatprep.subr.mxu0 0.0
        %3532 = vmatpush1.msra.mxu0 %v3421
        %3533 = vmatprep.subr.mxu0 0.0
        %3534 = vmatpush1.msra.mxu0 %v3420
        %3535 = vmatprep.subr.mxu0 0.0
        %3536 = vmatpush1.msra.mxu0 %v3419
        %3537 = vmatprep.subr.mxu0 0.0
        %3538 = vmatpush1.msra.mxu0 %v3418
        %3539 = vmatprep.subr.mxu0 0.0
        %3540 = vmatpush1.msra.mxu0 %v3417
        %3541 = vmatprep.subr.mxu0 0.0
        %3542 = vmatpush1.msra.mxu0 %v3416
        %3543 = vmatprep.subr.mxu0 0.0
        %3544 = vmatpush1.msra.mxu0 %v3415
        %3545 = vmatprep.subr.mxu0 0.0
        %3546 = vmatpush1.msra.mxu0 %v3414
        %3547 = vmatprep.subr.mxu0 0.0
        %3548 = vmatpush1.msra.mxu0 %v3413
        %3549 = vmatprep.subr.mxu0 0.0
        %3550 = vmatpush1.msra.mxu0 %v3412
        %3551 = vmatprep.subr.mxu0 0.0
        %3552 = vmatpush1.msra.mxu0 %v3411
        %3553 = vmatprep.subr.mxu0 0.0
        %3554 = vmatpush1.msra.mxu0 %v3410
        %3555 = vmatprep.subr.mxu0 0.0
        %3556 = vmatpush1.msra.mxu0 %v3409
        %3557 = vmatprep.subr.mxu0 0.0
        %3558 = vmatpush2.msra.mxu0 0.0
        %3559 = vmatprep.subr.mxu0 0.0
        %3560 = vmatpush2.msra.mxu0 0.0
        %3561 = vmatprep.subr.mxu0 0.0
        %3562 = vmatpush2.msra.mxu0 0.0
        %3563 = vmatprep.subr.mxu0 0.0
        %3564 = vmatpush2.msra.mxu0 0.0
        %3565 = vmatprep.subr.mxu0 0.0
        %3566 = vmatpush2.msra.mxu0 0.0
        %3567 = vmatprep.subr.mxu0 0.0
        %3568 = vmatpush2.msra.mxu0 0.0
        %3569 = vmatprep.subr.mxu0 0.0
        %3570 = vmatpush2.msra.mxu0 0.0
        %3571 = vmatprep.subr.mxu0 0.0
        %3572 = vmatpush2.msra.mxu0 0.0
        %3573 = vmatprep.subr.mxu0 0.0
        %3574 = vmatpush2.msra.mxu0 0.0
        %3575 = vmatprep.subr.mxu0 0.0
        %3576 = vmatpush2.msra.mxu0 0.0
        %3577 = vmatprep.subr.mxu0 0.0
        %3578 = vmatpush2.msra.mxu0 0.0
        %3579 = vmatprep.subr.mxu0 0.0
        %3580 = vmatpush2.msra.mxu0 0.0
        %3581 = vmatprep.subr.mxu0 0.0
        %3582 = vmatpush2.msra.mxu0 0.0
        %3583 = vmatprep.subr.mxu0 0.0
        %3584 = vmatpush2.msra.mxu0 0.0
        %3585 = vmatprep.subr.mxu0 0.0
        %3586 = vmatpush2.msra.mxu0 0.0
        %3587 = vmatprep.subr.mxu0 0.0
        %3588 = vmatpush2.msra.mxu0 0.0
        %3589 = vmatprep.mubr.f32.mxu0 0.0
        %3590 = vmatmul.mubr.f32.gmra.mxu0 %v3523
        %v3591 = vpop.f32.mrf.mxu0
        %v3592 = vadd.f32 0.0, %v3591
        %v3593 = vpop.f32.mrf.mxu0
        %3594 = vdwg.mxu0
        %3595 = vmatprep.subr.mxu0 0.0
        %3596 = vmatpush1.msra.mxu0 %v3408
        %3597 = vmatprep.subr.mxu0 0.0
        %3598 = vmatpush1.msra.mxu0 %v3407
        %3599 = vmatprep.subr.mxu0 0.0
        %3600 = vmatpush1.msra.mxu0 %v3406
        %3601 = vmatprep.subr.mxu0 0.0
        %3602 = vmatpush1.msra.mxu0 %v3405
        %3603 = vmatprep.subr.mxu0 0.0
        %3604 = vmatpush1.msra.mxu0 %v3404
        %3605 = vmatprep.subr.mxu0 0.0
        %3606 = vmatpush1.msra.mxu0 %v3403
        %3607 = vmatprep.subr.mxu0 0.0
        %3608 = vmatpush1.msra.mxu0 %v3402
        %3609 = vmatprep.subr.mxu0 0.0
        %3610 = vmatpush1.msra.mxu0 %v3401
        %3611 = vmatprep.subr.mxu0 0.0
        %3612 = vmatpush1.msra.mxu0 %v3400
        %3613 = vmatprep.subr.mxu0 0.0
        %3614 = vmatpush1.msra.mxu0 %v3399
        %3615 = vmatprep.subr.mxu0 0.0
        %3616 = vmatpush1.msra.mxu0 %v3398
        %3617 = vmatprep.subr.mxu0 0.0
        %3618 = vmatpush1.msra.mxu0 %v3397
        %3619 = vmatprep.subr.mxu0 0.0
        %3620 = vmatpush1.msra.mxu0 %v3396
        %3621 = vmatprep.subr.mxu0 0.0
        %3622 = vmatpush1.msra.mxu0 %v3395
        %3623 = vmatprep.subr.mxu0 0.0
        %3624 = vmatpush1.msra.mxu0 %v3394
        %3625 = vmatprep.subr.mxu0 0.0
        %3626 = vmatpush1.msra.mxu0 %v3393
        %3627 = vmatprep.subr.mxu0 0.0
        %3628 = vmatpush2.msra.mxu0 0.0
        %3629 = vmatprep.subr.mxu0 0.0
        %3630 = vmatpush2.msra.mxu0 0.0
        %3631 = vmatprep.subr.mxu0 0.0
        %3632 = vmatpush2.msra.mxu0 0.0
        %3633 = vmatprep.subr.mxu0 0.0
        %3634 = vmatpush2.msra.mxu0 0.0
        %3635 = vmatprep.subr.mxu0 0.0
        %3636 = vmatpush2.msra.mxu0 0.0
        %3637 = vmatprep.subr.mxu0 0.0
        %3638 = vmatpush2.msra.mxu0 0.0
        %3639 = vmatprep.subr.mxu0 0.0
        %3640 = vmatpush2.msra.mxu0 0.0
        %3641 = vmatprep.subr.mxu0 0.0
        %3642 = vmatpush2.msra.mxu0 0.0
        %3643 = vmatprep.subr.mxu0 0.0
        %3644 = vmatpush2.msra.mxu0 0.0
        %3645 = vmatprep.subr.mxu0 0.0
        %3646 = vmatpush2.msra.mxu0 0.0
        %3647 = vmatprep.subr.mxu0 0.0
        %3648 = vmatpush2.msra.mxu0 0.0
        %3649 = vmatprep.subr.mxu0 0.0
        %3650 = vmatpush2.msra.mxu0 0.0
        %3651 = vmatprep.subr.mxu0 0.0
        %3652 = vmatpush2.msra.mxu0 0.0
        %3653 = vmatprep.subr.mxu0 0.0
        %3654 = vmatpush2.msra.mxu0 0.0
        %3655 = vmatprep.subr.mxu0 0.0
        %3656 = vmatpush2.msra.mxu0 0.0
        %3657 = vmatprep.subr.mxu0 0.0
        %3658 = vmatpush2.msra.mxu0 0.0
        %3659 = vmatprep.mubr.f32.mxu0 0.0
        %3660 = vmatmul.mubr.f32.gmra.mxu0 %v3483
        %v3661 = vpop.f32.mrf.mxu0
        %v3662 = vadd.f32 %v3592, %v3661
        %v3663 = vpop.f32.mrf.mxu0
        %3664 = vdwg.mxu0
        %v3665 = vlaneseq
        %v3666 = vshrl.u32 %v3665, 7
        %v3667 = vsub.s32 1, %v3666
        %v3668 = vrot.slane %v3050, %v3667
        %v3669 = vsel %vm3516, %v3449, %v3445
        %v3670 = vsel %vm3470, %v3453, %v3669
        %v3671 = vsel %vm3472, %v3457, %v3670
        %v3672 = vsel %vm3474, %v3461, %v3671
        %v3673 = vsel %vm3476, %v3465, %v3672
        %v3674 = vsel %vm3478, %v3469, %v3673
        %v3675 = vsel %vm3480, %v3668, %v3674
        %3677 = vmatprep.subr.mxu0 0.0
        %3678 = vmatpush1.msra.mxu0 %v3440
        %3679 = vmatprep.subr.mxu0 0.0
        %3680 = vmatpush1.msra.mxu0 %v3439
        %3681 = vmatprep.subr.mxu0 0.0
        %3682 = vmatpush1.msra.mxu0 %v3438
        %3683 = vmatprep.subr.mxu0 0.0
        %3684 = vmatpush1.msra.mxu0 %v3437
        %3685 = vmatprep.subr.mxu0 0.0
        %3686 = vmatpush1.msra.mxu0 %v3436
        %3687 = vmatprep.subr.mxu0 0.0
        %3688 = vmatpush1.msra.mxu0 %v3435
        %3689 = vmatprep.subr.mxu0 0.0
        %3690 = vmatpush1.msra.mxu0 %v3434
        %3691 = vmatprep.subr.mxu0 0.0
        %3692 = vmatpush1.msra.mxu0 %v3433
        %3693 = vmatprep.subr.mxu0 0.0
        %3694 = vmatpush1.msra.mxu0 %v3432
        %3695 = vmatprep.subr.mxu0 0.0
        %3696 = vmatpush1.msra.mxu0 %v3431
        %3697 = vmatprep.subr.mxu0 0.0
        %3698 = vmatpush1.msra.mxu0 %v3430
        %3699 = vmatprep.subr.mxu0 0.0
        %3700 = vmatpush1.msra.mxu0 %v3429
        %3701 = vmatprep.subr.mxu0 0.0
        %3702 = vmatpush1.msra.mxu0 %v3428
        %3703 = vmatprep.subr.mxu0 0.0
        %3704 = vmatpush1.msra.mxu0 %v3427
        %3705 = vmatprep.subr.mxu0 0.0
        %3706 = vmatpush1.msra.mxu0 %v3426
        %3707 = vmatprep.subr.mxu0 0.0
        %3708 = vmatpush1.msra.mxu0 %v3425
        %3709 = vmatprep.subr.mxu0 0.0
        %3710 = vmatpush2.msra.mxu0 0.0
        %3711 = vmatprep.subr.mxu0 0.0
        %3712 = vmatpush2.msra.mxu0 0.0
        %3713 = vmatprep.subr.mxu0 0.0
        %3714 = vmatpush2.msra.mxu0 0.0
        %3715 = vmatprep.subr.mxu0 0.0
        %3716 = vmatpush2.msra.mxu0 0.0
        %3717 = vmatprep.subr.mxu0 0.0
        %3718 = vmatpush2.msra.mxu0 0.0
        %3719 = vmatprep.subr.mxu0 0.0
        %3720 = vmatpush2.msra.mxu0 0.0
        %3721 = vmatprep.subr.mxu0 0.0
        %3722 = vmatpush2.msra.mxu0 0.0
        %3723 = vmatprep.subr.mxu0 0.0
        %3724 = vmatpush2.msra.mxu0 0.0
        %3725 = vmatprep.subr.mxu0 0.0
        %3726 = vmatpush2.msra.mxu0 0.0
        %3727 = vmatprep.subr.mxu0 0.0
        %3728 = vmatpush2.msra.mxu0 0.0
        %3729 = vmatprep.subr.mxu0 0.0
        %3730 = vmatpush2.msra.mxu0 0.0
        %3731 = vmatprep.subr.mxu0 0.0
        %3732 = vmatpush2.msra.mxu0 0.0
        %3733 = vmatprep.subr.mxu0 0.0
        %3734 = vmatpush2.msra.mxu0 0.0
        %3735 = vmatprep.subr.mxu0 0.0
        %3736 = vmatpush2.msra.mxu0 0.0
        %3737 = vmatprep.subr.mxu0 0.0
        %3738 = vmatpush2.msra.mxu0 0.0
        %3739 = vmatprep.subr.mxu0 0.0
        %3740 = vmatpush2.msra.mxu0 0.0
        %3741 = vmatprep.mubr.f32.mxu0 0.0
        %3742 = vmatmul.mubr.f32.gmra.mxu0 %v3675
        %v3743 = vpop.f32.mrf.mxu0
        %v3744 = vadd.f32 0.0, %v3743
        %v3745 = vpop.f32.mrf.mxu0
        %3746 = vdwg.mxu0
        %v3747 = vadd.f32 %v3662, %v3744
        %v3749 = vlaneseq
        %v3750 = vshrl.u32 %v3749, 7
        %v3751 = vsub.s32 0, %v3750
        %v3752 = vrot.slane %v3441, %v3751
        %v3754 = vadd.f32 %v3747, %v3752
        %v3755 = vadd.f32 %v3754, %v2369
        %v3756 = vld [vmem:[#allocation20] sm:$0xff]
        %v3757 = vld [vmem:[#allocation20 + $0x8] sm:$0xff]
        %v3758 = vld [vmem:[#allocation20 + $0x10] sm:$0xff]
        %v3759 = vld [vmem:[#allocation20 + $0x18] sm:$0xff]
        %v3760 = vld [vmem:[#allocation20 + $0x20] sm:$0xff]
        %v3761 = vld [vmem:[#allocation20 + $0x28] sm:$0xff]
        %v3762 = vld [vmem:[#allocation20 + $0x30] sm:$0xff]
        %v3763 = vld [vmem:[#allocation20 + $0x38] sm:$0xff]
        %v3764 = vld [vmem:[#allocation20 + $0x40] sm:$0xff]
        %v3765 = vld [vmem:[#allocation20 + $0x48] sm:$0xff]
        %v3766 = vld [vmem:[#allocation20 + $0x50] sm:$0xff]
        %v3767 = vld [vmem:[#allocation20 + $0x58] sm:$0xff]
        %v3768 = vld [vmem:[#allocation20 + $0x60] sm:$0xff]
        %v3769 = vld [vmem:[#allocation20 + $0x68] sm:$0xff]
        %v3770 = vld [vmem:[#allocation20 + $0x70] sm:$0xff]
        %v3771 = vld [vmem:[#allocation20 + $0x78] sm:$0xff]
        %v3772 = vld [vmem:[%s45] sm:$0x1]
        %v3774 = vlaneseq
        %v3775 = vshrl.u32 %v3774, 7
        %v3776 = vsub.s32 0, %v3775
        %v3777 = vrot.slane %v3772, %v3776
        %3779 = vmatprep.subr.mxu0 0.0
        %3780 = vmatpush1.msra.mxu0 %v3771
        %3781 = vmatprep.subr.mxu0 0.0
        %3782 = vmatpush1.msra.mxu0 %v3770
        %3783 = vmatprep.subr.mxu0 0.0
        %3784 = vmatpush1.msra.mxu0 %v3769
        %3785 = vmatprep.subr.mxu0 0.0
        %3786 = vmatpush1.msra.mxu0 %v3768
        %3787 = vmatprep.subr.mxu0 0.0
        %3788 = vmatpush1.msra.mxu0 %v3767
        %3789 = vmatprep.subr.mxu0 0.0
        %3790 = vmatpush1.msra.mxu0 %v3766
        %3791 = vmatprep.subr.mxu0 0.0
        %3792 = vmatpush1.msra.mxu0 %v3765
        %3793 = vmatprep.subr.mxu0 0.0
        %3794 = vmatpush1.msra.mxu0 %v3764
        %3795 = vmatprep.subr.mxu0 0.0
        %3796 = vmatpush1.msra.mxu0 %v3763
        %3797 = vmatprep.subr.mxu0 0.0
        %3798 = vmatpush1.msra.mxu0 %v3762
        %3799 = vmatprep.subr.mxu0 0.0
        %3800 = vmatpush1.msra.mxu0 %v3761
        %3801 = vmatprep.subr.mxu0 0.0
        %3802 = vmatpush1.msra.mxu0 %v3760
        %3803 = vmatprep.subr.mxu0 0.0
        %3804 = vmatpush1.msra.mxu0 %v3759
        %3805 = vmatprep.subr.mxu0 0.0
        %3806 = vmatpush1.msra.mxu0 %v3758
        %3807 = vmatprep.subr.mxu0 0.0
        %3808 = vmatpush1.msra.mxu0 %v3757
        %3809 = vmatprep.subr.mxu0 0.0
        %3810 = vmatpush1.msra.mxu0 %v3756
        %3811 = vmatprep.subr.mxu0 0.0
        %3812 = vmatpush2.msra.mxu0 0.0
        %3813 = vmatprep.subr.mxu0 0.0
        %3814 = vmatpush2.msra.mxu0 0.0
        %3815 = vmatprep.subr.mxu0 0.0
        %3816 = vmatpush2.msra.mxu0 0.0
        %3817 = vmatprep.subr.mxu0 0.0
        %3818 = vmatpush2.msra.mxu0 0.0
        %3819 = vmatprep.subr.mxu0 0.0
        %3820 = vmatpush2.msra.mxu0 0.0
        %3821 = vmatprep.subr.mxu0 0.0
        %3822 = vmatpush2.msra.mxu0 0.0
        %3823 = vmatprep.subr.mxu0 0.0
        %3824 = vmatpush2.msra.mxu0 0.0
        %3825 = vmatprep.subr.mxu0 0.0
        %3826 = vmatpush2.msra.mxu0 0.0
        %3827 = vmatprep.subr.mxu0 0.0
        %3828 = vmatpush2.msra.mxu0 0.0
        %3829 = vmatprep.subr.mxu0 0.0
        %3830 = vmatpush2.msra.mxu0 0.0
        %3831 = vmatprep.subr.mxu0 0.0
        %3832 = vmatpush2.msra.mxu0 0.0
        %3833 = vmatprep.subr.mxu0 0.0
        %3834 = vmatpush2.msra.mxu0 0.0
        %3835 = vmatprep.subr.mxu0 0.0
        %3836 = vmatpush2.msra.mxu0 0.0
        %3837 = vmatprep.subr.mxu0 0.0
        %3838 = vmatpush2.msra.mxu0 0.0
        %3839 = vmatprep.subr.mxu0 0.0
        %3840 = vmatpush2.msra.mxu0 0.0
        %3841 = vmatprep.subr.mxu0 0.0
        %3842 = vmatpush2.msra.mxu0 0.0
        %3843 = vmatprep.mubr.f32.mxu0 0.0
        %3844 = vmatmul.mubr.f32.gmra.mxu0 %v2921
        %v3845 = vpop.f32.mrf.mxu0
        %v3846 = vadd.f32 %v3777, %v3845
        %v3847 = vpop.f32.mrf.mxu0
        %3848 = vdwg.mxu0
        %v3850 = vcombine.high %v3755, %v3755
        %v3852 = vunpack.c.l.s4 1983009808
        %v3853 = vunpack.c.0.s8 %v3852
        %v3854 = vlaneseq
        %v3855 = vshrl.u32 %v3854, 7
        %v3856 = vsub.s32 %v3853, %v3855
        %v3857 = vrot.slane %v3755, %v3856
        %v3859 = vunpack.c.l.s4 1983009808
        %v3860 = vunpack.c.0.s8 %v3859
        %v3861 = vlaneseq
        %v3862 = vshrl.u32 %v3861, 7
        %v3863 = vsub.s32 %v3860, %v3862
        %v3864 = vrot.slane %v3850, %v3863
        %v3865 = vcombine.high %v3857, %v3857
        %v3866 = vcombine.high %v3864, %v3864
        %v3873 = vunpack.c.l.s4 1966171168
        %v3874 = vunpack.c.0.s8 %v3873
        %v3875 = vlaneseq
        %v3876 = vshrl.u32 %v3875, 7
        %v3877 = vsub.s32 %v3874, %v3876
        %v3878 = vrot.slane %v3846, %v3877
        %v3879 = vcombine.high %v3878, %v3878
        %v3881 = vunpack.c.l.s4 1966171168
        %v3882 = vunpack.c.0.s8 %v3881
        %v3883 = vlaneseq
        %v3884 = vshrl.u32 %v3883, 7
        %v3885 = vsub.s32 %v3882, %v3884
        %v3886 = vrot.slane %v3878, %v3885
        %v3888 = vunpack.c.l.s4 1966171168
        %v3889 = vunpack.c.0.s8 %v3888
        %v3890 = vlaneseq
        %v3891 = vshrl.u32 %v3890, 7
        %v3892 = vsub.s32 %v3889, %v3891
        %v3893 = vrot.slane %v3879, %v3892
        %v3894 = vcombine.high %v3886, %v3886
        %v3895 = vcombine.high %v3893, %v3893
        %v3896 = vlaneseq
        %v3897 = vshrl.u32 %v3896, 7
        %v3898 = vsub.s32 0, %v3897
        %v3899 = vrot.slane %v3886, %v3898
        %v3900 = vlaneseq
        %v3901 = vshrl.u32 %v3900, 7
        %v3902 = vsub.s32 0, %v3901
        %v3903 = vrot.slane %v3893, %v3902
        %v3904 = vlaneseq
        %v3905 = vshrl.u32 %v3904, 7
        %v3906 = vsub.s32 0, %v3905
        %v3907 = vrot.slane %v3894, %v3906
        %v3908 = vlaneseq
        %v3909 = vshrl.u32 %v3908, 7
        %v3910 = vsub.s32 0, %v3909
        %v3911 = vrot.slane %v3895, %v3910
        %v3916 = vadd.f32 %v3857, %v3899
        %v3917 = vadd.f32 %v3865, %v3903
        %v3918 = vadd.f32 %v3864, %v3907
        %v3919 = vadd.f32 %v3866, %v3911
        %v3920 = vmax.f32 %v3916, 0.0
        %v3921 = vmax.f32 %v3917, 0.0
        %v3922 = vmax.f32 %v3918, 0.0
        %v3923 = vmax.f32 %v3919, 0.0
        %v3928 = vcombine.low %v3920, %v3921
        %v3929 = vcombine.low %v3922, %v3923
        %v3931 = vunpack.c.l.s4 1983009808
        %v3932 = vunpack.c.0.s8 %v3931
        %v3933 = vlaneseq
        %v3934 = vshrl.u32 %v3933, 7
        %v3935 = vsub.s32 %v3932, %v3934
        %v3936 = vrot.slane %v3928, %v3935
        %v3938 = vunpack.c.l.s4 1983009808
        %v3939 = vunpack.c.0.s8 %v3938
        %v3940 = vlaneseq
        %v3941 = vshrl.u32 %v3940, 7
        %v3942 = vsub.s32 %v3939, %v3941
        %v3943 = vrot.slane %v3929, %v3942
        %v3944 = vcombine.low %v3936, %v3943
        %3946 = vst [vmem:[%s1203] sm:$0xff] %v3944
        %v3947 = vld [vmem:[%s47] sm:$0xff]
        %v3948 = vld [vmem:[%s47 + $0x8] sm:$0xff]
        %v3949 = vld [vmem:[%s47 + $0x10] sm:$0xff]
        %v3950 = vld [vmem:[%s47 + $0x18] sm:$0xff]
        %v3951 = vld [vmem:[%s47 + $0x20] sm:$0xff]
        %v3952 = vld [vmem:[%s47 + $0x28] sm:$0xff]
        %v3953 = vld [vmem:[%s47 + $0x30] sm:$0xff]
        %v3954 = vld [vmem:[%s47 + $0x38] sm:$0xff]
        %v3955 = vld [vmem:[%s47 + $0x40] sm:$0xff]
        %v3956 = vld [vmem:[%s47 + $0x48] sm:$0xff]
        %v3957 = vld [vmem:[%s47 + $0x50] sm:$0xff]
        %v3958 = vld [vmem:[%s47 + $0x58] sm:$0xff]
        %v3959 = vld [vmem:[%s47 + $0x60] sm:$0xff]
        %v3960 = vld [vmem:[%s47 + $0x68] sm:$0xff]
        %v3961 = vld [vmem:[%s47 + $0x70] sm:$0xff]
        %v3962 = vld [vmem:[%s47 + $0x78] sm:$0xff]
        %v3963 = vld [vmem:[%s47 + $0x80] sm:$0xff]
        %v3964 = vld [vmem:[%s47 + $0x88] sm:$0xff]
        %v3965 = vld [vmem:[%s47 + $0x90] sm:$0xff]
        %v3966 = vld [vmem:[%s47 + $0x98] sm:$0xff]
        %v3967 = vld [vmem:[%s47 + $0xa0] sm:$0xff]
        %v3968 = vld [vmem:[%s47 + $0xa8] sm:$0xff]
        %v3969 = vld [vmem:[%s47 + $0xb0] sm:$0xff]
        %v3970 = vld [vmem:[%s47 + $0xb8] sm:$0xff]
        %v3971 = vld [vmem:[%s47 + $0xc0] sm:$0xff]
        %v3972 = vld [vmem:[%s47 + $0xc8] sm:$0xff]
        %v3973 = vld [vmem:[%s47 + $0xd0] sm:$0xff]
        %v3974 = vld [vmem:[%s47 + $0xd8] sm:$0xff]
        %v3975 = vld [vmem:[%s47 + $0xe0] sm:$0xff]
        %v3976 = vld [vmem:[%s47 + $0xe8] sm:$0xff]
        %v3977 = vld [vmem:[%s47 + $0xf0] sm:$0xff]
        %v3978 = vld [vmem:[%s47 + $0xf8] sm:$0xff]
        %v3979 = vld [vmem:[%s47 + $0x100] sm:$0xff]
        %v3980 = vld [vmem:[%s47 + $0x108] sm:$0xff]
        %v3981 = vld [vmem:[%s47 + $0x110] sm:$0xff]
        %v3982 = vld [vmem:[%s47 + $0x118] sm:$0xff]
        %v3983 = vld [vmem:[%s47 + $0x120] sm:$0xff]
        %v3984 = vld [vmem:[%s47 + $0x128] sm:$0xff]
        %v3985 = vld [vmem:[%s47 + $0x130] sm:$0xff]
        %v3986 = vld [vmem:[%s47 + $0x138] sm:$0xff]
        %v3987 = vld [vmem:[%s47 + $0x140] sm:$0xff]
        %v3988 = vld [vmem:[%s47 + $0x148] sm:$0xff]
        %v3989 = vld [vmem:[%s47 + $0x150] sm:$0xff]
        %v3990 = vld [vmem:[%s47 + $0x158] sm:$0xff]
        %v3991 = vld [vmem:[%s47 + $0x160] sm:$0xff]
        %v3992 = vld [vmem:[%s47 + $0x168] sm:$0xff]
        %v3993 = vld [vmem:[%s47 + $0x170] sm:$0xff]
        %v3994 = vld [vmem:[%s47 + $0x178] sm:$0xff]
        %v3995 = vld [vmem:[%s49] sm:$0x1]
        %3996 = vmatprep.subr.mxu0 0.0
        %3997 = vmatpush1.msra.mxu0 %v3978
        %3998 = vmatprep.subr.mxu0 0.0
        %3999 = vmatpush1.msra.mxu0 %v3977
        %4000 = vmatprep.subr.mxu0 0.0
        %4001 = vmatpush1.msra.mxu0 %v3976
        %4002 = vmatprep.subr.mxu0 0.0
        %4003 = vmatpush1.msra.mxu0 %v3975
        %4004 = vmatprep.subr.mxu0 0.0
        %4005 = vmatpush1.msra.mxu0 %v3974
        %4006 = vmatprep.subr.mxu0 0.0
        %4007 = vmatpush1.msra.mxu0 %v3973
        %4008 = vmatprep.subr.mxu0 0.0
        %4009 = vmatpush1.msra.mxu0 %v3972
        %4010 = vmatprep.subr.mxu0 0.0
        %4011 = vmatpush1.msra.mxu0 %v3971
        %4012 = vmatprep.subr.mxu0 0.0
        %4013 = vmatpush1.msra.mxu0 %v3970
        %4014 = vmatprep.subr.mxu0 0.0
        %4015 = vmatpush1.msra.mxu0 %v3969
        %4016 = vmatprep.subr.mxu0 0.0
        %4017 = vmatpush1.msra.mxu0 %v3968
        %4018 = vmatprep.subr.mxu0 0.0
        %4019 = vmatpush1.msra.mxu0 %v3967
        %4020 = vmatprep.subr.mxu0 0.0
        %4021 = vmatpush1.msra.mxu0 %v3966
        %4022 = vmatprep.subr.mxu0 0.0
        %4023 = vmatpush1.msra.mxu0 %v3965
        %4024 = vmatprep.subr.mxu0 0.0
        %4025 = vmatpush1.msra.mxu0 %v3964
        %4026 = vmatprep.subr.mxu0 0.0
        %4027 = vmatpush1.msra.mxu0 %v3963
        %4028 = vmatprep.subr.mxu0 0.0
        %4029 = vmatpush2.msra.mxu0 0.0
        %4030 = vmatprep.subr.mxu0 0.0
        %4031 = vmatpush2.msra.mxu0 0.0
        %4032 = vmatprep.subr.mxu0 0.0
        %4033 = vmatpush2.msra.mxu0 0.0
        %4034 = vmatprep.subr.mxu0 0.0
        %4035 = vmatpush2.msra.mxu0 0.0
        %4036 = vmatprep.subr.mxu0 0.0
        %4037 = vmatpush2.msra.mxu0 0.0
        %4038 = vmatprep.subr.mxu0 0.0
        %4039 = vmatpush2.msra.mxu0 0.0
        %4040 = vmatprep.subr.mxu0 0.0
        %4041 = vmatpush2.msra.mxu0 0.0
        %4042 = vmatprep.subr.mxu0 0.0
        %4043 = vmatpush2.msra.mxu0 0.0
        %4044 = vmatprep.subr.mxu0 0.0
        %4045 = vmatpush2.msra.mxu0 0.0
        %4046 = vmatprep.subr.mxu0 0.0
        %4047 = vmatpush2.msra.mxu0 0.0
        %4048 = vmatprep.subr.mxu0 0.0
        %4049 = vmatpush2.msra.mxu0 0.0
        %4050 = vmatprep.subr.mxu0 0.0
        %4051 = vmatpush2.msra.mxu0 0.0
        %4052 = vmatprep.subr.mxu0 0.0
        %4053 = vmatpush2.msra.mxu0 0.0
        %4054 = vmatprep.subr.mxu0 0.0
        %4055 = vmatpush2.msra.mxu0 0.0
        %4056 = vmatprep.subr.mxu0 0.0
        %4057 = vmatpush2.msra.mxu0 0.0
        %4058 = vmatprep.subr.mxu0 0.0
        %4059 = vmatpush2.msra.mxu0 0.0
        %4060 = vmatprep.mubr.f32.mxu0 0.0
        %4061 = vmatmul.mubr.f32.gmra.mxu0 %v3523
        %v4062 = vpop.f32.mrf.mxu0
        %v4063 = vadd.f32 0.0, %v4062
        %v4064 = vpop.f32.mrf.mxu0
        %4065 = vdwg.mxu0
        %4066 = vmatprep.subr.mxu0 0.0
        %4067 = vmatpush1.msra.mxu0 %v3962
        %4068 = vmatprep.subr.mxu0 0.0
        %4069 = vmatpush1.msra.mxu0 %v3961
        %4070 = vmatprep.subr.mxu0 0.0
        %4071 = vmatpush1.msra.mxu0 %v3960
        %4072 = vmatprep.subr.mxu0 0.0
        %4073 = vmatpush1.msra.mxu0 %v3959
        %4074 = vmatprep.subr.mxu0 0.0
        %4075 = vmatpush1.msra.mxu0 %v3958
        %4076 = vmatprep.subr.mxu0 0.0
        %4077 = vmatpush1.msra.mxu0 %v3957
        %4078 = vmatprep.subr.mxu0 0.0
        %4079 = vmatpush1.msra.mxu0 %v3956
        %4080 = vmatprep.subr.mxu0 0.0
        %4081 = vmatpush1.msra.mxu0 %v3955
        %4082 = vmatprep.subr.mxu0 0.0
        %4083 = vmatpush1.msra.mxu0 %v3954
        %4084 = vmatprep.subr.mxu0 0.0
        %4085 = vmatpush1.msra.mxu0 %v3953
        %4086 = vmatprep.subr.mxu0 0.0
        %4087 = vmatpush1.msra.mxu0 %v3952
        %4088 = vmatprep.subr.mxu0 0.0
        %4089 = vmatpush1.msra.mxu0 %v3951
        %4090 = vmatprep.subr.mxu0 0.0
        %4091 = vmatpush1.msra.mxu0 %v3950
        %4092 = vmatprep.subr.mxu0 0.0
        %4093 = vmatpush1.msra.mxu0 %v3949
        %4094 = vmatprep.subr.mxu0 0.0
        %4095 = vmatpush1.msra.mxu0 %v3948
        %4096 = vmatprep.subr.mxu0 0.0
        %4097 = vmatpush1.msra.mxu0 %v3947
        %4098 = vmatprep.subr.mxu0 0.0
        %4099 = vmatpush2.msra.mxu0 0.0
        %4100 = vmatprep.subr.mxu0 0.0
        %4101 = vmatpush2.msra.mxu0 0.0
        %4102 = vmatprep.subr.mxu0 0.0
        %4103 = vmatpush2.msra.mxu0 0.0
        %4104 = vmatprep.subr.mxu0 0.0
        %4105 = vmatpush2.msra.mxu0 0.0
        %4106 = vmatprep.subr.mxu0 0.0
        %4107 = vmatpush2.msra.mxu0 0.0
        %4108 = vmatprep.subr.mxu0 0.0
        %4109 = vmatpush2.msra.mxu0 0.0
        %4110 = vmatprep.subr.mxu0 0.0
        %4111 = vmatpush2.msra.mxu0 0.0
        %4112 = vmatprep.subr.mxu0 0.0
        %4113 = vmatpush2.msra.mxu0 0.0
        %4114 = vmatprep.subr.mxu0 0.0
        %4115 = vmatpush2.msra.mxu0 0.0
        %4116 = vmatprep.subr.mxu0 0.0
        %4117 = vmatpush2.msra.mxu0 0.0
        %4118 = vmatprep.subr.mxu0 0.0
        %4119 = vmatpush2.msra.mxu0 0.0
        %4120 = vmatprep.subr.mxu0 0.0
        %4121 = vmatpush2.msra.mxu0 0.0
        %4122 = vmatprep.subr.mxu0 0.0
        %4123 = vmatpush2.msra.mxu0 0.0
        %4124 = vmatprep.subr.mxu0 0.0
        %4125 = vmatpush2.msra.mxu0 0.0
        %4126 = vmatprep.subr.mxu0 0.0
        %4127 = vmatpush2.msra.mxu0 0.0
        %4128 = vmatprep.subr.mxu0 0.0
        %4129 = vmatpush2.msra.mxu0 0.0
        %4130 = vmatprep.mubr.f32.mxu0 0.0
        %4131 = vmatmul.mubr.f32.gmra.mxu0 %v3483
        %v4132 = vpop.f32.mrf.mxu0
        %v4133 = vadd.f32 %v4063, %v4132
        %v4134 = vpop.f32.mrf.mxu0
        %4135 = vdwg.mxu0
        %4136 = vmatprep.subr.mxu0 0.0
        %4137 = vmatpush1.msra.mxu0 %v3994
        %4138 = vmatprep.subr.mxu0 0.0
        %4139 = vmatpush1.msra.mxu0 %v3993
        %4140 = vmatprep.subr.mxu0 0.0
        %4141 = vmatpush1.msra.mxu0 %v3992
        %4142 = vmatprep.subr.mxu0 0.0
        %4143 = vmatpush1.msra.mxu0 %v3991
        %4144 = vmatprep.subr.mxu0 0.0
        %4145 = vmatpush1.msra.mxu0 %v3990
        %4146 = vmatprep.subr.mxu0 0.0
        %4147 = vmatpush1.msra.mxu0 %v3989
        %4148 = vmatprep.subr.mxu0 0.0
        %4149 = vmatpush1.msra.mxu0 %v3988
        %4150 = vmatprep.subr.mxu0 0.0
        %4151 = vmatpush1.msra.mxu0 %v3987
        %4152 = vmatprep.subr.mxu0 0.0
        %4153 = vmatpush1.msra.mxu0 %v3986
        %4154 = vmatprep.subr.mxu0 0.0
        %4155 = vmatpush1.msra.mxu0 %v3985
        %4156 = vmatprep.subr.mxu0 0.0
        %4157 = vmatpush1.msra.mxu0 %v3984
        %4158 = vmatprep.subr.mxu0 0.0
        %4159 = vmatpush1.msra.mxu0 %v3983
        %4160 = vmatprep.subr.mxu0 0.0
        %4161 = vmatpush1.msra.mxu0 %v3982
        %4162 = vmatprep.subr.mxu0 0.0
        %4163 = vmatpush1.msra.mxu0 %v3981
        %4164 = vmatprep.subr.mxu0 0.0
        %4165 = vmatpush1.msra.mxu0 %v3980
        %4166 = vmatprep.subr.mxu0 0.0
        %4167 = vmatpush1.msra.mxu0 %v3979
        %4168 = vmatprep.subr.mxu0 0.0
        %4169 = vmatpush2.msra.mxu0 0.0
        %4170 = vmatprep.subr.mxu0 0.0
        %4171 = vmatpush2.msra.mxu0 0.0
        %4172 = vmatprep.subr.mxu0 0.0
        %4173 = vmatpush2.msra.mxu0 0.0
        %4174 = vmatprep.subr.mxu0 0.0
        %4175 = vmatpush2.msra.mxu0 0.0
        %4176 = vmatprep.subr.mxu0 0.0
        %4177 = vmatpush2.msra.mxu0 0.0
        %4178 = vmatprep.subr.mxu0 0.0
        %4179 = vmatpush2.msra.mxu0 0.0
        %4180 = vmatprep.subr.mxu0 0.0
        %4181 = vmatpush2.msra.mxu0 0.0
        %4182 = vmatprep.subr.mxu0 0.0
        %4183 = vmatpush2.msra.mxu0 0.0
        %4184 = vmatprep.subr.mxu0 0.0
        %4185 = vmatpush2.msra.mxu0 0.0
        %4186 = vmatprep.subr.mxu0 0.0
        %4187 = vmatpush2.msra.mxu0 0.0
        %4188 = vmatprep.subr.mxu0 0.0
        %4189 = vmatpush2.msra.mxu0 0.0
        %4190 = vmatprep.subr.mxu0 0.0
        %4191 = vmatpush2.msra.mxu0 0.0
        %4192 = vmatprep.subr.mxu0 0.0
        %4193 = vmatpush2.msra.mxu0 0.0
        %4194 = vmatprep.subr.mxu0 0.0
        %4195 = vmatpush2.msra.mxu0 0.0
        %4196 = vmatprep.subr.mxu0 0.0
        %4197 = vmatpush2.msra.mxu0 0.0
        %4198 = vmatprep.subr.mxu0 0.0
        %4199 = vmatpush2.msra.mxu0 0.0
        %4200 = vmatprep.mubr.f32.mxu0 0.0
        %4201 = vmatmul.mubr.f32.gmra.mxu0 %v3675
        %v4202 = vpop.f32.mrf.mxu0
        %v4203 = vadd.f32 0.0, %v4202
        %v4204 = vpop.f32.mrf.mxu0
        %4205 = vdwg.mxu0
        %v4206 = vadd.f32 %v4133, %v4203
        %v4208 = vlaneseq
        %v4209 = vshrl.u32 %v4208, 7
        %v4210 = vsub.s32 0, %v4209
        %v4211 = vrot.slane %v3995, %v4210
        %v4213 = vadd.f32 %v4206, %v4211
        %v4214 = vmax.f32 %v4213, 0.0
        %v4215 = vld [vmem:[%s51] sm:$0xff]
        %v4216 = vld [vmem:[%s51 + $0x8] sm:$0xff]
        %v4217 = vld [vmem:[%s51 + $0x10] sm:$0xff]
        %v4218 = vld [vmem:[%s51 + $0x18] sm:$0xff]
        %v4219 = vld [vmem:[%s51 + $0x20] sm:$0xff]
        %v4220 = vld [vmem:[%s51 + $0x28] sm:$0xff]
        %v4221 = vld [vmem:[%s51 + $0x30] sm:$0xff]
        %v4222 = vld [vmem:[%s51 + $0x38] sm:$0xff]
        %v4223 = vld [vmem:[%s51 + $0x40] sm:$0xff]
        %v4224 = vld [vmem:[%s51 + $0x48] sm:$0xff]
        %v4225 = vld [vmem:[%s51 + $0x50] sm:$0xff]
        %v4226 = vld [vmem:[%s51 + $0x58] sm:$0xff]
        %v4227 = vld [vmem:[%s51 + $0x60] sm:$0xff]
        %v4228 = vld [vmem:[%s51 + $0x68] sm:$0xff]
        %v4229 = vld [vmem:[%s51 + $0x70] sm:$0xff]
        %v4230 = vld [vmem:[%s51 + $0x78] sm:$0xff]
        %v4231 = vld [vmem:[%s51 + $0x80] sm:$0xff]
        %v4232 = vld [vmem:[%s51 + $0x88] sm:$0xff]
        %v4233 = vld [vmem:[%s51 + $0x90] sm:$0xff]
        %v4234 = vld [vmem:[%s51 + $0x98] sm:$0xff]
        %v4235 = vld [vmem:[%s51 + $0xa0] sm:$0xff]
        %v4236 = vld [vmem:[%s51 + $0xa8] sm:$0xff]
        %v4237 = vld [vmem:[%s51 + $0xb0] sm:$0xff]
        %v4238 = vld [vmem:[%s51 + $0xb8] sm:$0xff]
        %v4239 = vld [vmem:[%s53] sm:$0x1]
        %v4241 = vcombine.high %v4214, %v4214
        %v4243 = vunpack.c.l.s4 1983009808
        %v4244 = vunpack.c.0.s8 %v4243
        %v4245 = vlaneseq
        %v4246 = vshrl.u32 %v4245, 7
        %v4247 = vsub.s32 %v4244, %v4246
        %v4248 = vrot.slane %v4214, %v4247
        %v4250 = vunpack.c.l.s4 1983009808
        %v4251 = vunpack.c.0.s8 %v4250
        %v4252 = vlaneseq
        %v4253 = vshrl.u32 %v4252, 7
        %v4254 = vsub.s32 %v4251, %v4253
        %v4255 = vrot.slane %v4241, %v4254
        %v4256 = vcombine.high %v4248, %v4248
        %v4257 = vcombine.high %v4255, %v4255
        %v4258 = vlaneseq
        %v4259 = vshrl.u32 %v4258, 7
        %v4260 = vsub.s32 1, %v4259
        %v4261 = vrot.slane %v4248, %v4260
        %v4262 = vlaneseq
        %v4263 = vshrl.u32 %v4262, 7
        %v4264 = vsub.s32 1, %v4263
        %v4265 = vrot.slane %v4256, %v4264
        %v4266 = vlaneseq
        %v4267 = vshrl.u32 %v4266, 7
        %v4268 = vsub.s32 1, %v4267
        %v4269 = vrot.slane %v4255, %v4268
        %v4270 = vsel %vm3470, %v4265, %v4261
        %v4271 = vsel %vm3472, %v4269, %v4270
        %v4273 = vsel %vm1315, 0.0, %v4271
        %v4274 = vlaneseq
        %v4275 = vshrl.u32 %v4274, 7
        %v4276 = vsub.s32 0, %v4275
        %v4277 = vrot.slane %v4248, %v4276
        %v4278 = vlaneseq
        %v4279 = vshrl.u32 %v4278, 7
        %v4280 = vsub.s32 0, %v4279
        %v4281 = vrot.slane %v4256, %v4280
        %v4282 = vlaneseq
        %v4283 = vshrl.u32 %v4282, 7
        %v4284 = vsub.s32 0, %v4283
        %v4285 = vrot.slane %v4255, %v4284
        %v4286 = vlaneseq
        %v4287 = vshrl.u32 %v4286, 7
        %v4288 = vsub.s32 0, %v4287
        %v4289 = vrot.slane %v4257, %v4288
        %v4290 = vsel %vm3516, %v4281, %v4277
        %v4291 = vsel %vm3470, %v4285, %v4290
        %v4292 = vsel %vm3472, %v4289, %v4291
        %vm4293 = vcmask 523264
        %v4294 = vsel %vm4293, %v4292, 0
        %4296 = vmatprep.subr.mxu0 0.0
        %4297 = vmatpush1.msra.mxu0 0.0
        %4298 = vmatprep.subr.mxu0 0.0
        %4299 = vmatpush1.msra.mxu0 0.0
        %4300 = vmatprep.subr.mxu0 0.0
        %4301 = vmatpush1.msra.mxu0 0.0
        %4302 = vmatprep.subr.mxu0 0.0
        %4303 = vmatpush1.msra.mxu0 0.0
        %4304 = vmatprep.subr.mxu0 0.0
        %4305 = vmatpush1.msra.mxu0 0.0
        %4306 = vmatprep.subr.mxu0 0.0
        %4307 = vmatpush1.msra.mxu0 0.0
        %4308 = vmatprep.subr.mxu0 0.0
        %4309 = vmatpush1.msra.mxu0 0.0
        %4310 = vmatprep.subr.mxu0 0.0
        %4311 = vmatpush1.msra.mxu0 0.0
        %4312 = vmatprep.subr.mxu0 0.0
        %4313 = vmatpush1.msra.mxu0 %v4230
        %4314 = vmatprep.subr.mxu0 0.0
        %4315 = vmatpush1.msra.mxu0 %v4229
        %4316 = vmatprep.subr.mxu0 0.0
        %4317 = vmatpush1.msra.mxu0 %v4228
        %4318 = vmatprep.subr.mxu0 0.0
        %4319 = vmatpush1.msra.mxu0 %v4227
        %4320 = vmatprep.subr.mxu0 0.0
        %4321 = vmatpush1.msra.mxu0 %v4226
        %4322 = vmatprep.subr.mxu0 0.0
        %4323 = vmatpush1.msra.mxu0 %v4225
        %4324 = vmatprep.subr.mxu0 0.0
        %4325 = vmatpush1.msra.mxu0 %v4224
        %4326 = vmatprep.subr.mxu0 0.0
        %4327 = vmatpush1.msra.mxu0 %v4223
        %4328 = vmatprep.subr.mxu0 0.0
        %4329 = vmatpush2.msra.mxu0 0.0
        %4330 = vmatprep.subr.mxu0 0.0
        %4331 = vmatpush2.msra.mxu0 0.0
        %4332 = vmatprep.subr.mxu0 0.0
        %4333 = vmatpush2.msra.mxu0 0.0
        %4334 = vmatprep.subr.mxu0 0.0
        %4335 = vmatpush2.msra.mxu0 0.0
        %4336 = vmatprep.subr.mxu0 0.0
        %4337 = vmatpush2.msra.mxu0 0.0
        %4338 = vmatprep.subr.mxu0 0.0
        %4339 = vmatpush2.msra.mxu0 0.0
        %4340 = vmatprep.subr.mxu0 0.0
        %4341 = vmatpush2.msra.mxu0 0.0
        %4342 = vmatprep.subr.mxu0 0.0
        %4343 = vmatpush2.msra.mxu0 0.0
        %4344 = vmatprep.subr.mxu0 0.0
        %4345 = vmatpush2.msra.mxu0 0.0
        %4346 = vmatprep.subr.mxu0 0.0
        %4347 = vmatpush2.msra.mxu0 0.0
        %4348 = vmatprep.subr.mxu0 0.0
        %4349 = vmatpush2.msra.mxu0 0.0
        %4350 = vmatprep.subr.mxu0 0.0
        %4351 = vmatpush2.msra.mxu0 0.0
        %4352 = vmatprep.subr.mxu0 0.0
        %4353 = vmatpush2.msra.mxu0 0.0
        %4354 = vmatprep.subr.mxu0 0.0
        %4355 = vmatpush2.msra.mxu0 0.0
        %4356 = vmatprep.subr.mxu0 0.0
        %4357 = vmatpush2.msra.mxu0 0.0
        %4358 = vmatprep.subr.mxu0 0.0
        %4359 = vmatpush2.msra.mxu0 0.0
        %4360 = vmatprep.mubr.f32.mxu0 0.0
        %4361 = vmatmul.mubr.f32.gmra.mxu0 %v4294
        %v4362 = vpop.f32.mrf.mxu0
        %v4363 = vadd.f32 0.0, %v4362
        %v4364 = vpop.f32.mrf.mxu0
        %4365 = vdwg.mxu0
        %v4367 = vsel %vm4293, %v4273, 0
        %4369 = vmatprep.subr.mxu0 0.0
        %4370 = vmatpush1.msra.mxu0 0.0
        %4371 = vmatprep.subr.mxu0 0.0
        %4372 = vmatpush1.msra.mxu0 0.0
        %4373 = vmatprep.subr.mxu0 0.0
        %4374 = vmatpush1.msra.mxu0 0.0
        %4375 = vmatprep.subr.mxu0 0.0
        %4376 = vmatpush1.msra.mxu0 0.0
        %4377 = vmatprep.subr.mxu0 0.0
        %4378 = vmatpush1.msra.mxu0 0.0
        %4379 = vmatprep.subr.mxu0 0.0
        %4380 = vmatpush1.msra.mxu0 0.0
        %4381 = vmatprep.subr.mxu0 0.0
        %4382 = vmatpush1.msra.mxu0 0.0
        %4383 = vmatprep.subr.mxu0 0.0
        %4384 = vmatpush1.msra.mxu0 0.0
        %4385 = vmatprep.subr.mxu0 0.0
        %4386 = vmatpush1.msra.mxu0 %v4222
        %4387 = vmatprep.subr.mxu0 0.0
        %4388 = vmatpush1.msra.mxu0 %v4221
        %4389 = vmatprep.subr.mxu0 0.0
        %4390 = vmatpush1.msra.mxu0 %v4220
        %4391 = vmatprep.subr.mxu0 0.0
        %4392 = vmatpush1.msra.mxu0 %v4219
        %4393 = vmatprep.subr.mxu0 0.0
        %4394 = vmatpush1.msra.mxu0 %v4218
        %4395 = vmatprep.subr.mxu0 0.0
        %4396 = vmatpush1.msra.mxu0 %v4217
        %4397 = vmatprep.subr.mxu0 0.0
        %4398 = vmatpush1.msra.mxu0 %v4216
        %4399 = vmatprep.subr.mxu0 0.0
        %4400 = vmatpush1.msra.mxu0 %v4215
        %4401 = vmatprep.subr.mxu0 0.0
        %4402 = vmatpush2.msra.mxu0 0.0
        %4403 = vmatprep.subr.mxu0 0.0
        %4404 = vmatpush2.msra.mxu0 0.0
        %4405 = vmatprep.subr.mxu0 0.0
        %4406 = vmatpush2.msra.mxu0 0.0
        %4407 = vmatprep.subr.mxu0 0.0
        %4408 = vmatpush2.msra.mxu0 0.0
        %4409 = vmatprep.subr.mxu0 0.0
        %4410 = vmatpush2.msra.mxu0 0.0
        %4411 = vmatprep.subr.mxu0 0.0
        %4412 = vmatpush2.msra.mxu0 0.0
        %4413 = vmatprep.subr.mxu0 0.0
        %4414 = vmatpush2.msra.mxu0 0.0
        %4415 = vmatprep.subr.mxu0 0.0
        %4416 = vmatpush2.msra.mxu0 0.0
        %4417 = vmatprep.subr.mxu0 0.0
        %4418 = vmatpush2.msra.mxu0 0.0
        %4419 = vmatprep.subr.mxu0 0.0
        %4420 = vmatpush2.msra.mxu0 0.0
        %4421 = vmatprep.subr.mxu0 0.0
        %4422 = vmatpush2.msra.mxu0 0.0
        %4423 = vmatprep.subr.mxu0 0.0
        %4424 = vmatpush2.msra.mxu0 0.0
        %4425 = vmatprep.subr.mxu0 0.0
        %4426 = vmatpush2.msra.mxu0 0.0
        %4427 = vmatprep.subr.mxu0 0.0
        %4428 = vmatpush2.msra.mxu0 0.0
        %4429 = vmatprep.subr.mxu0 0.0
        %4430 = vmatpush2.msra.mxu0 0.0
        %4431 = vmatprep.subr.mxu0 0.0
        %4432 = vmatpush2.msra.mxu0 0.0
        %4433 = vmatprep.mubr.f32.mxu0 0.0
        %4434 = vmatmul.mubr.f32.gmra.mxu0 %v4367
        %v4435 = vpop.f32.mrf.mxu0
        %v4436 = vadd.f32 %v4363, %v4435
        %v4437 = vpop.f32.mrf.mxu0
        %4438 = vdwg.mxu0
        %v4439 = vlaneseq
        %v4440 = vshrl.u32 %v4439, 7
        %v4441 = vsub.s32 1, %v4440
        %v4442 = vrot.slane %v4257, %v4441
        %v4443 = vsel %vm3516, %v4265, %v4261
        %v4444 = vsel %vm3470, %v4269, %v4443
        %v4445 = vsel %vm3472, %v4442, %v4444
        %v4446 = vsel %vm4293, %v4445, 0
        %4448 = vmatprep.subr.mxu0 0.0
        %4449 = vmatpush1.msra.mxu0 0.0
        %4450 = vmatprep.subr.mxu0 0.0
        %4451 = vmatpush1.msra.mxu0 0.0
        %4452 = vmatprep.subr.mxu0 0.0
        %4453 = vmatpush1.msra.mxu0 0.0
        %4454 = vmatprep.subr.mxu0 0.0
        %4455 = vmatpush1.msra.mxu0 0.0
        %4456 = vmatprep.subr.mxu0 0.0
        %4457 = vmatpush1.msra.mxu0 0.0
        %4458 = vmatprep.subr.mxu0 0.0
        %4459 = vmatpush1.msra.mxu0 0.0
        %4460 = vmatprep.subr.mxu0 0.0
        %4461 = vmatpush1.msra.mxu0 0.0
        %4462 = vmatprep.subr.mxu0 0.0
        %4463 = vmatpush1.msra.mxu0 0.0
        %4464 = vmatprep.subr.mxu0 0.0
        %4465 = vmatpush1.msra.mxu0 %v4238
        %4466 = vmatprep.subr.mxu0 0.0
        %4467 = vmatpush1.msra.mxu0 %v4237
        %4468 = vmatprep.subr.mxu0 0.0
        %4469 = vmatpush1.msra.mxu0 %v4236
        %4470 = vmatprep.subr.mxu0 0.0
        %4471 = vmatpush1.msra.mxu0 %v4235
        %4472 = vmatprep.subr.mxu0 0.0
        %4473 = vmatpush1.msra.mxu0 %v4234
        %4474 = vmatprep.subr.mxu0 0.0
        %4475 = vmatpush1.msra.mxu0 %v4233
        %4476 = vmatprep.subr.mxu0 0.0
        %4477 = vmatpush1.msra.mxu0 %v4232
        %4478 = vmatprep.subr.mxu0 0.0
        %4479 = vmatpush1.msra.mxu0 %v4231
        %4480 = vmatprep.subr.mxu0 0.0
        %4481 = vmatpush2.msra.mxu0 0.0
        %4482 = vmatprep.subr.mxu0 0.0
        %4483 = vmatpush2.msra.mxu0 0.0
        %4484 = vmatprep.subr.mxu0 0.0
        %4485 = vmatpush2.msra.mxu0 0.0
        %4486 = vmatprep.subr.mxu0 0.0
        %4487 = vmatpush2.msra.mxu0 0.0
        %4488 = vmatprep.subr.mxu0 0.0
        %4489 = vmatpush2.msra.mxu0 0.0
        %4490 = vmatprep.subr.mxu0 0.0
        %4491 = vmatpush2.msra.mxu0 0.0
        %4492 = vmatprep.subr.mxu0 0.0
        %4493 = vmatpush2.msra.mxu0 0.0
        %4494 = vmatprep.subr.mxu0 0.0
        %4495 = vmatpush2.msra.mxu0 0.0
        %4496 = vmatprep.subr.mxu0 0.0
        %4497 = vmatpush2.msra.mxu0 0.0
        %4498 = vmatprep.subr.mxu0 0.0
        %4499 = vmatpush2.msra.mxu0 0.0
        %4500 = vmatprep.subr.mxu0 0.0
        %4501 = vmatpush2.msra.mxu0 0.0
        %4502 = vmatprep.subr.mxu0 0.0
        %4503 = vmatpush2.msra.mxu0 0.0
        %4504 = vmatprep.subr.mxu0 0.0
        %4505 = vmatpush2.msra.mxu0 0.0
        %4506 = vmatprep.subr.mxu0 0.0
        %4507 = vmatpush2.msra.mxu0 0.0
        %4508 = vmatprep.subr.mxu0 0.0
        %4509 = vmatpush2.msra.mxu0 0.0
        %4510 = vmatprep.subr.mxu0 0.0
        %4511 = vmatpush2.msra.mxu0 0.0
        %4512 = vmatprep.mubr.f32.mxu0 0.0
        %4513 = vmatmul.mubr.f32.gmra.mxu0 %v4446
        %v4514 = vpop.f32.mrf.mxu0
        %v4515 = vadd.f32 0.0, %v4514
        %v4516 = vpop.f32.mrf.mxu0
        %4517 = vdwg.mxu0
        %v4518 = vadd.f32 %v4436, %v4515
        %v4520 = vlaneseq
        %v4521 = vshrl.u32 %v4520, 7
        %v4522 = vsub.s32 0, %v4521
        %v4523 = vrot.slane %v4239, %v4522
        %v4525 = vadd.f32 %v4518, %v4523
        %v4526 = vld [vmem:[#allocation22] sm:$0xff]
        %v4527 = vld [vmem:[#allocation22 + $0x8] sm:$0xff]
        %v4528 = vld [vmem:[#allocation22 + $0x10] sm:$0xff]
        %v4529 = vld [vmem:[#allocation22 + $0x18] sm:$0xff]
        %v4530 = vld [vmem:[#allocation22 + $0x20] sm:$0xff]
        %v4531 = vld [vmem:[#allocation22 + $0x28] sm:$0xff]
        %v4532 = vld [vmem:[#allocation22 + $0x30] sm:$0xff]
        %v4533 = vld [vmem:[#allocation22 + $0x38] sm:$0xff]
        %v4534 = vld [vmem:[#allocation22 + $0x40] sm:$0xff]
        %v4535 = vld [vmem:[#allocation22 + $0x48] sm:$0xff]
        %v4536 = vld [vmem:[#allocation22 + $0x50] sm:$0xff]
        %v4537 = vld [vmem:[#allocation22 + $0x58] sm:$0xff]
        %v4538 = vld [vmem:[#allocation22 + $0x60] sm:$0xff]
        %v4539 = vld [vmem:[#allocation22 + $0x68] sm:$0xff]
        %v4540 = vld [vmem:[#allocation22 + $0x70] sm:$0xff]
        %v4541 = vld [vmem:[#allocation22 + $0x78] sm:$0xff]
        %v4542 = vld [vmem:[#allocation22 + $0x80] sm:$0xff]
        %v4543 = vld [vmem:[#allocation22 + $0x88] sm:$0xff]
        %v4544 = vld [vmem:[#allocation22 + $0x90] sm:$0xff]
        %v4545 = vld [vmem:[#allocation22 + $0x98] sm:$0xff]
        %v4546 = vld [vmem:[#allocation22 + $0xa0] sm:$0xff]
        %v4547 = vld [vmem:[#allocation22 + $0xa8] sm:$0xff]
        %v4548 = vld [vmem:[#allocation22 + $0xb0] sm:$0xff]
        %v4549 = vld [vmem:[#allocation22 + $0xb8] sm:$0xff]
        %v4550 = vld [vmem:[#allocation22 + $0xc0] sm:$0xff]
        %v4551 = vld [vmem:[#allocation22 + $0xc8] sm:$0xff]
        %v4552 = vld [vmem:[#allocation22 + $0xd0] sm:$0xff]
        %v4553 = vld [vmem:[#allocation22 + $0xd8] sm:$0xff]
        %v4554 = vld [vmem:[#allocation22 + $0xe0] sm:$0xff]
        %v4555 = vld [vmem:[#allocation22 + $0xe8] sm:$0xff]
        %v4556 = vld [vmem:[#allocation22 + $0xf0] sm:$0xff]
        %v4557 = vld [vmem:[#allocation22 + $0xf8] sm:$0xff]
        %v4558 = vld [vmem:[#allocation22 + $0x100] sm:$0xff]
        %v4559 = vld [vmem:[#allocation22 + $0x108] sm:$0xff]
        %v4560 = vld [vmem:[#allocation22 + $0x110] sm:$0xff]
        %v4561 = vld [vmem:[#allocation22 + $0x118] sm:$0xff]
        %v4562 = vld [vmem:[#allocation22 + $0x120] sm:$0xff]
        %v4563 = vld [vmem:[#allocation22 + $0x128] sm:$0xff]
        %v4564 = vld [vmem:[#allocation22 + $0x130] sm:$0xff]
        %v4565 = vld [vmem:[#allocation22 + $0x138] sm:$0xff]
        %v4566 = vld [vmem:[#allocation22 + $0x140] sm:$0xff]
        %v4567 = vld [vmem:[#allocation22 + $0x148] sm:$0xff]
        %v4568 = vld [vmem:[#allocation22 + $0x150] sm:$0xff]
        %v4569 = vld [vmem:[#allocation22 + $0x158] sm:$0xff]
        %v4570 = vld [vmem:[#allocation22 + $0x160] sm:$0xff]
        %v4571 = vld [vmem:[#allocation22 + $0x168] sm:$0xff]
        %v4572 = vld [vmem:[#allocation22 + $0x170] sm:$0xff]
        %v4573 = vld [vmem:[#allocation22 + $0x178] sm:$0xff]
        %v4574 = vld [vmem:[%s57] sm:$0x1]
        %v4576 = vcombine.high %v2369, %v2369
        %v4578 = vunpack.c.l.s4 1983009808
        %v4579 = vunpack.c.0.s8 %v4578
        %v4580 = vlaneseq
        %v4581 = vshrl.u32 %v4580, 7
        %v4582 = vsub.s32 %v4579, %v4581
        %v4583 = vrot.slane %v2369, %v4582
        %v4585 = vunpack.c.l.s4 1983009808
        %v4586 = vunpack.c.0.s8 %v4585
        %v4587 = vlaneseq
        %v4588 = vshrl.u32 %v4587, 7
        %v4589 = vsub.s32 %v4586, %v4588
        %v4590 = vrot.slane %v4576, %v4589
        %v4591 = vcombine.high %v4583, %v4583
        %v4592 = vcombine.high %v4590, %v4590
        %v4593 = vlaneseq
        %v4594 = vshrl.u32 %v4593, 7
        %v4595 = vsub.s32 1, %v4594
        %v4596 = vrot.slane %v4583, %v4595
        %v4597 = vlaneseq
        %v4598 = vshrl.u32 %v4597, 7
        %v4599 = vsub.s32 1, %v4598
        %v4600 = vrot.slane %v4591, %v4599
        %v4601 = vlaneseq
        %v4602 = vshrl.u32 %v4601, 7
        %v4603 = vsub.s32 1, %v4602
        %v4604 = vrot.slane %v4590, %v4603
        %v4605 = vsel %vm3470, %v4600, %v4596
        %v4606 = vsel %vm3472, %v4604, %v4605
        %v4608 = vsel %vm1315, 0.0, %v4606
        %v4609 = vlaneseq
        %v4610 = vshrl.u32 %v4609, 7
        %v4611 = vsub.s32 0, %v4610
        %v4612 = vrot.slane %v4583, %v4611
        %v4613 = vlaneseq
        %v4614 = vshrl.u32 %v4613, 7
        %v4615 = vsub.s32 0, %v4614
        %v4616 = vrot.slane %v4591, %v4615
        %v4617 = vlaneseq
        %v4618 = vshrl.u32 %v4617, 7
        %v4619 = vsub.s32 0, %v4618
        %v4620 = vrot.slane %v4590, %v4619
        %v4621 = vlaneseq
        %v4622 = vshrl.u32 %v4621, 7
        %v4623 = vsub.s32 0, %v4622
        %v4624 = vrot.slane %v4592, %v4623
        %v4625 = vsel %vm3516, %v4616, %v4612
        %v4626 = vsel %vm3470, %v4620, %v4625
        %v4627 = vsel %vm3472, %v4624, %v4626
        %4629 = vmatprep.subr.mxu0 0.0
        %4630 = vmatpush1.msra.mxu0 %v4557
        %4631 = vmatprep.subr.mxu0 0.0
        %4632 = vmatpush1.msra.mxu0 %v4556
        %4633 = vmatprep.subr.mxu0 0.0
        %4634 = vmatpush1.msra.mxu0 %v4555
        %4635 = vmatprep.subr.mxu0 0.0
        %4636 = vmatpush1.msra.mxu0 %v4554
        %4637 = vmatprep.subr.mxu0 0.0
        %4638 = vmatpush1.msra.mxu0 %v4553
        %4639 = vmatprep.subr.mxu0 0.0
        %4640 = vmatpush1.msra.mxu0 %v4552
        %4641 = vmatprep.subr.mxu0 0.0
        %4642 = vmatpush1.msra.mxu0 %v4551
        %4643 = vmatprep.subr.mxu0 0.0
        %4644 = vmatpush1.msra.mxu0 %v4550
        %4645 = vmatprep.subr.mxu0 0.0
        %4646 = vmatpush1.msra.mxu0 %v4549
        %4647 = vmatprep.subr.mxu0 0.0
        %4648 = vmatpush1.msra.mxu0 %v4548
        %4649 = vmatprep.subr.mxu0 0.0
        %4650 = vmatpush1.msra.mxu0 %v4547
        %4651 = vmatprep.subr.mxu0 0.0
        %4652 = vmatpush1.msra.mxu0 %v4546
        %4653 = vmatprep.subr.mxu0 0.0
        %4654 = vmatpush1.msra.mxu0 %v4545
        %4655 = vmatprep.subr.mxu0 0.0
        %4656 = vmatpush1.msra.mxu0 %v4544
        %4657 = vmatprep.subr.mxu0 0.0
        %4658 = vmatpush1.msra.mxu0 %v4543
        %4659 = vmatprep.subr.mxu0 0.0
        %4660 = vmatpush1.msra.mxu0 %v4542
        %4661 = vmatprep.subr.mxu0 0.0
        %4662 = vmatpush2.msra.mxu0 0.0
        %4663 = vmatprep.subr.mxu0 0.0
        %4664 = vmatpush2.msra.mxu0 0.0
        %4665 = vmatprep.subr.mxu0 0.0
        %4666 = vmatpush2.msra.mxu0 0.0
        %4667 = vmatprep.subr.mxu0 0.0
        %4668 = vmatpush2.msra.mxu0 0.0
        %4669 = vmatprep.subr.mxu0 0.0
        %4670 = vmatpush2.msra.mxu0 0.0
        %4671 = vmatprep.subr.mxu0 0.0
        %4672 = vmatpush2.msra.mxu0 0.0
        %4673 = vmatprep.subr.mxu0 0.0
        %4674 = vmatpush2.msra.mxu0 0.0
        %4675 = vmatprep.subr.mxu0 0.0
        %4676 = vmatpush2.msra.mxu0 0.0
        %4677 = vmatprep.subr.mxu0 0.0
        %4678 = vmatpush2.msra.mxu0 0.0
        %4679 = vmatprep.subr.mxu0 0.0
        %4680 = vmatpush2.msra.mxu0 0.0
        %4681 = vmatprep.subr.mxu0 0.0
        %4682 = vmatpush2.msra.mxu0 0.0
        %4683 = vmatprep.subr.mxu0 0.0
        %4684 = vmatpush2.msra.mxu0 0.0
        %4685 = vmatprep.subr.mxu0 0.0
        %4686 = vmatpush2.msra.mxu0 0.0
        %4687 = vmatprep.subr.mxu0 0.0
        %4688 = vmatpush2.msra.mxu0 0.0
        %4689 = vmatprep.subr.mxu0 0.0
        %4690 = vmatpush2.msra.mxu0 0.0
        %4691 = vmatprep.subr.mxu0 0.0
        %4692 = vmatpush2.msra.mxu0 0.0
        %4693 = vmatprep.mubr.f32.mxu0 0.0
        %4694 = vmatmul.mubr.f32.gmra.mxu0 %v4627
        %v4695 = vpop.f32.mrf.mxu0
        %v4696 = vadd.f32 0.0, %v4695
        %v4697 = vpop.f32.mrf.mxu0
        %4698 = vdwg.mxu0
        %4699 = vmatprep.subr.mxu0 0.0
        %4700 = vmatpush1.msra.mxu0 %v4541
        %4701 = vmatprep.subr.mxu0 0.0
        %4702 = vmatpush1.msra.mxu0 %v4540
        %4703 = vmatprep.subr.mxu0 0.0
        %4704 = vmatpush1.msra.mxu0 %v4539
        %4705 = vmatprep.subr.mxu0 0.0
        %4706 = vmatpush1.msra.mxu0 %v4538
        %4707 = vmatprep.subr.mxu0 0.0
        %4708 = vmatpush1.msra.mxu0 %v4537
        %4709 = vmatprep.subr.mxu0 0.0
        %4710 = vmatpush1.msra.mxu0 %v4536
        %4711 = vmatprep.subr.mxu0 0.0
        %4712 = vmatpush1.msra.mxu0 %v4535
        %4713 = vmatprep.subr.mxu0 0.0
        %4714 = vmatpush1.msra.mxu0 %v4534
        %4715 = vmatprep.subr.mxu0 0.0
        %4716 = vmatpush1.msra.mxu0 %v4533
        %4717 = vmatprep.subr.mxu0 0.0
        %4718 = vmatpush1.msra.mxu0 %v4532
        %4719 = vmatprep.subr.mxu0 0.0
        %4720 = vmatpush1.msra.mxu0 %v4531
        %4721 = vmatprep.subr.mxu0 0.0
        %4722 = vmatpush1.msra.mxu0 %v4530
        %4723 = vmatprep.subr.mxu0 0.0
        %4724 = vmatpush1.msra.mxu0 %v4529
        %4725 = vmatprep.subr.mxu0 0.0
        %4726 = vmatpush1.msra.mxu0 %v4528
        %4727 = vmatprep.subr.mxu0 0.0
        %4728 = vmatpush1.msra.mxu0 %v4527
        %4729 = vmatprep.subr.mxu0 0.0
        %4730 = vmatpush1.msra.mxu0 %v4526
        %4731 = vmatprep.subr.mxu0 0.0
        %4732 = vmatpush2.msra.mxu0 0.0
        %4733 = vmatprep.subr.mxu0 0.0
        %4734 = vmatpush2.msra.mxu0 0.0
        %4735 = vmatprep.subr.mxu0 0.0
        %4736 = vmatpush2.msra.mxu0 0.0
        %4737 = vmatprep.subr.mxu0 0.0
        %4738 = vmatpush2.msra.mxu0 0.0
        %4739 = vmatprep.subr.mxu0 0.0
        %4740 = vmatpush2.msra.mxu0 0.0
        %4741 = vmatprep.subr.mxu0 0.0
        %4742 = vmatpush2.msra.mxu0 0.0
        %4743 = vmatprep.subr.mxu0 0.0
        %4744 = vmatpush2.msra.mxu0 0.0
        %4745 = vmatprep.subr.mxu0 0.0
        %4746 = vmatpush2.msra.mxu0 0.0
        %4747 = vmatprep.subr.mxu0 0.0
        %4748 = vmatpush2.msra.mxu0 0.0
        %4749 = vmatprep.subr.mxu0 0.0
        %4750 = vmatpush2.msra.mxu0 0.0
        %4751 = vmatprep.subr.mxu0 0.0
        %4752 = vmatpush2.msra.mxu0 0.0
        %4753 = vmatprep.subr.mxu0 0.0
        %4754 = vmatpush2.msra.mxu0 0.0
        %4755 = vmatprep.subr.mxu0 0.0
        %4756 = vmatpush2.msra.mxu0 0.0
        %4757 = vmatprep.subr.mxu0 0.0
        %4758 = vmatpush2.msra.mxu0 0.0
        %4759 = vmatprep.subr.mxu0 0.0
        %4760 = vmatpush2.msra.mxu0 0.0
        %4761 = vmatprep.subr.mxu0 0.0
        %4762 = vmatpush2.msra.mxu0 0.0
        %4763 = vmatprep.mubr.f32.mxu0 0.0
        %4764 = vmatmul.mubr.f32.gmra.mxu0 %v4608
        %v4765 = vpop.f32.mrf.mxu0
        %v4766 = vadd.f32 %v4696, %v4765
        %v4767 = vpop.f32.mrf.mxu0
        %4768 = vdwg.mxu0
        %v4769 = vlaneseq
        %v4770 = vshrl.u32 %v4769, 7
        %v4771 = vsub.s32 1, %v4770
        %v4772 = vrot.slane %v4592, %v4771
        %v4773 = vsel %vm3516, %v4600, %v4596
        %v4774 = vsel %vm3470, %v4604, %v4773
        %v4775 = vsel %vm3472, %v4772, %v4774
        %4777 = vmatprep.subr.mxu0 0.0
        %4778 = vmatpush1.msra.mxu0 %v4573
        %4779 = vmatprep.subr.mxu0 0.0
        %4780 = vmatpush1.msra.mxu0 %v4572
        %4781 = vmatprep.subr.mxu0 0.0
        %4782 = vmatpush1.msra.mxu0 %v4571
        %4783 = vmatprep.subr.mxu0 0.0
        %4784 = vmatpush1.msra.mxu0 %v4570
        %4785 = vmatprep.subr.mxu0 0.0
        %4786 = vmatpush1.msra.mxu0 %v4569
        %4787 = vmatprep.subr.mxu0 0.0
        %4788 = vmatpush1.msra.mxu0 %v4568
        %4789 = vmatprep.subr.mxu0 0.0
        %4790 = vmatpush1.msra.mxu0 %v4567
        %4791 = vmatprep.subr.mxu0 0.0
        %4792 = vmatpush1.msra.mxu0 %v4566
        %4793 = vmatprep.subr.mxu0 0.0
        %4794 = vmatpush1.msra.mxu0 %v4565
        %4795 = vmatprep.subr.mxu0 0.0
        %4796 = vmatpush1.msra.mxu0 %v4564
        %4797 = vmatprep.subr.mxu0 0.0
        %4798 = vmatpush1.msra.mxu0 %v4563
        %4799 = vmatprep.subr.mxu0 0.0
        %4800 = vmatpush1.msra.mxu0 %v4562
        %4801 = vmatprep.subr.mxu0 0.0
        %4802 = vmatpush1.msra.mxu0 %v4561
        %4803 = vmatprep.subr.mxu0 0.0
        %4804 = vmatpush1.msra.mxu0 %v4560
        %4805 = vmatprep.subr.mxu0 0.0
        %4806 = vmatpush1.msra.mxu0 %v4559
        %4807 = vmatprep.subr.mxu0 0.0
        %4808 = vmatpush1.msra.mxu0 %v4558
        %4809 = vmatprep.subr.mxu0 0.0
        %4810 = vmatpush2.msra.mxu0 0.0
        %4811 = vmatprep.subr.mxu0 0.0
        %4812 = vmatpush2.msra.mxu0 0.0
        %4813 = vmatprep.subr.mxu0 0.0
        %4814 = vmatpush2.msra.mxu0 0.0
        %4815 = vmatprep.subr.mxu0 0.0
        %4816 = vmatpush2.msra.mxu0 0.0
        %4817 = vmatprep.subr.mxu0 0.0
        %4818 = vmatpush2.msra.mxu0 0.0
        %4819 = vmatprep.subr.mxu0 0.0
        %4820 = vmatpush2.msra.mxu0 0.0
        %4821 = vmatprep.subr.mxu0 0.0
        %4822 = vmatpush2.msra.mxu0 0.0
        %4823 = vmatprep.subr.mxu0 0.0
        %4824 = vmatpush2.msra.mxu0 0.0
        %4825 = vmatprep.subr.mxu0 0.0
        %4826 = vmatpush2.msra.mxu0 0.0
        %4827 = vmatprep.subr.mxu0 0.0
        %4828 = vmatpush2.msra.mxu0 0.0
        %4829 = vmatprep.subr.mxu0 0.0
        %4830 = vmatpush2.msra.mxu0 0.0
        %4831 = vmatprep.subr.mxu0 0.0
        %4832 = vmatpush2.msra.mxu0 0.0
        %4833 = vmatprep.subr.mxu0 0.0
        %4834 = vmatpush2.msra.mxu0 0.0
        %4835 = vmatprep.subr.mxu0 0.0
        %4836 = vmatpush2.msra.mxu0 0.0
        %4837 = vmatprep.subr.mxu0 0.0
        %4838 = vmatpush2.msra.mxu0 0.0
        %4839 = vmatprep.subr.mxu0 0.0
        %4840 = vmatpush2.msra.mxu0 0.0
        %4841 = vmatprep.mubr.f32.mxu0 0.0
        %4842 = vmatmul.mubr.f32.gmra.mxu0 %v4775
        %v4843 = vpop.f32.mrf.mxu0
        %v4844 = vadd.f32 0.0, %v4843
        %v4845 = vpop.f32.mrf.mxu0
        %4846 = vdwg.mxu0
        %v4847 = vadd.f32 %v4766, %v4844
        %v4849 = vlaneseq
        %v4850 = vshrl.u32 %v4849, 7
        %v4851 = vsub.s32 0, %v4850
        %v4852 = vrot.slane %v4574, %v4851
        %v4854 = vadd.f32 %v4847, %v4852
        %v4855 = vadd.f32 %v4525, %v4854
        %v4856 = vadd.f32 %v4855, %v2921
        %v4857 = vmax.f32 %v4856, 0.0
        %4858 = vst [vmem:[%s1210] sm:$0xf] %v4857
        %s4859 = sand.u32 %s724, 1
        %s4860 = scalar_lea.sflag [#allocation4], %s4859
        %s4861 = sand.u32 %s724, 1
        %s4862 = smul.addr %s4861, 16
        %s4863 = scalar_lea.vmem [#allocation23], %s4862
        %s4864 = sand.u32 %s92, 1
        %s4865 = scalar_lea.sflag [#allocation25], %s4864
        %s4866 = sand.u32 %s750, 1
        %s4867 = smul.addr %s4866, 8
        %s4868 = scalar_lea.vmem [#allocation24], %s4867
        %s4869 = sand.u32 %s92, 1
        %s4870 = scalar_lea.sflag [#allocation25], %s4869
        %s4871 = sand.u32 %s776, 1
        %s4872 = smul.addr %s4871, 4
        %s4873 = scalar_lea.vmem [#allocation26], %s4872
        // Predicated region
        $region189: #{tpu_custom_call.1} parent=135 // pred_check
          %p4874 = pneg %p734
        $region190: #{tpu_custom_call.1} parent=135 // pred_check_branch
          %4876 = sbr.rel (%p4874) target = $region192
        $region191: #{tpu_custom_call.1} parent=135 // pred_region
          %s4878 = ssub.s32 256, 256
          %4879 = vsyncadd %s4860, %s4878
          %s4880 = smul.addr %s92, 2
          %s4881 = smul.addr %s4880, 128
          %s4882 = scalar_lea.hbm %s59, %s4881
          %s4883 = sshll.u32 %s4863, 4
          %s4884 = int_to_ptr.vmem [resolvable:$true] %s4883
          %4889 = dma.vmem_to_hbm [thread:$0]  %s4884, 256, %s4882, %s4860, 128, 128, 8
        $region192: #{tpu_custom_call.1} parent=135 // pred_fallthru
          _
        // Predicated region
        $region193: #{tpu_custom_call.1} parent=135 // pred_check
          %p4890 = pneg %p760
        $region194: #{tpu_custom_call.1} parent=135 // pred_check_branch
          %4892 = sbr.rel (%p4890) target = $region196
        $region195: #{tpu_custom_call.1} parent=135 // pred_region
          %s4894 = ssub.s32 128, 128
          %4895 = vsyncadd %s4865, %s4894
          %s4896 = smul.addr %s92, 128
          %s4897 = scalar_lea.hbm %s61, %s4896
          %s4899 = sshll.u32 %s4868, 4
          %s4900 = int_to_ptr.vmem [resolvable:$true] %s4899
          %4902 = dma.vmem_to_hbm [thread:$0]  %s4900, 128, %s4897, %s4865
        $region196: #{tpu_custom_call.1} parent=135 // pred_fallthru
          _
        // Predicated region
        $region197: #{tpu_custom_call.1} parent=135 // pred_check
          %p4903 = pneg %p786
        $region198: #{tpu_custom_call.1} parent=135 // pred_check_branch
          %4905 = sbr.rel (%p4903) target = $region200
        $region199: #{tpu_custom_call.1} parent=135 // pred_region
          %s4907 = ssub.s32 64, 64
          %4908 = vsyncadd %s4870, %s4907
          %s4909 = smul.addr %s92, 64
          %s4910 = scalar_lea.hbm %s63, %s4909
          %s4912 = sshll.u32 %s4873, 4
          %s4913 = int_to_ptr.vmem [resolvable:$true] %s4912
          %4915 = dma.vmem_to_hbm [thread:$0]  %s4913, 64, %s4910, %s4870
        $region200: #{tpu_custom_call.1} parent=135 // pred_fallthru
          _
      $region136: #{tpu_custom_call.1} parent=5 // pred_fallthru
        _
      %p4916 = scmp.le.s32.totalorder 2, %s87
      // Predicated region
      $region201: #{tpu_custom_call.1} parent=5 // pred_check
        %p4917 = pneg %p4916
      $region202: #{tpu_custom_call.1} parent=5 // pred_check_branch
        %4919 = sbr.rel (%p4917) target = $region204
      $region203: #{tpu_custom_call.1} parent=5 // pred_region
        %s4920 = ssub.s32 %s87, 2
        // Predicated region
        $region205: #{tpu_custom_call.1} parent=203 // pred_check
          %p4921 = pneg %p740
        $region206: #{tpu_custom_call.1} parent=203 // pred_check_branch
          %4923 = sbr.rel (%p4921) target = $region208
        $region207: #{tpu_custom_call.1} parent=203 // pred_region
          %s4924 = sand.u32 %s725, 1
          %s4925 = scalar_lea.sflag [#allocation4], %s4924
          %s4926 = sand.u32 %s725, 1
          %s4927 = smul.addr %s4926, 16
          %s4928 = scalar_lea.vmem [#allocation23], %s4927
          %4929 = dma.done %s4925, 256
        $region208: #{tpu_custom_call.1} parent=203 // pred_fallthru
          _
        // Predicated region
        $region209: #{tpu_custom_call.1} parent=203 // pred_check
          %p4930 = pneg %p766
        $region210: #{tpu_custom_call.1} parent=203 // pred_check_branch
          %4932 = sbr.rel (%p4930) target = $region212
        $region211: #{tpu_custom_call.1} parent=203 // pred_region
          %s4933 = sand.u32 %s93, 1
          %s4934 = scalar_lea.sflag [#allocation25], %s4933
          %s4935 = sand.u32 %s751, 1
          %s4936 = smul.addr %s4935, 8
          %s4937 = scalar_lea.vmem [#allocation24], %s4936
          %4938 = dma.done %s4934, 128
        $region212: #{tpu_custom_call.1} parent=203 // pred_fallthru
          _
        // Predicated region
        $region213: #{tpu_custom_call.1} parent=203 // pred_check
          %p4939 = pneg %p792
        $region214: #{tpu_custom_call.1} parent=203 // pred_check_branch
          %4941 = sbr.rel (%p4939) target = $region216
        $region215: #{tpu_custom_call.1} parent=203 // pred_region
          %s4942 = sand.u32 %s93, 1
          %s4943 = scalar_lea.sflag [#allocation25], %s4942
          %s4944 = sand.u32 %s777, 1
          %s4945 = smul.addr %s4944, 4
          %s4946 = scalar_lea.vmem [#allocation26], %s4945
          %4947 = dma.done %s4943, 64
        $region216: #{tpu_custom_call.1} parent=203 // pred_fallthru
          _
      $region204: #{tpu_custom_call.1} parent=5 // pred_fallthru
        _
    $region6: #{tpu_custom_call.1} parent=1 // loop_footer
      %s91 = sadd.s32 1, %s87
    $region7: #{tpu_custom_call.1} parent=1 // loop_footer_branch
      %86 = sbr.rel target = $region3
    $region8: #{tpu_custom_call.1} parent=1 // loop_exit
      _
    %4948 = vsyncpa [#allocation3], 1
    %s4949 = scalar_lea.sflag [#allocation3], 1
    %4950 = vsyncpa %s4949, 1
    %4951 = vsyncpa [#allocation6], 1
    %s4952 = scalar_lea.sflag [#allocation6], 1
    %4953 = vsyncpa %s4952, 1
    %4954 = vsyncpa [#allocation9], 1
    %4955 = vsyncpa [#allocation12], 1
    %4956 = vsyncpa [#allocation15], 1
    %4957 = vsyncpa [#allocation18], 1
    %4958 = vsyncpa [#allocation21], 1
    %4959 = vsyncpa [#allocation4], 1
    %s4960 = scalar_lea.sflag [#allocation4], 1
    %4961 = vsyncpa %s4960, 1
    %4962 = vsyncpa [#allocation25], 1
    %s4963 = scalar_lea.sflag [#allocation25], 1
    %4964 = vsyncpa %s4963, 1

</llo_original>
